<compile_context>
chip_gen: v5e
topology: v5e:2x2
jax: 0.10.0
libtpu: 0.0.40
codegen_flags: <defaults>
</compile_context>

<pallas_src>
import functools

import numpy as np
import jax
import jax.numpy as jnp
from jax.experimental import pallas as pl
from jax.experimental.pallas import tpu as pltpu

SEQ = 54          # stickers
EMB = 6           # colors / embed dim
NUM_MOVES = 12
NUM_HEAD_OUT = 1 + NUM_MOVES   # value + policy logits, fused
NUM_BLOCKS = 2
BATCH = 2
LN_EPS = 1e-5


def _elu(x):
    # torch.nn.ELU(alpha=1.0)
    return jnp.where(x > 0, x, jnp.exp(jnp.minimum(x, 0.0)) - 1.0)


def _layernorm(x, w, b):
    # torch.nn.LayerNorm(6): biased variance, eps inside sqrt, affine.
    mu = jnp.mean(x, axis=-1, keepdims=True)
    var = jnp.mean((x - mu) ** 2, axis=-1, keepdims=True)
    return (x - mu) * jax.lax.rsqrt(var + LN_EPS) * w + b


# --------------------------------------------------------------------------- kernel

def rubik_kernel(num_blocks, batch,
                 x_ref,                      # (54, B*6)   batch packed into lanes
                 emb_w_ref, emb_b_ref,       # (B*6, B*6), (1, B*6)   block-diagonal
                 fc1_w_ref, fc1_b_ref,       # (nb, B*6, B*6), (nb, 1, B*6)
                 ln_w_ref, ln_b_ref,         # (nb, 1, 6)
                 qkv_w_ref, qkv_b_ref,       # (nb, 6, 18), (nb, 1, 18)  q-scale folded
                 out_w_ref, out_b_ref,       # (nb, B*6, B*6), (nb, 1, B*6)
                 hw_ref, hb_ref,             # (6, 13, 54), (13, 1)   fused heads
                 o_ref,                      # (13, B)  row0 = value, rows 1..12 = policy
                 attn_scratch):              # VMEM (54, B*6)
    # embed (both samples at once, block-diagonal weight)
    x = jnp.dot(x_ref[...], emb_w_ref[...],
                preferred_element_type=jnp.float32) + emb_b_ref[...]

    for i in range(num_blocks):              # static unrolled (num_blocks == 2)
        # fc1 -> ELU, merged across batch
        z = jnp.dot(x, fc1_w_ref[i],
                    preferred_element_type=jnp.float32) + fc1_b_ref[i]
        z = _elu(z)

        # per-sample: LayerNorm stats + single-head self-attention (54x54 scores)
        for b in range(batch):               # static unrolled (batch == 2)
            zb = z[:, b * EMB:(b + 1) * EMB]                       # (54, 6)
            zb = _layernorm(zb, ln_w_ref[i], ln_b_ref[i])

            # fused q/k/v projection; 1/sqrt(6) already folded into q weights+bias
            qkv = jnp.dot(zb, qkv_w_ref[i],
                          preferred_element_type=jnp.float32) + qkv_b_ref[i]   # (54, 18)
            q = qkv[:, 0:EMB]
            k = qkv[:, EMB:2 * EMB]
            v = qkv[:, 2 * EMB:3 * EMB]

            s = jnp.dot(q, k.T, preferred_element_type=jnp.float32)            # (54, 54)
            s = s - jnp.max(s, axis=-1, keepdims=True)
            es = jnp.exp(s)
            a = es * pl.reciprocal(jnp.sum(es, axis=-1, keepdims=True), approx=True)

            attn_scratch[:, b * EMB:(b + 1) * EMB] = jnp.dot(
                a, v, preferred_element_type=jnp.float32)                      # (54, 6)

        # out-proj -> ELU -> residual, merged across batch
        o = jnp.dot(attn_scratch[...], out_w_ref[i],
                    preferred_element_type=jnp.float32) + out_b_ref[i]
        o = _elu(o)
        x = o + x

    # fused value+policy heads: contract flatten(54,6) via 6 matvecs per sample,
    # avoiding the (13,54,6) broadcast of the activation.
    hb = hb_ref[...]                                                # (13, 1)
    for b in range(batch):
        acc = hb
        for e in range(EMB):
            col = x[:, b * EMB + e:b * EMB + e + 1]                 # (54, 1)
            acc = acc + jnp.dot(hw_ref[e], col,
                                preferred_element_type=jnp.float32)  # (13, 1)
        o_ref[0:1, b:b + 1] = acc[0:1, :]                           # value
        logits = acc[1:, :]                                         # (12, 1)
        logits = logits - jnp.max(logits)
        el = jnp.exp(logits)
        o_ref[1:, b:b + 1] = el / jnp.sum(el)                       # policy softmax


# --------------------------------------------------------------------------- host prep

def init_params(key, num_blocks):
    """Deterministic synthetic parameters (shapes match the torch module)."""
    def nrm(k, shape, s=0.1):
        return (s * jax.random.normal(k, shape)).astype(jnp.float32)

    keys = jax.random.split(key, 16)
    params = {
        # Linear weights stored pre-transposed: (in, out)
        "emb_w": nrm(keys[0], (EMB, EMB)),
        "emb_b": nrm(keys[1], (1, EMB)),
        "fc1_w": nrm(keys[2], (num_blocks, EMB, EMB)),
        "fc1_b": nrm(keys[3], (num_blocks, 1, EMB)),
        "ln_w": jnp.ones((num_blocks, 1, EMB), jnp.float32),
        "ln_b": jnp.zeros((num_blocks, 1, EMB), jnp.float32),
        # in_proj split into q/k/v, transposed: (nb, 3, in, out)
        "qkv_w": nrm(keys[4], (num_blocks, 3, EMB, EMB)),
        "qkv_b": nrm(keys[5], (num_blocks, 3, 1, EMB)),
        "out_w": nrm(keys[6], (num_blocks, EMB, EMB)),
        "out_b": nrm(keys[7], (num_blocks, 1, EMB)),
        # heads: (out, 324) reshaped to (out, 54, 6) (row-major flatten match)
        "val_w": nrm(keys[8], (1, SEQ, EMB)),
        "val_b": nrm(keys[9], (1, 1)),
        "pol_w": nrm(keys[10], (NUM_MOVES, SEQ, EMB)),
        "pol_b": nrm(keys[11], (1, NUM_MOVES)),
    }
    return params


def pack_inputs(x, params, num_blocks):
    """Host-side layout plumbing: pack batch into lanes, build block-diagonal
    weights, fuse q/k/v (with the attention scale folded in) and fuse the heads."""
    batch = x.shape[0]
    scale = np.float32(1.0 / np.sqrt(float(EMB)))

    # (B, 54, 6) -> (54, B*6):  x_pack[s, b*6 + e] = x[b, s, e]
    x_pack = jnp.transpose(x, (1, 0, 2)).reshape(SEQ, batch * EMB)

    def bdiag(w):  # (6, K) -> (B*6, B*K) block diagonal
        r, c = w.shape
        out = jnp.zeros((batch * r, batch * c), w.dtype)
        for b in range(batch):
            out = out.at[b * r:(b + 1) * r, b * c:(b + 1) * c].set(w)
        return out

    emb_w = bdiag(params["emb_w"])
    emb_b = jnp.tile(params["emb_b"], (1, batch))

    fc1_w = jnp.stack([bdiag(params["fc1_w"][i]) for i in range(num_blocks)])
    fc1_b = jnp.tile(params["fc1_b"], (1, 1, batch))

    out_w = jnp.stack([bdiag(params["out_w"][i]) for i in range(num_blocks)])
    out_b = jnp.tile(params["out_b"], (1, 1, batch))

    # fused q/k/v with the 1/sqrt(6) attention scale folded into q (exact).
    qkv_w = jnp.concatenate(
        [params["qkv_w"][:, 0] * scale, params["qkv_w"][:, 1], params["qkv_w"][:, 2]],
        axis=-1)                                              # (nb, 6, 18)
    qkv_b = jnp.concatenate(
        [params["qkv_b"][:, 0] * scale, params["qkv_b"][:, 1], params["qkv_b"][:, 2]],
        axis=-1)                                              # (nb, 1, 18)

    # fused heads: row 0 = value, rows 1..12 = policy.  hw_t[e, o, s] = W[o, s, e]
    hw = jnp.concatenate([params["val_w"], params["pol_w"]], axis=0)     # (13, 54, 6)
    hw_t = jnp.transpose(hw, (2, 0, 1))                                   # (6, 13, 54)
    hb = jnp.transpose(
        jnp.concatenate([params["val_b"], params["pol_b"]], axis=1))      # (13, 1)

    return (x_pack, emb_w, emb_b, fc1_w, fc1_b,
            params["ln_w"], params["ln_b"], qkv_w, qkv_b,
            out_w, out_b, hw_t, hb)


def rubik_forward(x, params, num_blocks):
    batch = x.shape[0]
    inputs = pack_inputs(x, params, num_blocks)
    kernel = functools.partial(rubik_kernel, num_blocks, batch)
    vmem = pl.BlockSpec(memory_space=pltpu.MemorySpace.VMEM)
    out = pl.pallas_call(
        kernel,
        out_shape=jax.ShapeDtypeStruct((NUM_HEAD_OUT, batch), jnp.float32),
        in_specs=[vmem] * len(inputs),
        out_specs=vmem,
        scratch_shapes=[pltpu.VMEM((SEQ, batch * EMB), jnp.float32)],
    )(*inputs)
    v = out[0:1, :].T            # (B, 1)
    p = out[1:, :].T             # (B, 12)
    return v, p


# --------------------------------------------------------------------------- reference

def rubik_forward_ref(x, params, num_blocks):
    """Pure-JAX reference of the torch forward (same synthetic params)."""
    h = jnp.einsum("bse,eo->bso", x, params["emb_w"]) + params["emb_b"]
    scale = 1.0 / np.sqrt(float(EMB))
    for i in range(num_blocks):
        z = jnp.einsum("bse,eo->bso", h, params["fc1_w"][i]) + params["fc1_b"][i]
        z = _elu(z)
        z = _layernorm(z, params["ln_w"][i], params["ln_b"][i])
        q = jnp.einsum("bse,eo->bso", z, params["qkv_w"][i, 0]) + params["qkv_b"][i, 0]
        k = jnp.einsum("bse,eo->bso", z, params["qkv_w"][i, 1]) + params["qkv_b"][i, 1]
        v = jnp.einsum("bse,eo->bso", z, params["qkv_w"][i, 2]) + params["qkv_b"][i, 2]
        s = jnp.einsum("bqe,bke->bqk", q, k) * scale
        a = jax.nn.softmax(s, axis=-1)
        o = jnp.einsum("bqk,bke->bqe", a, v)
        o = jnp.einsum("bse,eo->bso", o, params["out_w"][i]) + params["out_b"][i]
        o = _elu(o)
        h = o + h
    vhead = jnp.einsum("bse,ose->bo", h, params["val_w"]) + params["val_b"][0]
    logits = jnp.einsum("bse,ose->bo", h, params["pol_w"]) + params["pol_b"][0]
    p = jax.nn.softmax(logits, axis=1)
    return vhead, p


# --------------------------------------------------------------------------- main

if __name__ == "__main__":
    key = jax.random.PRNGKey(0)
    kx, kp = jax.random.split(key)
    x = jax.random.normal(kx, (BATCH, SEQ, EMB), dtype=jnp.float32)
    params = init_params(kp, NUM_BLOCKS)

    v, p = jax.jit(lambda x, prm: rubik_forward(x, prm, NUM_BLOCKS))(x, params)
    jax.block_until_ready((v, p))

    v_ref, p_ref = rubik_forward_ref(x, params, NUM_BLOCKS)
    np.testing.assert_allclose(np.asarray(v), np.asarray(v_ref), rtol=2e-3, atol=2e-3)
    np.testing.assert_allclose(np.asarray(p), np.asarray(p_ref), rtol=2e-3, atol=2e-3)
    np.testing.assert_allclose(np.asarray(p).sum(axis=1), np.ones(BATCH),
                               rtol=1e-5, atol=1e-5)

    print("KERNEL_OK")
</pallas_src>

<mosaic_0001>
module attributes {stable_mosaic.version = 11 : i64} {
  func.func @rubik_kernel(%arg0: memref<54x12xf32, #tpu.memory_space<vmem>>, %arg1: memref<12x12xf32, #tpu.memory_space<vmem>>, %arg2: memref<1x12xf32, #tpu.memory_space<vmem>>, %arg3: memref<2x12x12xf32, #tpu.memory_space<vmem>>, %arg4: memref<2x1x12xf32, #tpu.memory_space<vmem>>, %arg5: memref<2x1x6xf32, #tpu.memory_space<vmem>>, %arg6: memref<2x1x6xf32, #tpu.memory_space<vmem>>, %arg7: memref<2x6x18xf32, #tpu.memory_space<vmem>>, %arg8: memref<2x1x18xf32, #tpu.memory_space<vmem>>, %arg9: memref<2x12x12xf32, #tpu.memory_space<vmem>>, %arg10: memref<2x1x12xf32, #tpu.memory_space<vmem>>, %arg11: memref<6x13x54xf32, #tpu.memory_space<vmem>>, %arg12: memref<13x1xf32, #tpu.memory_space<vmem>>, %arg13: memref<13x2xf32, #tpu.memory_space<vmem>>, %arg14: memref<54x12xf32, #tpu.memory_space<vmem>>) attributes {dimension_semantics = [], scalar_prefetch = 0 : i64, scratch_operands = 1 : i64, tpu.core_type = #tpu.core_type<tc>} {
    %c0 = arith.constant 0 : index
    %c0_0 = arith.constant 0 : index
    %0 = vector.load %arg0[%c0, %c0_0] : memref<54x12xf32, #tpu.memory_space<vmem>>, vector<54x12xf32>
    %c0_1 = arith.constant 0 : index
    %c0_2 = arith.constant 0 : index
    %1 = vector.load %arg1[%c0_1, %c0_2] : memref<12x12xf32, #tpu.memory_space<vmem>>, vector<12x12xf32>
    %cst = arith.constant dense<0.000000e+00> : vector<54x12xf32>
    %2 = tpu.matmul %0, %1, %cst {dimension_numbers = #tpu.dot_dimension_numbers<[1], [0], [0], [1], [0, 0, 1, 1], [], []>} : vector<54x12xf32>, vector<12x12xf32>, vector<54x12xf32> -> vector<54x12xf32>
    %c0_3 = arith.constant 0 : index
    %c0_4 = arith.constant 0 : index
    %3 = vector.load %arg2[%c0_3, %c0_4] : memref<1x12xf32, #tpu.memory_space<vmem>>, vector<1x12xf32>
    %4 = vector.broadcast %3 : vector<1x12xf32> to vector<54x12xf32>
    %5 = arith.addf %2, %4 : vector<54x12xf32>
    %c0_5 = arith.constant 0 : index
    %c0_6 = arith.constant 0 : index
    %c0_7 = arith.constant 0 : index
    %6 = vector.load %arg3[%c0_5, %c0_6, %c0_7] : memref<2x12x12xf32, #tpu.memory_space<vmem>>, vector<1x12x12xf32>
    %7 = vector.shape_cast %6 : vector<1x12x12xf32> to vector<12x12xf32>
    %cst_8 = arith.constant dense<0.000000e+00> : vector<54x12xf32>
    %8 = tpu.matmul %5, %7, %cst_8 {dimension_numbers = #tpu.dot_dimension_numbers<[1], [0], [0], [1], [0, 0, 1, 1], [], []>} : vector<54x12xf32>, vector<12x12xf32>, vector<54x12xf32> -> vector<54x12xf32>
    %c0_9 = arith.constant 0 : index
    %c0_10 = arith.constant 0 : index
    %c0_11 = arith.constant 0 : index
    %9 = vector.load %arg4[%c0_9, %c0_10, %c0_11] : memref<2x1x12xf32, #tpu.memory_space<vmem>>, vector<1x1x12xf32>
    %10 = vector.shape_cast %9 : vector<1x1x12xf32> to vector<1x12xf32>
    %11 = vector.broadcast %10 : vector<1x12xf32> to vector<54x12xf32>
    %12 = arith.addf %8, %11 : vector<54x12xf32>
    %cst_12 = arith.constant 0.000000e+00 : f32
    %13 = vector.broadcast %cst_12 : f32 to vector<54x12xf32>
    %14 = arith.cmpf ogt, %12, %13 : vector<54x12xf32>
    %cst_13 = arith.constant 0.000000e+00 : f32
    %15 = vector.broadcast %cst_13 : f32 to vector<54x12xf32>
    %16 = arith.minimumf %12, %15 : vector<54x12xf32>
    %17 = math.exp %16 : vector<54x12xf32>
    %cst_14 = arith.constant 1.000000e+00 : f32
    %18 = vector.broadcast %cst_14 : f32 to vector<54x12xf32>
    %19 = arith.subf %17, %18 : vector<54x12xf32>
    %20 = arith.select %14, %12, %19 : vector<54x12xi1>, vector<54x12xf32>
    %21 = vector.extract_strided_slice %20 {offsets = [0, 0], sizes = [54, 6], strides = [1, 1]} : vector<54x12xf32> to vector<54x6xf32>
    %c0_15 = arith.constant 0 : index
    %c0_16 = arith.constant 0 : index
    %c0_17 = arith.constant 0 : index
    %22 = vector.load %arg5[%c0_15, %c0_16, %c0_17] : memref<2x1x6xf32, #tpu.memory_space<vmem>>, vector<1x1x6xf32>
    %23 = vector.shape_cast %22 : vector<1x1x6xf32> to vector<1x6xf32>
    %c0_18 = arith.constant 0 : index
    %c0_19 = arith.constant 0 : index
    %c0_20 = arith.constant 0 : index
    %24 = vector.load %arg6[%c0_18, %c0_19, %c0_20] : memref<2x1x6xf32, #tpu.memory_space<vmem>>, vector<1x1x6xf32>
    %25 = vector.shape_cast %24 : vector<1x1x6xf32> to vector<1x6xf32>
    %cst_21 = arith.constant dense<0.000000e+00> : vector<54xf32>
    %26 = vector.multi_reduction <add>, %21, %cst_21 [1] : vector<54x6xf32> to vector<54xf32>
    %27 = vector.shape_cast %26 : vector<54xf32> to vector<54x1xf32>
    %cst_22 = arith.constant 6.000000e+00 : f32
    %28 = vector.broadcast %cst_22 : f32 to vector<54x1xf32>
    %29 = arith.divf %27, %28 : vector<54x1xf32>
    %30 = vector.broadcast %29 : vector<54x1xf32> to vector<54x6xf32>
    %31 = arith.subf %21, %30 : vector<54x6xf32>
    %32 = arith.mulf %31, %31 : vector<54x6xf32>
    %cst_23 = arith.constant dense<0.000000e+00> : vector<54xf32>
    %33 = vector.multi_reduction <add>, %32, %cst_23 [1] : vector<54x6xf32> to vector<54xf32>
    %34 = vector.shape_cast %33 : vector<54xf32> to vector<54x1xf32>
    %cst_24 = arith.constant 6.000000e+00 : f32
    %35 = vector.broadcast %cst_24 : f32 to vector<54x1xf32>
    %36 = arith.divf %34, %35 : vector<54x1xf32>
    %37 = vector.broadcast %29 : vector<54x1xf32> to vector<54x6xf32>
    %38 = arith.subf %21, %37 : vector<54x6xf32>
    %cst_25 = arith.constant 9.99999974E-6 : f32
    %39 = vector.broadcast %cst_25 : f32 to vector<54x1xf32>
    %40 = arith.addf %36, %39 : vector<54x1xf32>
    %41 = math.rsqrt %40 : vector<54x1xf32>
    %42 = vector.broadcast %41 : vector<54x1xf32> to vector<54x6xf32>
    %43 = arith.mulf %38, %42 : vector<54x6xf32>
    %44 = vector.broadcast %23 : vector<1x6xf32> to vector<54x6xf32>
    %45 = arith.mulf %43, %44 : vector<54x6xf32>
    %46 = vector.broadcast %25 : vector<1x6xf32> to vector<54x6xf32>
    %47 = arith.addf %45, %46 : vector<54x6xf32>
    %c0_26 = arith.constant 0 : index
    %c0_27 = arith.constant 0 : index
    %c0_28 = arith.constant 0 : index
    %48 = vector.load %arg7[%c0_26, %c0_27, %c0_28] : memref<2x6x18xf32, #tpu.memory_space<vmem>>, vector<1x6x18xf32>
    %49 = vector.shape_cast %48 : vector<1x6x18xf32> to vector<6x18xf32>
    %cst_29 = arith.constant dense<0.000000e+00> : vector<54x18xf32>
    %50 = tpu.matmul %47, %49, %cst_29 {dimension_numbers = #tpu.dot_dimension_numbers<[1], [0], [0], [1], [0, 0, 1, 1], [], []>} : vector<54x6xf32>, vector<6x18xf32>, vector<54x18xf32> -> vector<54x18xf32>
    %c0_30 = arith.constant 0 : index
    %c0_31 = arith.constant 0 : index
    %c0_32 = arith.constant 0 : index
    %51 = vector.load %arg8[%c0_30, %c0_31, %c0_32] : memref<2x1x18xf32, #tpu.memory_space<vmem>>, vector<1x1x18xf32>
    %52 = vector.shape_cast %51 : vector<1x1x18xf32> to vector<1x18xf32>
    %53 = vector.broadcast %52 : vector<1x18xf32> to vector<54x18xf32>
    %54 = arith.addf %50, %53 : vector<54x18xf32>
    %55 = vector.extract_strided_slice %54 {offsets = [0, 0], sizes = [54, 6], strides = [1, 1]} : vector<54x18xf32> to vector<54x6xf32>
    %56 = vector.extract_strided_slice %54 {offsets = [0, 6], sizes = [54, 6], strides = [1, 1]} : vector<54x18xf32> to vector<54x6xf32>
    %57 = vector.extract_strided_slice %54 {offsets = [0, 12], sizes = [54, 6], strides = [1, 1]} : vector<54x18xf32> to vector<54x6xf32>
    %58 = tpu.transpose %56, [1, 0] : vector<54x6xf32> -> vector<6x54xf32>
    %cst_33 = arith.constant dense<0.000000e+00> : vector<54x54xf32>
    %59 = tpu.matmul %55, %58, %cst_33 {dimension_numbers = #tpu.dot_dimension_numbers<[1], [0], [0], [1], [0, 0, 1, 1], [], []>} : vector<54x6xf32>, vector<6x54xf32>, vector<54x54xf32> -> vector<54x54xf32>
    %cst_34 = arith.constant dense<0xFF800000> : vector<54xf32>
    %60 = vector.multi_reduction <maximumf>, %59, %cst_34 [1] : vector<54x54xf32> to vector<54xf32>
    %61 = vector.shape_cast %60 : vector<54xf32> to vector<54x1xf32>
    %62 = vector.broadcast %61 : vector<54x1xf32> to vector<54x54xf32>
    %63 = arith.subf %59, %62 : vector<54x54xf32>
    %64 = math.exp %63 : vector<54x54xf32>
    %cst_35 = arith.constant dense<0.000000e+00> : vector<54xf32>
    %65 = vector.multi_reduction <add>, %64, %cst_35 [1] : vector<54x54xf32> to vector<54xf32>
    %66 = vector.shape_cast %65 : vector<54xf32> to vector<54x1xf32>
    %67 = tpu.reciprocal %66 {approx = true} : vector<54x1xf32> -> vector<54x1xf32>
    %68 = vector.broadcast %67 : vector<54x1xf32> to vector<54x54xf32>
    %69 = arith.mulf %64, %68 : vector<54x54xf32>
    %cst_36 = arith.constant dense<0.000000e+00> : vector<54x6xf32>
    %70 = tpu.matmul %69, %57, %cst_36 {dimension_numbers = #tpu.dot_dimension_numbers<[1], [0], [0], [1], [0, 0, 1, 1], [], []>} : vector<54x54xf32>, vector<54x6xf32>, vector<54x6xf32> -> vector<54x6xf32>
    %c0_37 = arith.constant 0 : index
    %c0_38 = arith.constant 0 : index
    %71 = vector.load %arg14[%c0_37, %c0_38] : memref<54x12xf32, #tpu.memory_space<vmem>>, vector<54x6xf32>
    tpu.vector_store %arg14[%c0_37, %c0_38], %70 {strides = array<i32>} : memref<54x12xf32, #tpu.memory_space<vmem>>, vector<54x6xf32>,
    %72 = vector.extract_strided_slice %20 {offsets = [0, 6], sizes = [54, 6], strides = [1, 1]} : vector<54x12xf32> to vector<54x6xf32>
    %c0_39 = arith.constant 0 : index
    %c0_40 = arith.constant 0 : index
    %c0_41 = arith.constant 0 : index
    %73 = vector.load %arg5[%c0_39, %c0_40, %c0_41] : memref<2x1x6xf32, #tpu.memory_space<vmem>>, vector<1x1x6xf32>
    %74 = vector.shape_cast %73 : vector<1x1x6xf32> to vector<1x6xf32>
    %c0_42 = arith.constant 0 : index
    %c0_43 = arith.constant 0 : index
    %c0_44 = arith.constant 0 : index
    %75 = vector.load %arg6[%c0_42, %c0_43, %c0_44] : memref<2x1x6xf32, #tpu.memory_space<vmem>>, vector<1x1x6xf32>
    %76 = vector.shape_cast %75 : vector<1x1x6xf32> to vector<1x6xf32>
    %cst_45 = arith.constant dense<0.000000e+00> : vector<54xf32>
    %77 = vector.multi_reduction <add>, %72, %cst_45 [1] : vector<54x6xf32> to vector<54xf32>
    %78 = vector.shape_cast %77 : vector<54xf32> to vector<54x1xf32>
    %cst_46 = arith.constant 6.000000e+00 : f32
    %79 = vector.broadcast %cst_46 : f32 to vector<54x1xf32>
    %80 = arith.divf %78, %79 : vector<54x1xf32>
    %81 = vector.broadcast %80 : vector<54x1xf32> to vector<54x6xf32>
    %82 = arith.subf %72, %81 : vector<54x6xf32>
    %83 = arith.mulf %82, %82 : vector<54x6xf32>
    %cst_47 = arith.constant dense<0.000000e+00> : vector<54xf32>
    %84 = vector.multi_reduction <add>, %83, %cst_47 [1] : vector<54x6xf32> to vector<54xf32>
    %85 = vector.shape_cast %84 : vector<54xf32> to vector<54x1xf32>
    %cst_48 = arith.constant 6.000000e+00 : f32
    %86 = vector.broadcast %cst_48 : f32 to vector<54x1xf32>
    %87 = arith.divf %85, %86 : vector<54x1xf32>
    %88 = vector.broadcast %80 : vector<54x1xf32> to vector<54x6xf32>
    %89 = arith.subf %72, %88 : vector<54x6xf32>
    %cst_49 = arith.constant 9.99999974E-6 : f32
    %90 = vector.broadcast %cst_49 : f32 to vector<54x1xf32>
    %91 = arith.addf %87, %90 : vector<54x1xf32>
    %92 = math.rsqrt %91 : vector<54x1xf32>
    %93 = vector.broadcast %92 : vector<54x1xf32> to vector<54x6xf32>
    %94 = arith.mulf %89, %93 : vector<54x6xf32>
    %95 = vector.broadcast %74 : vector<1x6xf32> to vector<54x6xf32>
    %96 = arith.mulf %94, %95 : vector<54x6xf32>
    %97 = vector.broadcast %76 : vector<1x6xf32> to vector<54x6xf32>
    %98 = arith.addf %96, %97 : vector<54x6xf32>
    %c0_50 = arith.constant 0 : index
    %c0_51 = arith.constant 0 : index
    %c0_52 = arith.constant 0 : index
    %99 = vector.load %arg7[%c0_50, %c0_51, %c0_52] : memref<2x6x18xf32, #tpu.memory_space<vmem>>, vector<1x6x18xf32>
    %100 = vector.shape_cast %99 : vector<1x6x18xf32> to vector<6x18xf32>
    %cst_53 = arith.constant dense<0.000000e+00> : vector<54x18xf32>
    %101 = tpu.matmul %98, %100, %cst_53 {dimension_numbers = #tpu.dot_dimension_numbers<[1], [0], [0], [1], [0, 0, 1, 1], [], []>} : vector<54x6xf32>, vector<6x18xf32>, vector<54x18xf32> -> vector<54x18xf32>
    %c0_54 = arith.constant 0 : index
    %c0_55 = arith.constant 0 : index
    %c0_56 = arith.constant 0 : index
    %102 = vector.load %arg8[%c0_54, %c0_55, %c0_56] : memref<2x1x18xf32, #tpu.memory_space<vmem>>, vector<1x1x18xf32>
    %103 = vector.shape_cast %102 : vector<1x1x18xf32> to vector<1x18xf32>
    %104 = vector.broadcast %103 : vector<1x18xf32> to vector<54x18xf32>
    %105 = arith.addf %101, %104 : vector<54x18xf32>
    %106 = vector.extract_strided_slice %105 {offsets = [0, 0], sizes = [54, 6], strides = [1, 1]} : vector<54x18xf32> to vector<54x6xf32>
    %107 = vector.extract_strided_slice %105 {offsets = [0, 6], sizes = [54, 6], strides = [1, 1]} : vector<54x18xf32> to vector<54x6xf32>
    %108 = vector.extract_strided_slice %105 {offsets = [0, 12], sizes = [54, 6], strides = [1, 1]} : vector<54x18xf32> to vector<54x6xf32>
    %109 = tpu.transpose %107, [1, 0] : vector<54x6xf32> -> vector<6x54xf32>
    %cst_57 = arith.constant dense<0.000000e+00> : vector<54x54xf32>
    %110 = tpu.matmul %106, %109, %cst_57 {dimension_numbers = #tpu.dot_dimension_numbers<[1], [0], [0], [1], [0, 0, 1, 1], [], []>} : vector<54x6xf32>, vector<6x54xf32>, vector<54x54xf32> -> vector<54x54xf32>
    %cst_58 = arith.constant dense<0xFF800000> : vector<54xf32>
    %111 = vector.multi_reduction <maximumf>, %110, %cst_58 [1] : vector<54x54xf32> to vector<54xf32>
    %112 = vector.shape_cast %111 : vector<54xf32> to vector<54x1xf32>
    %113 = vector.broadcast %112 : vector<54x1xf32> to vector<54x54xf32>
    %114 = arith.subf %110, %113 : vector<54x54xf32>
    %115 = math.exp %114 : vector<54x54xf32>
    %cst_59 = arith.constant dense<0.000000e+00> : vector<54xf32>
    %116 = vector.multi_reduction <add>, %115, %cst_59 [1] : vector<54x54xf32> to vector<54xf32>
    %117 = vector.shape_cast %116 : vector<54xf32> to vector<54x1xf32>
    %118 = tpu.reciprocal %117 {approx = true} : vector<54x1xf32> -> vector<54x1xf32>
    %119 = vector.broadcast %118 : vector<54x1xf32> to vector<54x54xf32>
    %120 = arith.mulf %115, %119 : vector<54x54xf32>
    %cst_60 = arith.constant dense<0.000000e+00> : vector<54x6xf32>
    %121 = tpu.matmul %120, %108, %cst_60 {dimension_numbers = #tpu.dot_dimension_numbers<[1], [0], [0], [1], [0, 0, 1, 1], [], []>} : vector<54x54xf32>, vector<54x6xf32>, vector<54x6xf32> -> vector<54x6xf32>
    %c0_61 = arith.constant 0 : index
    %c6 = arith.constant 6 : index
    %122 = vector.load %arg14[%c0_61, %c6] : memref<54x12xf32, #tpu.memory_space<vmem>>, vector<54x6xf32>
    tpu.vector_store %arg14[%c0_61, %c6], %121 {strides = array<i32>} : memref<54x12xf32, #tpu.memory_space<vmem>>, vector<54x6xf32>,
    %c0_62 = arith.constant 0 : index
    %c0_63 = arith.constant 0 : index
    %123 = vector.load %arg14[%c0_62, %c0_63] : memref<54x12xf32, #tpu.memory_space<vmem>>, vector<54x12xf32>
    %c0_64 = arith.constant 0 : index
    %c0_65 = arith.constant 0 : index
    %c0_66 = arith.constant 0 : index
    %124 = vector.load %arg9[%c0_64, %c0_65, %c0_66] : memref<2x12x12xf32, #tpu.memory_space<vmem>>, vector<1x12x12xf32>
    %125 = vector.shape_cast %124 : vector<1x12x12xf32> to vector<12x12xf32>
    %cst_67 = arith.constant dense<0.000000e+00> : vector<54x12xf32>
    %126 = tpu.matmul %123, %125, %cst_67 {dimension_numbers = #tpu.dot_dimension_numbers<[1], [0], [0], [1], [0, 0, 1, 1], [], []>} : vector<54x12xf32>, vector<12x12xf32>, vector<54x12xf32> -> vector<54x12xf32>
    %c0_68 = arith.constant 0 : index
    %c0_69 = arith.constant 0 : index
    %c0_70 = arith.constant 0 : index
    %127 = vector.load %arg10[%c0_68, %c0_69, %c0_70] : memref<2x1x12xf32, #tpu.memory_space<vmem>>, vector<1x1x12xf32>
    %128 = vector.shape_cast %127 : vector<1x1x12xf32> to vector<1x12xf32>
    %129 = vector.broadcast %128 : vector<1x12xf32> to vector<54x12xf32>
    %130 = arith.addf %126, %129 : vector<54x12xf32>
    %cst_71 = arith.constant 0.000000e+00 : f32
    %131 = vector.broadcast %cst_71 : f32 to vector<54x12xf32>
    %132 = arith.cmpf ogt, %130, %131 : vector<54x12xf32>
    %cst_72 = arith.constant 0.000000e+00 : f32
    %133 = vector.broadcast %cst_72 : f32 to vector<54x12xf32>
    %134 = arith.minimumf %130, %133 : vector<54x12xf32>
    %135 = math.exp %134 : vector<54x12xf32>
    %cst_73 = arith.constant 1.000000e+00 : f32
    %136 = vector.broadcast %cst_73 : f32 to vector<54x12xf32>
    %137 = arith.subf %135, %136 : vector<54x12xf32>
    %138 = arith.select %132, %130, %137 : vector<54x12xi1>, vector<54x12xf32>
    %139 = arith.addf %138, %5 : vector<54x12xf32>
    %c1 = arith.constant 1 : index
    %c0_74 = arith.constant 0 : index
    %c0_75 = arith.constant 0 : index
    %140 = vector.load %arg3[%c1, %c0_74, %c0_75] : memref<2x12x12xf32, #tpu.memory_space<vmem>>, vector<1x12x12xf32>
    %141 = vector.shape_cast %140 : vector<1x12x12xf32> to vector<12x12xf32>
    %cst_76 = arith.constant dense<0.000000e+00> : vector<54x12xf32>
    %142 = tpu.matmul %139, %141, %cst_76 {dimension_numbers = #tpu.dot_dimension_numbers<[1], [0], [0], [1], [0, 0, 1, 1], [], []>} : vector<54x12xf32>, vector<12x12xf32>, vector<54x12xf32> -> vector<54x12xf32>
    %c1_77 = arith.constant 1 : index
    %c0_78 = arith.constant 0 : index
    %c0_79 = arith.constant 0 : index
    %143 = vector.load %arg4[%c1_77, %c0_78, %c0_79] : memref<2x1x12xf32, #tpu.memory_space<vmem>>, vector<1x1x12xf32>
    %144 = vector.shape_cast %143 : vector<1x1x12xf32> to vector<1x12xf32>
    %145 = vector.broadcast %144 : vector<1x12xf32> to vector<54x12xf32>
    %146 = arith.addf %142, %145 : vector<54x12xf32>
    %cst_80 = arith.constant 0.000000e+00 : f32
    %147 = vector.broadcast %cst_80 : f32 to vector<54x12xf32>
    %148 = arith.cmpf ogt, %146, %147 : vector<54x12xf32>
    %cst_81 = arith.constant 0.000000e+00 : f32
    %149 = vector.broadcast %cst_81 : f32 to vector<54x12xf32>
    %150 = arith.minimumf %146, %149 : vector<54x12xf32>
    %151 = math.exp %150 : vector<54x12xf32>
    %cst_82 = arith.constant 1.000000e+00 : f32
    %152 = vector.broadcast %cst_82 : f32 to vector<54x12xf32>
    %153 = arith.subf %151, %152 : vector<54x12xf32>
    %154 = arith.select %148, %146, %153 : vector<54x12xi1>, vector<54x12xf32>
    %155 = vector.extract_strided_slice %154 {offsets = [0, 0], sizes = [54, 6], strides = [1, 1]} : vector<54x12xf32> to vector<54x6xf32>
    %c1_83 = arith.constant 1 : index
    %c0_84 = arith.constant 0 : index
    %c0_85 = arith.constant 0 : index
    %156 = vector.load %arg5[%c1_83, %c0_84, %c0_85] : memref<2x1x6xf32, #tpu.memory_space<vmem>>, vector<1x1x6xf32>
    %157 = vector.shape_cast %156 : vector<1x1x6xf32> to vector<1x6xf32>
    %c1_86 = arith.constant 1 : index
    %c0_87 = arith.constant 0 : index
    %c0_88 = arith.constant 0 : index
    %158 = vector.load %arg6[%c1_86, %c0_87, %c0_88] : memref<2x1x6xf32, #tpu.memory_space<vmem>>, vector<1x1x6xf32>
    %159 = vector.shape_cast %158 : vector<1x1x6xf32> to vector<1x6xf32>
    %cst_89 = arith.constant dense<0.000000e+00> : vector<54xf32>
    %160 = vector.multi_reduction <add>, %155, %cst_89 [1] : vector<54x6xf32> to vector<54xf32>
    %161 = vector.shape_cast %160 : vector<54xf32> to vector<54x1xf32>
    %cst_90 = arith.constant 6.000000e+00 : f32
    %162 = vector.broadcast %cst_90 : f32 to vector<54x1xf32>
    %163 = arith.divf %161, %162 : vector<54x1xf32>
    %164 = vector.broadcast %163 : vector<54x1xf32> to vector<54x6xf32>
    %165 = arith.subf %155, %164 : vector<54x6xf32>
    %166 = arith.mulf %165, %165 : vector<54x6xf32>
    %cst_91 = arith.constant dense<0.000000e+00> : vector<54xf32>
    %167 = vector.multi_reduction <add>, %166, %cst_91 [1] : vector<54x6xf32> to vector<54xf32>
    %168 = vector.shape_cast %167 : vector<54xf32> to vector<54x1xf32>
    %cst_92 = arith.constant 6.000000e+00 : f32
    %169 = vector.broadcast %cst_92 : f32 to vector<54x1xf32>
    %170 = arith.divf %168, %169 : vector<54x1xf32>
    %171 = vector.broadcast %163 : vector<54x1xf32> to vector<54x6xf32>
    %172 = arith.subf %155, %171 : vector<54x6xf32>
    %cst_93 = arith.constant 9.99999974E-6 : f32
    %173 = vector.broadcast %cst_93 : f32 to vector<54x1xf32>
    %174 = arith.addf %170, %173 : vector<54x1xf32>
    %175 = math.rsqrt %174 : vector<54x1xf32>
    %176 = vector.broadcast %175 : vector<54x1xf32> to vector<54x6xf32>
    %177 = arith.mulf %172, %176 : vector<54x6xf32>
    %178 = vector.broadcast %157 : vector<1x6xf32> to vector<54x6xf32>
    %179 = arith.mulf %177, %178 : vector<54x6xf32>
    %180 = vector.broadcast %159 : vector<1x6xf32> to vector<54x6xf32>
    %181 = arith.addf %179, %180 : vector<54x6xf32>
    %c1_94 = arith.constant 1 : index
    %c0_95 = arith.constant 0 : index
    %c0_96 = arith.constant 0 : index
    %182 = vector.load %arg7[%c1_94, %c0_95, %c0_96] : memref<2x6x18xf32, #tpu.memory_space<vmem>>, vector<1x6x18xf32>
    %183 = vector.shape_cast %182 : vector<1x6x18xf32> to vector<6x18xf32>
    %cst_97 = arith.constant dense<0.000000e+00> : vector<54x18xf32>
    %184 = tpu.matmul %181, %183, %cst_97 {dimension_numbers = #tpu.dot_dimension_numbers<[1], [0], [0], [1], [0, 0, 1, 1], [], []>} : vector<54x6xf32>, vector<6x18xf32>, vector<54x18xf32> -> vector<54x18xf32>
    %c1_98 = arith.constant 1 : index
    %c0_99 = arith.constant 0 : index
    %c0_100 = arith.constant 0 : index
    %185 = vector.load %arg8[%c1_98, %c0_99, %c0_100] : memref<2x1x18xf32, #tpu.memory_space<vmem>>, vector<1x1x18xf32>
    %186 = vector.shape_cast %185 : vector<1x1x18xf32> to vector<1x18xf32>
    %187 = vector.broadcast %186 : vector<1x18xf32> to vector<54x18xf32>
    %188 = arith.addf %184, %187 : vector<54x18xf32>
    %189 = vector.extract_strided_slice %188 {offsets = [0, 0], sizes = [54, 6], strides = [1, 1]} : vector<54x18xf32> to vector<54x6xf32>
    %190 = vector.extract_strided_slice %188 {offsets = [0, 6], sizes = [54, 6], strides = [1, 1]} : vector<54x18xf32> to vector<54x6xf32>
    %191 = vector.extract_strided_slice %188 {offsets = [0, 12], sizes = [54, 6], strides = [1, 1]} : vector<54x18xf32> to vector<54x6xf32>
    %192 = tpu.transpose %190, [1, 0] : vector<54x6xf32> -> vector<6x54xf32>
    %cst_101 = arith.constant dense<0.000000e+00> : vector<54x54xf32>
    %193 = tpu.matmul %189, %192, %cst_101 {dimension_numbers = #tpu.dot_dimension_numbers<[1], [0], [0], [1], [0, 0, 1, 1], [], []>} : vector<54x6xf32>, vector<6x54xf32>, vector<54x54xf32> -> vector<54x54xf32>
    %cst_102 = arith.constant dense<0xFF800000> : vector<54xf32>
    %194 = vector.multi_reduction <maximumf>, %193, %cst_102 [1] : vector<54x54xf32> to vector<54xf32>
    %195 = vector.shape_cast %194 : vector<54xf32> to vector<54x1xf32>
    %196 = vector.broadcast %195 : vector<54x1xf32> to vector<54x54xf32>
    %197 = arith.subf %193, %196 : vector<54x54xf32>
    %198 = math.exp %197 : vector<54x54xf32>
    %cst_103 = arith.constant dense<0.000000e+00> : vector<54xf32>
    %199 = vector.multi_reduction <add>, %198, %cst_103 [1] : vector<54x54xf32> to vector<54xf32>
    %200 = vector.shape_cast %199 : vector<54xf32> to vector<54x1xf32>
    %201 = tpu.reciprocal %200 {approx = true} : vector<54x1xf32> -> vector<54x1xf32>
    %202 = vector.broadcast %201 : vector<54x1xf32> to vector<54x54xf32>
    %203 = arith.mulf %198, %202 : vector<54x54xf32>
    %cst_104 = arith.constant dense<0.000000e+00> : vector<54x6xf32>
    %204 = tpu.matmul %203, %191, %cst_104 {dimension_numbers = #tpu.dot_dimension_numbers<[1], [0], [0], [1], [0, 0, 1, 1], [], []>} : vector<54x54xf32>, vector<54x6xf32>, vector<54x6xf32> -> vector<54x6xf32>
    %c0_105 = arith.constant 0 : index
    %c0_106 = arith.constant 0 : index
    %205 = vector.load %arg14[%c0_105, %c0_106] : memref<54x12xf32, #tpu.memory_space<vmem>>, vector<54x6xf32>
    tpu.vector_store %arg14[%c0_105, %c0_106], %204 {strides = array<i32>} : memref<54x12xf32, #tpu.memory_space<vmem>>, vector<54x6xf32>,
    %206 = vector.extract_strided_slice %154 {offsets = [0, 6], sizes = [54, 6], strides = [1, 1]} : vector<54x12xf32> to vector<54x6xf32>
    %c1_107 = arith.constant 1 : index
    %c0_108 = arith.constant 0 : index
    %c0_109 = arith.constant 0 : index
    %207 = vector.load %arg5[%c1_107, %c0_108, %c0_109] : memref<2x1x6xf32, #tpu.memory_space<vmem>>, vector<1x1x6xf32>
    %208 = vector.shape_cast %207 : vector<1x1x6xf32> to vector<1x6xf32>
    %c1_110 = arith.constant 1 : index
    %c0_111 = arith.constant 0 : index
    %c0_112 = arith.constant 0 : index
    %209 = vector.load %arg6[%c1_110, %c0_111, %c0_112] : memref<2x1x6xf32, #tpu.memory_space<vmem>>, vector<1x1x6xf32>
    %210 = vector.shape_cast %209 : vector<1x1x6xf32> to vector<1x6xf32>
    %cst_113 = arith.constant dense<0.000000e+00> : vector<54xf32>
    %211 = vector.multi_reduction <add>, %206, %cst_113 [1] : vector<54x6xf32> to vector<54xf32>
    %212 = vector.shape_cast %211 : vector<54xf32> to vector<54x1xf32>
    %cst_114 = arith.constant 6.000000e+00 : f32
    %213 = vector.broadcast %cst_114 : f32 to vector<54x1xf32>
    %214 = arith.divf %212, %213 : vector<54x1xf32>
    %215 = vector.broadcast %214 : vector<54x1xf32> to vector<54x6xf32>
    %216 = arith.subf %206, %215 : vector<54x6xf32>
    %217 = arith.mulf %216, %216 : vector<54x6xf32>
    %cst_115 = arith.constant dense<0.000000e+00> : vector<54xf32>
    %218 = vector.multi_reduction <add>, %217, %cst_115 [1] : vector<54x6xf32> to vector<54xf32>
    %219 = vector.shape_cast %218 : vector<54xf32> to vector<54x1xf32>
    %cst_116 = arith.constant 6.000000e+00 : f32
    %220 = vector.broadcast %cst_116 : f32 to vector<54x1xf32>
    %221 = arith.divf %219, %220 : vector<54x1xf32>
    %222 = vector.broadcast %214 : vector<54x1xf32> to vector<54x6xf32>
    %223 = arith.subf %206, %222 : vector<54x6xf32>
    %cst_117 = arith.constant 9.99999974E-6 : f32
    %224 = vector.broadcast %cst_117 : f32 to vector<54x1xf32>
    %225 = arith.addf %221, %224 : vector<54x1xf32>
    %226 = math.rsqrt %225 : vector<54x1xf32>
    %227 = vector.broadcast %226 : vector<54x1xf32> to vector<54x6xf32>
    %228 = arith.mulf %223, %227 : vector<54x6xf32>
    %229 = vector.broadcast %208 : vector<1x6xf32> to vector<54x6xf32>
    %230 = arith.mulf %228, %229 : vector<54x6xf32>
    %231 = vector.broadcast %210 : vector<1x6xf32> to vector<54x6xf32>
    %232 = arith.addf %230, %231 : vector<54x6xf32>
    %c1_118 = arith.constant 1 : index
    %c0_119 = arith.constant 0 : index
    %c0_120 = arith.constant 0 : index
    %233 = vector.load %arg7[%c1_118, %c0_119, %c0_120] : memref<2x6x18xf32, #tpu.memory_space<vmem>>, vector<1x6x18xf32>
    %234 = vector.shape_cast %233 : vector<1x6x18xf32> to vector<6x18xf32>
    %cst_121 = arith.constant dense<0.000000e+00> : vector<54x18xf32>
    %235 = tpu.matmul %232, %234, %cst_121 {dimension_numbers = #tpu.dot_dimension_numbers<[1], [0], [0], [1], [0, 0, 1, 1], [], []>} : vector<54x6xf32>, vector<6x18xf32>, vector<54x18xf32> -> vector<54x18xf32>
    %c1_122 = arith.constant 1 : index
    %c0_123 = arith.constant 0 : index
    %c0_124 = arith.constant 0 : index
    %236 = vector.load %arg8[%c1_122, %c0_123, %c0_124] : memref<2x1x18xf32, #tpu.memory_space<vmem>>, vector<1x1x18xf32>
    %237 = vector.shape_cast %236 : vector<1x1x18xf32> to vector<1x18xf32>
    %238 = vector.broadcast %237 : vector<1x18xf32> to vector<54x18xf32>
    %239 = arith.addf %235, %238 : vector<54x18xf32>
    %240 = vector.extract_strided_slice %239 {offsets = [0, 0], sizes = [54, 6], strides = [1, 1]} : vector<54x18xf32> to vector<54x6xf32>
    %241 = vector.extract_strided_slice %239 {offsets = [0, 6], sizes = [54, 6], strides = [1, 1]} : vector<54x18xf32> to vector<54x6xf32>
    %242 = vector.extract_strided_slice %239 {offsets = [0, 12], sizes = [54, 6], strides = [1, 1]} : vector<54x18xf32> to vector<54x6xf32>
    %243 = tpu.transpose %241, [1, 0] : vector<54x6xf32> -> vector<6x54xf32>
    %cst_125 = arith.constant dense<0.000000e+00> : vector<54x54xf32>
    %244 = tpu.matmul %240, %243, %cst_125 {dimension_numbers = #tpu.dot_dimension_numbers<[1], [0], [0], [1], [0, 0, 1, 1], [], []>} : vector<54x6xf32>, vector<6x54xf32>, vector<54x54xf32> -> vector<54x54xf32>
    %cst_126 = arith.constant dense<0xFF800000> : vector<54xf32>
    %245 = vector.multi_reduction <maximumf>, %244, %cst_126 [1] : vector<54x54xf32> to vector<54xf32>
    %246 = vector.shape_cast %245 : vector<54xf32> to vector<54x1xf32>
    %247 = vector.broadcast %246 : vector<54x1xf32> to vector<54x54xf32>
    %248 = arith.subf %244, %247 : vector<54x54xf32>
    %249 = math.exp %248 : vector<54x54xf32>
    %cst_127 = arith.constant dense<0.000000e+00> : vector<54xf32>
    %250 = vector.multi_reduction <add>, %249, %cst_127 [1] : vector<54x54xf32> to vector<54xf32>
    %251 = vector.shape_cast %250 : vector<54xf32> to vector<54x1xf32>
    %252 = tpu.reciprocal %251 {approx = true} : vector<54x1xf32> -> vector<54x1xf32>
    %253 = vector.broadcast %252 : vector<54x1xf32> to vector<54x54xf32>
    %254 = arith.mulf %249, %253 : vector<54x54xf32>
    %cst_128 = arith.constant dense<0.000000e+00> : vector<54x6xf32>
    %255 = tpu.matmul %254, %242, %cst_128 {dimension_numbers = #tpu.dot_dimension_numbers<[1], [0], [0], [1], [0, 0, 1, 1], [], []>} : vector<54x54xf32>, vector<54x6xf32>, vector<54x6xf32> -> vector<54x6xf32>
    %c0_129 = arith.constant 0 : index
    %c6_130 = arith.constant 6 : index
    %256 = vector.load %arg14[%c0_129, %c6_130] : memref<54x12xf32, #tpu.memory_space<vmem>>, vector<54x6xf32>
    tpu.vector_store %arg14[%c0_129, %c6_130], %255 {strides = array<i32>} : memref<54x12xf32, #tpu.memory_space<vmem>>, vector<54x6xf32>,
    %c0_131 = arith.constant 0 : index
    %c0_132 = arith.constant 0 : index
    %257 = vector.load %arg14[%c0_131, %c0_132] : memref<54x12xf32, #tpu.memory_space<vmem>>, vector<54x12xf32>
    %c1_133 = arith.constant 1 : index
    %c0_134 = arith.constant 0 : index
    %c0_135 = arith.constant 0 : index
    %258 = vector.load %arg9[%c1_133, %c0_134, %c0_135] : memref<2x12x12xf32, #tpu.memory_space<vmem>>, vector<1x12x12xf32>
    %259 = vector.shape_cast %258 : vector<1x12x12xf32> to vector<12x12xf32>
    %cst_136 = arith.constant dense<0.000000e+00> : vector<54x12xf32>
    %260 = tpu.matmul %257, %259, %cst_136 {dimension_numbers = #tpu.dot_dimension_numbers<[1], [0], [0], [1], [0, 0, 1, 1], [], []>} : vector<54x12xf32>, vector<12x12xf32>, vector<54x12xf32> -> vector<54x12xf32>
    %c1_137 = arith.constant 1 : index
    %c0_138 = arith.constant 0 : index
    %c0_139 = arith.constant 0 : index
    %261 = vector.load %arg10[%c1_137, %c0_138, %c0_139] : memref<2x1x12xf32, #tpu.memory_space<vmem>>, vector<1x1x12xf32>
    %262 = vector.shape_cast %261 : vector<1x1x12xf32> to vector<1x12xf32>
    %263 = vector.broadcast %262 : vector<1x12xf32> to vector<54x12xf32>
    %264 = arith.addf %260, %263 : vector<54x12xf32>
    %cst_140 = arith.constant 0.000000e+00 : f32
    %265 = vector.broadcast %cst_140 : f32 to vector<54x12xf32>
    %266 = arith.cmpf ogt, %264, %265 : vector<54x12xf32>
    %cst_141 = arith.constant 0.000000e+00 : f32
    %267 = vector.broadcast %cst_141 : f32 to vector<54x12xf32>
    %268 = arith.minimumf %264, %267 : vector<54x12xf32>
    %269 = math.exp %268 : vector<54x12xf32>
    %cst_142 = arith.constant 1.000000e+00 : f32
    %270 = vector.broadcast %cst_142 : f32 to vector<54x12xf32>
    %271 = arith.subf %269, %270 : vector<54x12xf32>
    %272 = arith.select %266, %264, %271 : vector<54x12xi1>, vector<54x12xf32>
    %273 = arith.addf %272, %139 : vector<54x12xf32>
    %c0_143 = arith.constant 0 : index
    %c0_144 = arith.constant 0 : index
    %274 = vector.load %arg12[%c0_143, %c0_144] : memref<13x1xf32, #tpu.memory_space<vmem>>, vector<13x1xf32>
    %275 = vector.extract_strided_slice %273 {offsets = [0, 0], sizes = [54, 1], strides = [1, 1]} : vector<54x12xf32> to vector<54x1xf32>
    %c0_145 = arith.constant 0 : index
    %c0_146 = arith.constant 0 : index
    %c0_147 = arith.constant 0 : index
    %276 = vector.load %arg11[%c0_145, %c0_146, %c0_147] : memref<6x13x54xf32, #tpu.memory_space<vmem>>, vector<1x13x54xf32>
    %277 = vector.shape_cast %276 : vector<1x13x54xf32> to vector<13x54xf32>
    %cst_148 = arith.constant dense<0.000000e+00> : vector<13x1xf32>
    %278 = tpu.matmul %277, %275, %cst_148 {dimension_numbers = #tpu.dot_dimension_numbers<[1], [0], [0], [1], [0, 0, 1, 1], [], []>} : vector<13x54xf32>, vector<54x1xf32>, vector<13x1xf32> -> vector<13x1xf32>
    %279 = arith.addf %274, %278 : vector<13x1xf32>
    %280 = vector.extract_strided_slice %273 {offsets = [0, 1], sizes = [54, 1], strides = [1, 1]} : vector<54x12xf32> to vector<54x1xf32>
    %c1_149 = arith.constant 1 : index
    %c0_150 = arith.constant 0 : index
    %c0_151 = arith.constant 0 : index
    %281 = vector.load %arg11[%c1_149, %c0_150, %c0_151] : memref<6x13x54xf32, #tpu.memory_space<vmem>>, vector<1x13x54xf32>
    %282 = vector.shape_cast %281 : vector<1x13x54xf32> to vector<13x54xf32>
    %cst_152 = arith.constant dense<0.000000e+00> : vector<13x1xf32>
    %283 = tpu.matmul %282, %280, %cst_152 {dimension_numbers = #tpu.dot_dimension_numbers<[1], [0], [0], [1], [0, 0, 1, 1], [], []>} : vector<13x54xf32>, vector<54x1xf32>, vector<13x1xf32> -> vector<13x1xf32>
    %284 = arith.addf %279, %283 : vector<13x1xf32>
    %285 = vector.extract_strided_slice %273 {offsets = [0, 2], sizes = [54, 1], strides = [1, 1]} : vector<54x12xf32> to vector<54x1xf32>
    %c2 = arith.constant 2 : index
    %c0_153 = arith.constant 0 : index
    %c0_154 = arith.constant 0 : index
    %286 = vector.load %arg11[%c2, %c0_153, %c0_154] : memref<6x13x54xf32, #tpu.memory_space<vmem>>, vector<1x13x54xf32>
    %287 = vector.shape_cast %286 : vector<1x13x54xf32> to vector<13x54xf32>
    %cst_155 = arith.constant dense<0.000000e+00> : vector<13x1xf32>
    %288 = tpu.matmul %287, %285, %cst_155 {dimension_numbers = #tpu.dot_dimension_numbers<[1], [0], [0], [1], [0, 0, 1, 1], [], []>} : vector<13x54xf32>, vector<54x1xf32>, vector<13x1xf32> -> vector<13x1xf32>
    %289 = arith.addf %284, %288 : vector<13x1xf32>
    %290 = vector.extract_strided_slice %273 {offsets = [0, 3], sizes = [54, 1], strides = [1, 1]} : vector<54x12xf32> to vector<54x1xf32>
    %c3 = arith.constant 3 : index
    %c0_156 = arith.constant 0 : index
    %c0_157 = arith.constant 0 : index
    %291 = vector.load %arg11[%c3, %c0_156, %c0_157] : memref<6x13x54xf32, #tpu.memory_space<vmem>>, vector<1x13x54xf32>
    %292 = vector.shape_cast %291 : vector<1x13x54xf32> to vector<13x54xf32>
    %cst_158 = arith.constant dense<0.000000e+00> : vector<13x1xf32>
    %293 = tpu.matmul %292, %290, %cst_158 {dimension_numbers = #tpu.dot_dimension_numbers<[1], [0], [0], [1], [0, 0, 1, 1], [], []>} : vector<13x54xf32>, vector<54x1xf32>, vector<13x1xf32> -> vector<13x1xf32>
    %294 = arith.addf %289, %293 : vector<13x1xf32>
    %295 = vector.extract_strided_slice %273 {offsets = [0, 4], sizes = [54, 1], strides = [1, 1]} : vector<54x12xf32> to vector<54x1xf32>
    %c4 = arith.constant 4 : index
    %c0_159 = arith.constant 0 : index
    %c0_160 = arith.constant 0 : index
    %296 = vector.load %arg11[%c4, %c0_159, %c0_160] : memref<6x13x54xf32, #tpu.memory_space<vmem>>, vector<1x13x54xf32>
    %297 = vector.shape_cast %296 : vector<1x13x54xf32> to vector<13x54xf32>
    %cst_161 = arith.constant dense<0.000000e+00> : vector<13x1xf32>
    %298 = tpu.matmul %297, %295, %cst_161 {dimension_numbers = #tpu.dot_dimension_numbers<[1], [0], [0], [1], [0, 0, 1, 1], [], []>} : vector<13x54xf32>, vector<54x1xf32>, vector<13x1xf32> -> vector<13x1xf32>
    %299 = arith.addf %294, %298 : vector<13x1xf32>
    %300 = vector.extract_strided_slice %273 {offsets = [0, 5], sizes = [54, 1], strides = [1, 1]} : vector<54x12xf32> to vector<54x1xf32>
    %c5 = arith.constant 5 : index
    %c0_162 = arith.constant 0 : index
    %c0_163 = arith.constant 0 : index
    %301 = vector.load %arg11[%c5, %c0_162, %c0_163] : memref<6x13x54xf32, #tpu.memory_space<vmem>>, vector<1x13x54xf32>
    %302 = vector.shape_cast %301 : vector<1x13x54xf32> to vector<13x54xf32>
    %cst_164 = arith.constant dense<0.000000e+00> : vector<13x1xf32>
    %303 = tpu.matmul %302, %300, %cst_164 {dimension_numbers = #tpu.dot_dimension_numbers<[1], [0], [0], [1], [0, 0, 1, 1], [], []>} : vector<13x54xf32>, vector<54x1xf32>, vector<13x1xf32> -> vector<13x1xf32>
    %304 = arith.addf %299, %303 : vector<13x1xf32>
    %305 = vector.extract_strided_slice %304 {offsets = [0, 0], sizes = [1, 1], strides = [1, 1]} : vector<13x1xf32> to vector<1x1xf32>
    %c0_165 = arith.constant 0 : index
    %c0_166 = arith.constant 0 : index
    %306 = vector.load %arg13[%c0_165, %c0_166] : memref<13x2xf32, #tpu.memory_space<vmem>>, vector<1x1xf32>
    tpu.vector_store %arg13[%c0_165, %c0_166], %305 {strides = array<i32>} : memref<13x2xf32, #tpu.memory_space<vmem>>, vector<1x1xf32>,
    %307 = vector.extract_strided_slice %304 {offsets = [1, 0], sizes = [12, 1], strides = [1, 1]} : vector<13x1xf32> to vector<12x1xf32>
    %308 = vector.shape_cast %307 : vector<12x1xf32> to vector<1x12x1xf32>
    %cst_167 = arith.constant dense<0xFF800000> : vector<1xf32>
    %309 = vector.multi_reduction <maximumf>, %308, %cst_167 [1, 2] : vector<1x12x1xf32> to vector<1xf32>
    %310 = vector.shape_cast %309 : vector<1xf32> to vector<1x1x1xf32>
    %311 = vector.extract %310[0, 0, 0] : f32 from vector<1x1x1xf32>
    %312 = vector.broadcast %311 : f32 to vector<12x1xf32>
    %313 = arith.subf %307, %312 : vector<12x1xf32>
    %314 = math.exp %313 : vector<12x1xf32>
    %315 = vector.shape_cast %314 : vector<12x1xf32> to vector<1x12x1xf32>
    %cst_168 = arith.constant dense<0.000000e+00> : vector<1xf32>
    %316 = vector.multi_reduction <add>, %315, %cst_168 [1, 2] : vector<1x12x1xf32> to vector<1xf32>
    %317 = vector.shape_cast %316 : vector<1xf32> to vector<1x1x1xf32>
    %318 = vector.extract %317[0, 0, 0] : f32 from vector<1x1x1xf32>
    %319 = vector.broadcast %318 : f32 to vector<12x1xf32>
    %320 = arith.divf %314, %319 : vector<12x1xf32>
    %c1_169 = arith.constant 1 : index
    %c0_170 = arith.constant 0 : index
    %321 = vector.load %arg13[%c1_169, %c0_170] : memref<13x2xf32, #tpu.memory_space<vmem>>, vector<12x1xf32>
    tpu.vector_store %arg13[%c1_169, %c0_170], %320 {strides = array<i32>} : memref<13x2xf32, #tpu.memory_space<vmem>>, vector<12x1xf32>,
    %322 = vector.extract_strided_slice %273 {offsets = [0, 6], sizes = [54, 1], strides = [1, 1]} : vector<54x12xf32> to vector<54x1xf32>
    %c0_171 = arith.constant 0 : index
    %c0_172 = arith.constant 0 : index
    %c0_173 = arith.constant 0 : index
    %323 = vector.load %arg11[%c0_171, %c0_172, %c0_173] : memref<6x13x54xf32, #tpu.memory_space<vmem>>, vector<1x13x54xf32>
    %324 = vector.shape_cast %323 : vector<1x13x54xf32> to vector<13x54xf32>
    %cst_174 = arith.constant dense<0.000000e+00> : vector<13x1xf32>
    %325 = tpu.matmul %324, %322, %cst_174 {dimension_numbers = #tpu.dot_dimension_numbers<[1], [0], [0], [1], [0, 0, 1, 1], [], []>} : vector<13x54xf32>, vector<54x1xf32>, vector<13x1xf32> -> vector<13x1xf32>
    %326 = arith.addf %274, %325 : vector<13x1xf32>
    %327 = vector.extract_strided_slice %273 {offsets = [0, 7], sizes = [54, 1], strides = [1, 1]} : vector<54x12xf32> to vector<54x1xf32>
    %c1_175 = arith.constant 1 : index
    %c0_176 = arith.constant 0 : index
    %c0_177 = arith.constant 0 : index
    %328 = vector.load %arg11[%c1_175, %c0_176, %c0_177] : memref<6x13x54xf32, #tpu.memory_space<vmem>>, vector<1x13x54xf32>
    %329 = vector.shape_cast %328 : vector<1x13x54xf32> to vector<13x54xf32>
    %cst_178 = arith.constant dense<0.000000e+00> : vector<13x1xf32>
    %330 = tpu.matmul %329, %327, %cst_178 {dimension_numbers = #tpu.dot_dimension_numbers<[1], [0], [0], [1], [0, 0, 1, 1], [], []>} : vector<13x54xf32>, vector<54x1xf32>, vector<13x1xf32> -> vector<13x1xf32>
    %331 = arith.addf %326, %330 : vector<13x1xf32>
    %332 = vector.extract_strided_slice %273 {offsets = [0, 8], sizes = [54, 1], strides = [1, 1]} : vector<54x12xf32> to vector<54x1xf32>
    %c2_179 = arith.constant 2 : index
    %c0_180 = arith.constant 0 : index
    %c0_181 = arith.constant 0 : index
    %333 = vector.load %arg11[%c2_179, %c0_180, %c0_181] : memref<6x13x54xf32, #tpu.memory_space<vmem>>, vector<1x13x54xf32>
    %334 = vector.shape_cast %333 : vector<1x13x54xf32> to vector<13x54xf32>
    %cst_182 = arith.constant dense<0.000000e+00> : vector<13x1xf32>
    %335 = tpu.matmul %334, %332, %cst_182 {dimension_numbers = #tpu.dot_dimension_numbers<[1], [0], [0], [1], [0, 0, 1, 1], [], []>} : vector<13x54xf32>, vector<54x1xf32>, vector<13x1xf32> -> vector<13x1xf32>
    %336 = arith.addf %331, %335 : vector<13x1xf32>
    %337 = vector.extract_strided_slice %273 {offsets = [0, 9], sizes = [54, 1], strides = [1, 1]} : vector<54x12xf32> to vector<54x1xf32>
    %c3_183 = arith.constant 3 : index
    %c0_184 = arith.constant 0 : index
    %c0_185 = arith.constant 0 : index
    %338 = vector.load %arg11[%c3_183, %c0_184, %c0_185] : memref<6x13x54xf32, #tpu.memory_space<vmem>>, vector<1x13x54xf32>
    %339 = vector.shape_cast %338 : vector<1x13x54xf32> to vector<13x54xf32>
    %cst_186 = arith.constant dense<0.000000e+00> : vector<13x1xf32>
    %340 = tpu.matmul %339, %337, %cst_186 {dimension_numbers = #tpu.dot_dimension_numbers<[1], [0], [0], [1], [0, 0, 1, 1], [], []>} : vector<13x54xf32>, vector<54x1xf32>, vector<13x1xf32> -> vector<13x1xf32>
    %341 = arith.addf %336, %340 : vector<13x1xf32>
    %342 = vector.extract_strided_slice %273 {offsets = [0, 10], sizes = [54, 1], strides = [1, 1]} : vector<54x12xf32> to vector<54x1xf32>
    %c4_187 = arith.constant 4 : index
    %c0_188 = arith.constant 0 : index
    %c0_189 = arith.constant 0 : index
    %343 = vector.load %arg11[%c4_187, %c0_188, %c0_189] : memref<6x13x54xf32, #tpu.memory_space<vmem>>, vector<1x13x54xf32>
    %344 = vector.shape_cast %343 : vector<1x13x54xf32> to vector<13x54xf32>
    %cst_190 = arith.constant dense<0.000000e+00> : vector<13x1xf32>
    %345 = tpu.matmul %344, %342, %cst_190 {dimension_numbers = #tpu.dot_dimension_numbers<[1], [0], [0], [1], [0, 0, 1, 1], [], []>} : vector<13x54xf32>, vector<54x1xf32>, vector<13x1xf32> -> vector<13x1xf32>
    %346 = arith.addf %341, %345 : vector<13x1xf32>
    %347 = vector.extract_strided_slice %273 {offsets = [0, 11], sizes = [54, 1], strides = [1, 1]} : vector<54x12xf32> to vector<54x1xf32>
    %c5_191 = arith.constant 5 : index
    %c0_192 = arith.constant 0 : index
    %c0_193 = arith.constant 0 : index
    %348 = vector.load %arg11[%c5_191, %c0_192, %c0_193] : memref<6x13x54xf32, #tpu.memory_space<vmem>>, vector<1x13x54xf32>
    %349 = vector.shape_cast %348 : vector<1x13x54xf32> to vector<13x54xf32>
    %cst_194 = arith.constant dense<0.000000e+00> : vector<13x1xf32>
    %350 = tpu.matmul %349, %347, %cst_194 {dimension_numbers = #tpu.dot_dimension_numbers<[1], [0], [0], [1], [0, 0, 1, 1], [], []>} : vector<13x54xf32>, vector<54x1xf32>, vector<13x1xf32> -> vector<13x1xf32>
    %351 = arith.addf %346, %350 : vector<13x1xf32>
    %352 = vector.extract_strided_slice %351 {offsets = [0, 0], sizes = [1, 1], strides = [1, 1]} : vector<13x1xf32> to vector<1x1xf32>
    %c0_195 = arith.constant 0 : index
    %c1_196 = arith.constant 1 : index
    %353 = vector.load %arg13[%c0_195, %c1_196] : memref<13x2xf32, #tpu.memory_space<vmem>>, vector<1x1xf32>
    tpu.vector_store %arg13[%c0_195, %c1_196], %352 {strides = array<i32>} : memref<13x2xf32, #tpu.memory_space<vmem>>, vector<1x1xf32>,
    %354 = vector.extract_strided_slice %351 {offsets = [1, 0], sizes = [12, 1], strides = [1, 1]} : vector<13x1xf32> to vector<12x1xf32>
    %355 = vector.shape_cast %354 : vector<12x1xf32> to vector<1x12x1xf32>
    %cst_197 = arith.constant dense<0xFF800000> : vector<1xf32>
    %356 = vector.multi_reduction <maximumf>, %355, %cst_197 [1, 2] : vector<1x12x1xf32> to vector<1xf32>
    %357 = vector.shape_cast %356 : vector<1xf32> to vector<1x1x1xf32>
    %358 = vector.extract %357[0, 0, 0] : f32 from vector<1x1x1xf32>
    %359 = vector.broadcast %358 : f32 to vector<12x1xf32>
    %360 = arith.subf %354, %359 : vector<12x1xf32>
    %361 = math.exp %360 : vector<12x1xf32>
    %362 = vector.shape_cast %361 : vector<12x1xf32> to vector<1x12x1xf32>
    %cst_198 = arith.constant dense<0.000000e+00> : vector<1xf32>
    %363 = vector.multi_reduction <add>, %362, %cst_198 [1, 2] : vector<1x12x1xf32> to vector<1xf32>
    %364 = vector.shape_cast %363 : vector<1xf32> to vector<1x1x1xf32>
    %365 = vector.extract %364[0, 0, 0] : f32 from vector<1x1x1xf32>
    %366 = vector.broadcast %365 : f32 to vector<12x1xf32>
    %367 = arith.divf %361, %366 : vector<12x1xf32>
    %c1_199 = arith.constant 1 : index
    %c1_200 = arith.constant 1 : index
    %368 = vector.load %arg13[%c1_199, %c1_200] : memref<13x2xf32, #tpu.memory_space<vmem>>, vector<12x1xf32>
    tpu.vector_store %arg13[%c1_199, %c1_200], %367 {strides = array<i32>} : memref<13x2xf32, #tpu.memory_space<vmem>>, vector<12x1xf32>,
    return
  }
}

</mosaic_0001>

<llo_original>
// kernel: _lambda_.1
$region0: #{_lambda_.1}
  #allocation0 [shape = 'u32[]', space=smem, size = 0x4, offset = 0x4, fixed_abs, tag = 'smem constant byte address 0x4 - core index']
  #allocation1 [shape = 'u32[72,128]{1,0:T(1,128)}', space=vmem, size = 0x9000, scoped, tag = 'internal scratch']
  #allocation2 [shape = 'f32[54,12]{1,0:T(8,128)}', space=vmem, size = 0x7000, scoped, tag = 'scratch operand']
  %s0 = inlined_call_operand.vmem [shape: f32[54,12], index: 0, kind: input, shape index: {}]
  %s1 = inlined_call_operand.vmem [shape: f32[12,12], index: 1, kind: input, shape index: {}]
  %s2 = inlined_call_operand.vmem [shape: f32[1,12], index: 2, kind: input, shape index: {}]
  %s3 = inlined_call_operand.vmem [shape: f32[2,12,12], index: 3, kind: input, shape index: {}]
  %s4 = inlined_call_operand.vmem [shape: f32[2,1,12], index: 4, kind: input, shape index: {}]
  %s5 = inlined_call_operand.vmem [shape: f32[2,1,6], index: 5, kind: input, shape index: {}]
  %s6 = inlined_call_operand.vmem [shape: f32[2,1,6], index: 6, kind: input, shape index: {}]
  %s7 = inlined_call_operand.vmem [shape: f32[2,6,18], index: 7, kind: input, shape index: {}]
  %s8 = inlined_call_operand.vmem [shape: f32[2,1,18], index: 8, kind: input, shape index: {}]
  %s9 = inlined_call_operand.vmem [shape: f32[2,12,12], index: 9, kind: input, shape index: {}]
  %s10 = inlined_call_operand.vmem [shape: f32[2,1,12], index: 10, kind: input, shape index: {}]
  %s11 = inlined_call_operand.vmem [shape: f32[6,13,54], index: 11, kind: input, shape index: {}]
  %s12 = inlined_call_operand.vmem [shape: f32[13,1], index: 12, kind: input, shape index: {}]
  %s13 = inlined_call_operand.vmem [shape: f32[13,2], index: 13, kind: output, shape index: {}]
  %s14 = sld [smem:[#allocation0]]
  $region62: #{_lambda_.1} parent=0
    _
  %s16 = ssub.s32 1, %s14
  %s17 = scalar_select 0, %s16, %s14
  // Predicated region
  $region2: #{_lambda_.1} parent=0 // pred_check
    _
  $region3: #{_lambda_.1} parent=0 // pred_check_branch
    %19 = sbr.rel (0) target = $region5
  $region4: #{_lambda_.1} parent=0 // pred_region
    _
  $region5: #{_lambda_.1} parent=0 // pred_fallthru
    _
  // Predicated region
  $region6: #{_lambda_.1} parent=0 // pred_check
    _
  $region7: #{_lambda_.1} parent=0 // pred_check_branch
    %21 = sbr.rel (0) target = $region9
  $region8: #{_lambda_.1} parent=0 // pred_region
    _
  $region9: #{_lambda_.1} parent=0 // pred_fallthru
    _
  // Predicated region
  $region10: #{_lambda_.1} parent=0 // pred_check
    _
  $region11: #{_lambda_.1} parent=0 // pred_check_branch
    %23 = sbr.rel (0) target = $region13
  $region12: #{_lambda_.1} parent=0 // pred_region
    _
  $region13: #{_lambda_.1} parent=0 // pred_fallthru
    _
  // Predicated region
  $region14: #{_lambda_.1} parent=0 // pred_check
    _
  $region15: #{_lambda_.1} parent=0 // pred_check_branch
    %25 = sbr.rel (0) target = $region17
  $region16: #{_lambda_.1} parent=0 // pred_region
    _
  $region17: #{_lambda_.1} parent=0 // pred_fallthru
    _
  // Predicated region
  $region18: #{_lambda_.1} parent=0 // pred_check
    _
  $region19: #{_lambda_.1} parent=0 // pred_check_branch
    %27 = sbr.rel (0) target = $region21
  $region20: #{_lambda_.1} parent=0 // pred_region
    _
  $region21: #{_lambda_.1} parent=0 // pred_fallthru
    _
  // Predicated region
  $region22: #{_lambda_.1} parent=0 // pred_check
    _
  $region23: #{_lambda_.1} parent=0 // pred_check_branch
    %29 = sbr.rel (0) target = $region25
  $region24: #{_lambda_.1} parent=0 // pred_region
    _
  $region25: #{_lambda_.1} parent=0 // pred_fallthru
    _
  // Predicated region
  $region26: #{_lambda_.1} parent=0 // pred_check
    _
  $region27: #{_lambda_.1} parent=0 // pred_check_branch
    %31 = sbr.rel (0) target = $region29
  $region28: #{_lambda_.1} parent=0 // pred_region
    _
  $region29: #{_lambda_.1} parent=0 // pred_fallthru
    _
  // Predicated region
  $region30: #{_lambda_.1} parent=0 // pred_check
    _
  $region31: #{_lambda_.1} parent=0 // pred_check_branch
    %33 = sbr.rel (0) target = $region33
  $region32: #{_lambda_.1} parent=0 // pred_region
    _
  $region33: #{_lambda_.1} parent=0 // pred_fallthru
    _
  // Predicated region
  $region34: #{_lambda_.1} parent=0 // pred_check
    _
  $region35: #{_lambda_.1} parent=0 // pred_check_branch
    %35 = sbr.rel (0) target = $region37
  $region36: #{_lambda_.1} parent=0 // pred_region
    _
  $region37: #{_lambda_.1} parent=0 // pred_fallthru
    _
  // Predicated region
  $region38: #{_lambda_.1} parent=0 // pred_check
    _
  $region39: #{_lambda_.1} parent=0 // pred_check_branch
    %37 = sbr.rel (0) target = $region41
  $region40: #{_lambda_.1} parent=0 // pred_region
    _
  $region41: #{_lambda_.1} parent=0 // pred_fallthru
    _
  // Predicated region
  $region42: #{_lambda_.1} parent=0 // pred_check
    _
  $region43: #{_lambda_.1} parent=0 // pred_check_branch
    %39 = sbr.rel (0) target = $region45
  $region44: #{_lambda_.1} parent=0 // pred_region
    _
  $region45: #{_lambda_.1} parent=0 // pred_fallthru
    _
  // Predicated region
  $region46: #{_lambda_.1} parent=0 // pred_check
    _
  $region47: #{_lambda_.1} parent=0 // pred_check_branch
    %41 = sbr.rel (0) target = $region49
  $region48: #{_lambda_.1} parent=0 // pred_region
    _
  $region49: #{_lambda_.1} parent=0 // pred_fallthru
    _
  // Predicated region
  $region50: #{_lambda_.1} parent=0 // pred_check
    _
  $region51: #{_lambda_.1} parent=0 // pred_check_branch
    %43 = sbr.rel (0) target = $region53
  $region52: #{_lambda_.1} parent=0 // pred_region
    _
  $region53: #{_lambda_.1} parent=0 // pred_fallthru
    _
  %v44 = vld [vmem:[%s0] sm:$0xff]
  %v45 = vld [vmem:[%s0 + $0x8] sm:$0xff]
  %v46 = vld [vmem:[%s0 + $0x10] sm:$0xff]
  %v47 = vld [vmem:[%s0 + $0x18] sm:$0xff]
  %v48 = vld [vmem:[%s0 + $0x20] sm:$0xff]
  %v49 = vld [vmem:[%s0 + $0x28] sm:$0xff]
  %v50 = vld [vmem:[%s0 + $0x30] sm:$0x3f]
  %v51 = vld [vmem:[%s1] sm:$0xff]
  %v52 = vld [vmem:[%s1 + $0x8] sm:$0xf]
  %v53 = vld [vmem:[%s2] sm:$0x1]
  %v55 = vperm.slane %v53, 0
  %vm57 = vcmask 97280
  %v59 = vsel %vm57, %v44, 0
  %v62 = vsel %vm57, %v45, 0
  %v65 = vsel %vm57, %v46, 0
  %v68 = vsel %vm57, %v47, 0
  %v71 = vsel %vm57, %v48, 0
  %v74 = vsel %vm57, %v49, 0
  %v77 = vsel %vm57, %v50, 0
  %vm79 = vcmask 1043456
  %v81 = vsel %vm79, %v52, 0
  %83 = vmatpush.msra.mxu0 0.0
  %84 = vmatpush.msra.mxu0 0.0
  %85 = vmatpush.msra.mxu0 0.0
  %86 = vmatpush.msra.mxu0 0.0
  %87 = vmatpush.msra.mxu0 0.0
  %88 = vmatpush.msra.mxu0 0.0
  %89 = vmatpush.msra.mxu0 0.0
  %90 = vmatpush.msra.mxu0 0.0
  %91 = vmatpush.msra.mxu0 0.0
  %92 = vmatpush.msra.mxu0 0.0
  %93 = vmatpush.msra.mxu0 0.0
  %94 = vmatpush.msra.mxu0 0.0
  %95 = vmatpush.msra.mxu0 0.0
  %96 = vmatpush.msra.mxu0 0.0
  %97 = vmatpush.msra.mxu0 %v81
  %98 = vmatpush.msra.mxu0 %v51
  %99 = vmatmul.f32.gmra.mxu0 %v59
  %v100 = vpop.f32.mrf.mxu0
  %v101 = vadd.f32 %v55, %v100
  %102 = vmatmul.f32.gmra.mxu0 %v62
  %v103 = vpop.f32.mrf.mxu0
  %v104 = vadd.f32 %v55, %v103
  %105 = vmatmul.f32.gmra.mxu0 %v65
  %v106 = vpop.f32.mrf.mxu0
  %v107 = vadd.f32 %v55, %v106
  %108 = vmatmul.f32.gmra.mxu0 %v68
  %v109 = vpop.f32.mrf.mxu0
  %v110 = vadd.f32 %v55, %v109
  %111 = vmatmul.f32.gmra.mxu0 %v71
  %v112 = vpop.f32.mrf.mxu0
  %v113 = vadd.f32 %v55, %v112
  %114 = vmatmul.f32.gmra.mxu0 %v74
  %v115 = vpop.f32.mrf.mxu0
  %v116 = vadd.f32 %v55, %v115
  %117 = vmatmul.f32.gmra.mxu0 %v77
  %v118 = vpop.f32.mrf.mxu0
  %v119 = vadd.f32 %v55, %v118
  %120 = vdwg.mxu0
  %v121 = vld [vmem:[%s3] sm:$0xff]
  %v122 = vld [vmem:[%s3 + $0x8] sm:$0xf]
  %v123 = vld [vmem:[%s4] sm:$0x1]
  %v125 = vperm.slane %v123, 0
  %v128 = vsel %vm57, %v101, 0
  %v131 = vsel %vm57, %v104, 0
  %v134 = vsel %vm57, %v107, 0
  %v137 = vsel %vm57, %v110, 0
  %v140 = vsel %vm57, %v113, 0
  %v143 = vsel %vm57, %v116, 0
  %v146 = vsel %vm57, %v119, 0
  %v149 = vsel %vm79, %v122, 0
  %151 = vmatpush.msra.mxu0 0.0
  %152 = vmatpush.msra.mxu0 0.0
  %153 = vmatpush.msra.mxu0 0.0
  %154 = vmatpush.msra.mxu0 0.0
  %155 = vmatpush.msra.mxu0 0.0
  %156 = vmatpush.msra.mxu0 0.0
  %157 = vmatpush.msra.mxu0 0.0
  %158 = vmatpush.msra.mxu0 0.0
  %159 = vmatpush.msra.mxu0 0.0
  %160 = vmatpush.msra.mxu0 0.0
  %161 = vmatpush.msra.mxu0 0.0
  %162 = vmatpush.msra.mxu0 0.0
  %163 = vmatpush.msra.mxu0 0.0
  %164 = vmatpush.msra.mxu0 0.0
  %165 = vmatpush.msra.mxu0 %v149
  %166 = vmatpush.msra.mxu0 %v121
  %167 = vmatmul.f32.gmra.mxu0 %v128
  %v168 = vpop.f32.mrf.mxu0
  %v169 = vadd.f32 %v125, %v168
  %170 = vmatmul.f32.gmra.mxu0 %v131
  %v171 = vpop.f32.mrf.mxu0
  %v172 = vadd.f32 %v125, %v171
  %173 = vmatmul.f32.gmra.mxu0 %v134
  %v174 = vpop.f32.mrf.mxu0
  %v175 = vadd.f32 %v125, %v174
  %176 = vmatmul.f32.gmra.mxu0 %v137
  %v177 = vpop.f32.mrf.mxu0
  %v178 = vadd.f32 %v125, %v177
  %179 = vmatmul.f32.gmra.mxu0 %v140
  %v180 = vpop.f32.mrf.mxu0
  %v181 = vadd.f32 %v125, %v180
  %182 = vmatmul.f32.gmra.mxu0 %v143
  %v183 = vpop.f32.mrf.mxu0
  %v184 = vadd.f32 %v125, %v183
  %185 = vmatmul.f32.gmra.mxu0 %v146
  %v186 = vpop.f32.mrf.mxu0
  %v187 = vadd.f32 %v125, %v186
  %188 = vdwg.mxu0
  %vm189 = vcmp.gt.f32.partialorder %v169, 0.0
  %vm190 = vcmp.gt.f32.partialorder %v172, 0.0
  %vm191 = vcmp.gt.f32.partialorder %v175, 0.0
  %vm192 = vcmp.gt.f32.partialorder %v178, 0.0
  %vm193 = vcmp.gt.f32.partialorder %v181, 0.0
  %vm194 = vcmp.gt.f32.partialorder %v184, 0.0
  %vm195 = vcmp.gt.f32.partialorder %v187, 0.0
  %v196 = vmin.f32 %v169, 0.0
  %v197 = vmin.f32 %v172, 0.0
  %v198 = vmin.f32 %v175, 0.0
  %v199 = vmin.f32 %v178, 0.0
  %v200 = vmin.f32 %v181, 0.0
  %v201 = vmin.f32 %v184, 0.0
  %v202 = vmin.f32 %v187, 0.0
  %v203 = vmul.f32 %v196, 1.442695
  %v204 = vpow.pop %v203
  %v205 = vmul.f32 %v197, 1.442695
  %v206 = vpow.pop %v205
  %v207 = vmul.f32 %v198, 1.442695
  %v208 = vpow.pop %v207
  %v209 = vmul.f32 %v199, 1.442695
  %v210 = vpow.pop %v209
  %v211 = vmul.f32 %v200, 1.442695
  %v212 = vpow.pop %v211
  %v213 = vmul.f32 %v201, 1.442695
  %v214 = vpow.pop %v213
  %v215 = vmul.f32 %v202, 1.442695
  %v216 = vpow.pop %v215
  %v217 = vsub.f32 %v204, 1.0
  %v218 = vsub.f32 %v206, 1.0
  %v219 = vsub.f32 %v208, 1.0
  %v220 = vsub.f32 %v210, 1.0
  %v221 = vsub.f32 %v212, 1.0
  %v222 = vsub.f32 %v214, 1.0
  %v223 = vsub.f32 %v216, 1.0
  %v224 = vsel %vm189, %v169, %v217
  %v225 = vsel %vm190, %v172, %v218
  %v226 = vsel %vm191, %v175, %v219
  %v227 = vsel %vm192, %v178, %v220
  %v228 = vsel %vm193, %v181, %v221
  %v229 = vsel %vm194, %v184, %v222
  %v230 = vsel %vm195, %v187, %v223
  %v231 = vld [vmem:[%s5] sm:$0x1]
  %v232 = vld [vmem:[%s6] sm:$0x1]
  %vm233 = vcmask 48128
  %v234 = vsel %vm233, %v224, 0.0
  %235 = vadd.xlane.f32.xlu0 %v234
  %v236 = vpop.xlane.xlu0 %235
  %v237 = vsel %vm233, %v225, 0.0
  %238 = vadd.xlane.f32.xlu0 %v237
  %v239 = vpop.xlane.xlu0 %238
  %v240 = vsel %vm233, %v226, 0.0
  %241 = vadd.xlane.f32.xlu0 %v240
  %v242 = vpop.xlane.xlu0 %241
  %v243 = vsel %vm233, %v227, 0.0
  %244 = vadd.xlane.f32.xlu0 %v243
  %v245 = vpop.xlane.xlu0 %244
  %v246 = vsel %vm233, %v228, 0.0
  %247 = vadd.xlane.f32.xlu0 %v246
  %v248 = vpop.xlane.xlu0 %247
  %v249 = vsel %vm233, %v229, 0.0
  %250 = vadd.xlane.f32.xlu0 %v249
  %v251 = vpop.xlane.xlu0 %250
  %vm252 = vcmask 46080
  %v253 = vsel %vm252, %v230, 0.0
  %254 = vadd.xlane.f32.xlu0 %v253
  %v255 = vpop.xlane.xlu0 %254
  %v256 = vrcp.pop 6.0
  %v257 = vmul.f32 6.0, %v256
  %v258 = vsub.f32 1.0, %v257
  %v259 = vmul.f32 %v256, %v258
  %v260 = vadd.f32 %v256, %v259
  %vm261 = vweird.f32 %v256
  %v262 = vsel %vm261, %v256, %v260
  %v263 = vmul.f32 %v236, %v262
  %v264 = vmul.f32 %v239, %v262
  %v265 = vmul.f32 %v242, %v262
  %v266 = vmul.f32 %v245, %v262
  %v267 = vmul.f32 %v248, %v262
  %v268 = vmul.f32 %v251, %v262
  %v269 = vmul.f32 %v255, %v262
  %v270 = vsub.f32 %v224, %v263
  %v271 = vsub.f32 %v225, %v264
  %v272 = vsub.f32 %v226, %v265
  %v273 = vsub.f32 %v227, %v266
  %v274 = vsub.f32 %v228, %v267
  %v275 = vsub.f32 %v229, %v268
  %v276 = vsub.f32 %v230, %v269
  %v277 = vmul.f32 %v270, %v270
  %v278 = vmul.f32 %v271, %v271
  %v279 = vmul.f32 %v272, %v272
  %v280 = vmul.f32 %v273, %v273
  %v281 = vmul.f32 %v274, %v274
  %v282 = vmul.f32 %v275, %v275
  %v283 = vmul.f32 %v276, %v276
  %v284 = vsel %vm233, %v277, 0.0
  %285 = vadd.xlane.f32.xlu0 %v284
  %v286 = vpop.xlane.xlu0 %285
  %v287 = vsel %vm233, %v278, 0.0
  %288 = vadd.xlane.f32.xlu0 %v287
  %v289 = vpop.xlane.xlu0 %288
  %v290 = vsel %vm233, %v279, 0.0
  %291 = vadd.xlane.f32.xlu0 %v290
  %v292 = vpop.xlane.xlu0 %291
  %v293 = vsel %vm233, %v280, 0.0
  %294 = vadd.xlane.f32.xlu0 %v293
  %v295 = vpop.xlane.xlu0 %294
  %v296 = vsel %vm233, %v281, 0.0
  %297 = vadd.xlane.f32.xlu0 %v296
  %v298 = vpop.xlane.xlu0 %297
  %v299 = vsel %vm233, %v282, 0.0
  %300 = vadd.xlane.f32.xlu0 %v299
  %v301 = vpop.xlane.xlu0 %300
  %v302 = vsel %vm252, %v283, 0.0
  %303 = vadd.xlane.f32.xlu0 %v302
  %v304 = vpop.xlane.xlu0 %303
  %v305 = vmul.f32 %v286, %v262
  %v306 = vmul.f32 %v289, %v262
  %v307 = vmul.f32 %v292, %v262
  %v308 = vmul.f32 %v295, %v262
  %v309 = vmul.f32 %v298, %v262
  %v310 = vmul.f32 %v301, %v262
  %v311 = vmul.f32 %v304, %v262
  %v312 = vadd.f32 %v305, 1e-05
  %v313 = vadd.f32 %v306, 1e-05
  %v314 = vadd.f32 %v307, 1e-05
  %v315 = vadd.f32 %v308, 1e-05
  %v316 = vadd.f32 %v309, 1e-05
  %v317 = vadd.f32 %v310, 1e-05
  %v318 = vadd.f32 %v311, 1e-05
  %v319 = vrsqrt.pop %v312
  %v320 = vmul.f32 %v319, %v312
  %v321 = vmul.f32 %v320, %v319
  %v322 = vmul.f32 0.5, %v321
  %v323 = vsub.f32 1.5, %v322
  %v324 = vmul.f32 %v319, %v323
  %vm325 = vweird.f32 %v312
  %vm326 = vweird.f32 %v319
  %vm327 = vmor %vm325, %vm326
  %v328 = vsel %vm327, %v319, %v324
  %v329 = vrsqrt.pop %v313
  %v330 = vmul.f32 %v329, %v313
  %v331 = vmul.f32 %v330, %v329
  %v332 = vmul.f32 0.5, %v331
  %v333 = vsub.f32 1.5, %v332
  %v334 = vmul.f32 %v329, %v333
  %vm335 = vweird.f32 %v313
  %vm336 = vweird.f32 %v329
  %vm337 = vmor %vm335, %vm336
  %v338 = vsel %vm337, %v329, %v334
  %v339 = vrsqrt.pop %v314
  %v340 = vmul.f32 %v339, %v314
  %v341 = vmul.f32 %v340, %v339
  %v342 = vmul.f32 0.5, %v341
  %v343 = vsub.f32 1.5, %v342
  %v344 = vmul.f32 %v339, %v343
  %vm345 = vweird.f32 %v314
  %vm346 = vweird.f32 %v339
  %vm347 = vmor %vm345, %vm346
  %v348 = vsel %vm347, %v339, %v344
  %v349 = vrsqrt.pop %v315
  %v350 = vmul.f32 %v349, %v315
  %v351 = vmul.f32 %v350, %v349
  %v352 = vmul.f32 0.5, %v351
  %v353 = vsub.f32 1.5, %v352
  %v354 = vmul.f32 %v349, %v353
  %vm355 = vweird.f32 %v315
  %vm356 = vweird.f32 %v349
  %vm357 = vmor %vm355, %vm356
  %v358 = vsel %vm357, %v349, %v354
  %v359 = vrsqrt.pop %v316
  %v360 = vmul.f32 %v359, %v316
  %v361 = vmul.f32 %v360, %v359
  %v362 = vmul.f32 0.5, %v361
  %v363 = vsub.f32 1.5, %v362
  %v364 = vmul.f32 %v359, %v363
  %vm365 = vweird.f32 %v316
  %vm366 = vweird.f32 %v359
  %vm367 = vmor %vm365, %vm366
  %v368 = vsel %vm367, %v359, %v364
  %v369 = vrsqrt.pop %v317
  %v370 = vmul.f32 %v369, %v317
  %v371 = vmul.f32 %v370, %v369
  %v372 = vmul.f32 0.5, %v371
  %v373 = vsub.f32 1.5, %v372
  %v374 = vmul.f32 %v369, %v373
  %vm375 = vweird.f32 %v317
  %vm376 = vweird.f32 %v369
  %vm377 = vmor %vm375, %vm376
  %v378 = vsel %vm377, %v369, %v374
  %v379 = vrsqrt.pop %v318
  %v380 = vmul.f32 %v379, %v318
  %v381 = vmul.f32 %v380, %v379
  %v382 = vmul.f32 0.5, %v381
  %v383 = vsub.f32 1.5, %v382
  %v384 = vmul.f32 %v379, %v383
  %vm385 = vweird.f32 %v318
  %vm386 = vweird.f32 %v379
  %vm387 = vmor %vm385, %vm386
  %v388 = vsel %vm387, %v379, %v384
  %v389 = vmul.f32 %v270, %v328
  %v390 = vmul.f32 %v271, %v338
  %v391 = vmul.f32 %v272, %v348
  %v392 = vmul.f32 %v273, %v358
  %v393 = vmul.f32 %v274, %v368
  %v394 = vmul.f32 %v275, %v378
  %v395 = vmul.f32 %v276, %v388
  %v397 = vperm.slane %v231, 0
  %v399 = vmul.f32 %v389, %v397
  %v400 = vmul.f32 %v390, %v397
  %v401 = vmul.f32 %v391, %v397
  %v402 = vmul.f32 %v392, %v397
  %v403 = vmul.f32 %v393, %v397
  %v404 = vmul.f32 %v394, %v397
  %v405 = vmul.f32 %v395, %v397
  %v407 = vperm.slane %v232, 0
  %v409 = vadd.f32 %v399, %v407
  %v410 = vadd.f32 %v400, %v407
  %v411 = vadd.f32 %v401, %v407
  %v412 = vadd.f32 %v402, %v407
  %v413 = vadd.f32 %v403, %v407
  %v414 = vadd.f32 %v404, %v407
  %v415 = vadd.f32 %v405, %v407
  %v416 = vld [vmem:[%s7] sm:$0x3f]
  %v417 = vld [vmem:[%s8] sm:$0x1]
  %v419 = vperm.slane %v417, 0
  %v422 = vsel %vm233, %v409, 0
  %v425 = vsel %vm233, %v410, 0
  %v428 = vsel %vm233, %v411, 0
  %v431 = vsel %vm233, %v412, 0
  %v434 = vsel %vm233, %v413, 0
  %v437 = vsel %vm233, %v414, 0
  %v440 = vsel %vm233, %v415, 0
  %vm442 = vcmask 1045504
  %v444 = vsel %vm442, %v416, 0
  %446 = vmatpush.msra.mxu0 0.0
  %447 = vmatpush.msra.mxu0 0.0
  %448 = vmatpush.msra.mxu0 0.0
  %449 = vmatpush.msra.mxu0 0.0
  %450 = vmatpush.msra.mxu0 0.0
  %451 = vmatpush.msra.mxu0 0.0
  %452 = vmatpush.msra.mxu0 0.0
  %453 = vmatpush.msra.mxu0 0.0
  %454 = vmatpush.msra.mxu0 0.0
  %455 = vmatpush.msra.mxu0 0.0
  %456 = vmatpush.msra.mxu0 0.0
  %457 = vmatpush.msra.mxu0 0.0
  %458 = vmatpush.msra.mxu0 0.0
  %459 = vmatpush.msra.mxu0 0.0
  %460 = vmatpush.msra.mxu0 0.0
  %461 = vmatpush.msra.mxu0 %v444
  %462 = vmatmul.f32.gmra.mxu0 %v422
  %v463 = vpop.f32.mrf.mxu0
  %v464 = vadd.f32 %v419, %v463
  %465 = vmatmul.f32.gmra.mxu0 %v425
  %v466 = vpop.f32.mrf.mxu0
  %v467 = vadd.f32 %v419, %v466
  %468 = vmatmul.f32.gmra.mxu0 %v428
  %v469 = vpop.f32.mrf.mxu0
  %v470 = vadd.f32 %v419, %v469
  %471 = vmatmul.f32.gmra.mxu0 %v431
  %v472 = vpop.f32.mrf.mxu0
  %v473 = vadd.f32 %v419, %v472
  %474 = vmatmul.f32.gmra.mxu0 %v434
  %v475 = vpop.f32.mrf.mxu0
  %v476 = vadd.f32 %v419, %v475
  %477 = vmatmul.f32.gmra.mxu0 %v437
  %v478 = vpop.f32.mrf.mxu0
  %v479 = vadd.f32 %v419, %v478
  %480 = vmatmul.f32.gmra.mxu0 %v440
  %v481 = vpop.f32.mrf.mxu0
  %v482 = vadd.f32 %v419, %v481
  %483 = vdwg.mxu0
  %491 = vrot.lane.b32.xlu0 %v464, 122
  %v492 = vpop.permute.xlu0 %491
  %493 = vrot.lane.b32.xlu0 %v467, 122
  %v494 = vpop.permute.xlu0 %493
  %495 = vrot.lane.b32.xlu0 %v470, 122
  %v496 = vpop.permute.xlu0 %495
  %497 = vrot.lane.b32.xlu0 %v473, 122
  %v498 = vpop.permute.xlu0 %497
  %499 = vrot.lane.b32.xlu0 %v476, 122
  %v500 = vpop.permute.xlu0 %499
  %501 = vrot.lane.b32.xlu0 %v479, 122
  %v502 = vpop.permute.xlu0 %501
  %503 = vrot.lane.b32.xlu0 %v482, 122
  %v504 = vpop.permute.xlu0 %503
  %v505 = vsel %vm233, %v464, 0
  %v507 = vsel %vm233, %v467, 0
  %v509 = vsel %vm233, %v470, 0
  %v511 = vsel %vm233, %v473, 0
  %v513 = vsel %vm233, %v476, 0
  %v515 = vsel %vm233, %v479, 0
  %v517 = vsel %vm233, %v482, 0
  %v519 = vsel %vm233, %v492, 0
  %v521 = vsel %vm233, %v494, 0
  %v523 = vsel %vm233, %v496, 0
  %v525 = vsel %vm233, %v498, 0
  %v527 = vsel %vm233, %v500, 0
  %v529 = vsel %vm233, %v502, 0
  %v531 = vsel %vm233, %v504, 0
  %533 = vmatpush.xpose.msra.mxu0 0.0
  %534 = vmatpush.xpose.msra.mxu0 0.0
  %535 = vmatpush.xpose.msra.mxu0 0.0
  %536 = vmatpush.xpose.msra.mxu0 0.0
  %537 = vmatpush.xpose.msra.mxu0 0.0
  %538 = vmatpush.xpose.msra.mxu0 0.0
  %539 = vmatpush.xpose.msra.mxu0 0.0
  %540 = vmatpush.xpose.msra.mxu0 0.0
  %541 = vmatpush.xpose.msra.mxu0 0.0
  %542 = vmatpush.xpose.msra.mxu0 %v531
  %543 = vmatpush.xpose.msra.mxu0 %v529
  %544 = vmatpush.xpose.msra.mxu0 %v527
  %545 = vmatpush.xpose.msra.mxu0 %v525
  %546 = vmatpush.xpose.msra.mxu0 %v523
  %547 = vmatpush.xpose.msra.mxu0 %v521
  %548 = vmatpush.xpose.msra.mxu0 %v519
  %549 = vmatmul.f32.gmra.mxu0 %v505
  %v550 = vpop.f32.mrf.mxu0
  %v551 = vadd.f32 0.0, %v550
  %552 = vmatmul.f32.gmra.mxu0 %v507
  %v553 = vpop.f32.mrf.mxu0
  %v554 = vadd.f32 0.0, %v553
  %555 = vmatmul.f32.gmra.mxu0 %v509
  %v556 = vpop.f32.mrf.mxu0
  %v557 = vadd.f32 0.0, %v556
  %558 = vmatmul.f32.gmra.mxu0 %v511
  %v559 = vpop.f32.mrf.mxu0
  %v560 = vadd.f32 0.0, %v559
  %561 = vmatmul.f32.gmra.mxu0 %v513
  %v562 = vpop.f32.mrf.mxu0
  %v563 = vadd.f32 0.0, %v562
  %564 = vmatmul.f32.gmra.mxu0 %v515
  %v565 = vpop.f32.mrf.mxu0
  %v566 = vadd.f32 0.0, %v565
  %567 = vmatmul.f32.gmra.mxu0 %v517
  %v568 = vpop.f32.mrf.mxu0
  %v569 = vadd.f32 0.0, %v568
  %570 = vdwg.mxu0
  %vm571 = vcmask 441344
  %v572 = vsel %vm571, %v551, -inf
  %573 = vmax.xlane.f32.xlu0 %v572
  %v574 = vpop.xlane.xlu0 %573
  %v575 = vsel %vm571, %v554, -inf
  %576 = vmax.xlane.f32.xlu0 %v575
  %v577 = vpop.xlane.xlu0 %576
  %v578 = vsel %vm571, %v557, -inf
  %579 = vmax.xlane.f32.xlu0 %v578
  %v580 = vpop.xlane.xlu0 %579
  %v581 = vsel %vm571, %v560, -inf
  %582 = vmax.xlane.f32.xlu0 %v581
  %v583 = vpop.xlane.xlu0 %582
  %v584 = vsel %vm571, %v563, -inf
  %585 = vmax.xlane.f32.xlu0 %v584
  %v586 = vpop.xlane.xlu0 %585
  %v587 = vsel %vm571, %v566, -inf
  %588 = vmax.xlane.f32.xlu0 %v587
  %v589 = vpop.xlane.xlu0 %588
  %vm590 = vcmask 439296
  %v591 = vsel %vm590, %v569, -inf
  %592 = vmax.xlane.f32.xlu0 %v591
  %v593 = vpop.xlane.xlu0 %592
  %v594 = vsub.f32 %v551, %v574
  %v595 = vsub.f32 %v554, %v577
  %v596 = vsub.f32 %v557, %v580
  %v597 = vsub.f32 %v560, %v583
  %v598 = vsub.f32 %v563, %v586
  %v599 = vsub.f32 %v566, %v589
  %v600 = vsub.f32 %v569, %v593
  %v601 = vmul.f32 %v594, 1.442695
  %v602 = vpow.pop %v601
  %v603 = vmul.f32 %v595, 1.442695
  %v604 = vpow.pop %v603
  %v605 = vmul.f32 %v596, 1.442695
  %v606 = vpow.pop %v605
  %v607 = vmul.f32 %v597, 1.442695
  %v608 = vpow.pop %v607
  %v609 = vmul.f32 %v598, 1.442695
  %v610 = vpow.pop %v609
  %v611 = vmul.f32 %v599, 1.442695
  %v612 = vpow.pop %v611
  %v613 = vmul.f32 %v600, 1.442695
  %v614 = vpow.pop %v613
  %v615 = vsel %vm571, %v602, 0.0
  %616 = vadd.xlane.f32.xlu0 %v615
  %v617 = vpop.xlane.xlu0 %616
  %v618 = vsel %vm571, %v604, 0.0
  %619 = vadd.xlane.f32.xlu0 %v618
  %v620 = vpop.xlane.xlu0 %619
  %v621 = vsel %vm571, %v606, 0.0
  %622 = vadd.xlane.f32.xlu0 %v621
  %v623 = vpop.xlane.xlu0 %622
  %v624 = vsel %vm571, %v608, 0.0
  %625 = vadd.xlane.f32.xlu0 %v624
  %v626 = vpop.xlane.xlu0 %625
  %v627 = vsel %vm571, %v610, 0.0
  %628 = vadd.xlane.f32.xlu0 %v627
  %v629 = vpop.xlane.xlu0 %628
  %v630 = vsel %vm571, %v612, 0.0
  %631 = vadd.xlane.f32.xlu0 %v630
  %v632 = vpop.xlane.xlu0 %631
  %v633 = vsel %vm590, %v614, 0.0
  %634 = vadd.xlane.f32.xlu0 %v633
  %v635 = vpop.xlane.xlu0 %634
  %v636 = vrcp.pop %v617
  %v637 = vrcp.pop %v620
  %v638 = vrcp.pop %v623
  %v639 = vrcp.pop %v626
  %v640 = vrcp.pop %v629
  %v641 = vrcp.pop %v632
  %v642 = vrcp.pop %v635
  %v643 = vmul.f32 %v602, %v636
  %v644 = vmul.f32 %v604, %v637
  %v645 = vmul.f32 %v606, %v638
  %v646 = vmul.f32 %v608, %v639
  %v647 = vmul.f32 %v610, %v640
  %v648 = vmul.f32 %v612, %v641
  %v649 = vmul.f32 %v614, %v642
  %650 = vrot.lane.b32.xlu0 %v464, 116
  %v651 = vpop.permute.xlu0 %650
  %652 = vrot.lane.b32.xlu0 %v467, 116
  %v653 = vpop.permute.xlu0 %652
  %654 = vrot.lane.b32.xlu0 %v470, 116
  %v655 = vpop.permute.xlu0 %654
  %656 = vrot.lane.b32.xlu0 %v473, 116
  %v657 = vpop.permute.xlu0 %656
  %658 = vrot.lane.b32.xlu0 %v476, 116
  %v659 = vpop.permute.xlu0 %658
  %660 = vrot.lane.b32.xlu0 %v479, 116
  %v661 = vpop.permute.xlu0 %660
  %662 = vrot.lane.b32.xlu0 %v482, 116
  %v663 = vpop.permute.xlu0 %662
  %v671 = vsel %vm571, %v643, 0
  %v674 = vsel %vm571, %v644, 0
  %v677 = vsel %vm571, %v645, 0
  %v680 = vsel %vm571, %v646, 0
  %v683 = vsel %vm571, %v647, 0
  %v686 = vsel %vm571, %v648, 0
  %v689 = vsel %vm571, %v649, 0
  %v691 = vsel %vm442, %v663, 0
  %693 = vmatpush.msra.mxu0 0.0
  %694 = vmatpush.msra.mxu0 0.0
  %695 = vmatpush.msra.mxu0 0.0
  %696 = vmatpush.msra.mxu0 0.0
  %697 = vmatpush.msra.mxu0 0.0
  %698 = vmatpush.msra.mxu0 0.0
  %699 = vmatpush.msra.mxu0 0.0
  %700 = vmatpush.msra.mxu0 0.0
  %701 = vmatpush.msra.mxu0 0.0
  %702 = vmatpush.msra.mxu0 %v691
  %703 = vmatpush.msra.mxu0 %v661
  %704 = vmatpush.msra.mxu0 %v659
  %705 = vmatpush.msra.mxu0 %v657
  %706 = vmatpush.msra.mxu0 %v655
  %707 = vmatpush.msra.mxu0 %v653
  %708 = vmatpush.msra.mxu0 %v651
  %709 = vmatmul.f32.gmra.mxu0 %v671
  %v710 = vpop.f32.mrf.mxu0
  %v711 = vadd.f32 0.0, %v710
  %712 = vmatmul.f32.gmra.mxu0 %v674
  %v713 = vpop.f32.mrf.mxu0
  %v714 = vadd.f32 0.0, %v713
  %715 = vmatmul.f32.gmra.mxu0 %v677
  %v716 = vpop.f32.mrf.mxu0
  %v717 = vadd.f32 0.0, %v716
  %718 = vmatmul.f32.gmra.mxu0 %v680
  %v719 = vpop.f32.mrf.mxu0
  %v720 = vadd.f32 0.0, %v719
  %721 = vmatmul.f32.gmra.mxu0 %v683
  %v722 = vpop.f32.mrf.mxu0
  %v723 = vadd.f32 0.0, %v722
  %724 = vmatmul.f32.gmra.mxu0 %v686
  %v725 = vpop.f32.mrf.mxu0
  %v726 = vadd.f32 0.0, %v725
  %727 = vmatmul.f32.gmra.mxu0 %v689
  %v728 = vpop.f32.mrf.mxu0
  %v729 = vadd.f32 0.0, %v728
  %730 = vdwg.mxu0
  %731 = vst.msk [vmem:[#allocation2] sm:$0xff] %vm233, %v711
  %732 = vst.msk [vmem:[#allocation2 + $0x8] sm:$0xff] %vm233, %v714
  %733 = vst.msk [vmem:[#allocation2 + $0x10] sm:$0xff] %vm233, %v717
  %734 = vst.msk [vmem:[#allocation2 + $0x18] sm:$0xff] %vm233, %v720
  %735 = vst.msk [vmem:[#allocation2 + $0x20] sm:$0xff] %vm233, %v723
  %736 = vst.msk [vmem:[#allocation2 + $0x28] sm:$0xff] %vm233, %v726
  %737 = vst.msk [vmem:[#allocation2 + $0x30] sm:$0x3f] %vm252, %v729
  %v738 = vld [vmem:[%s5] sm:$0x1]
  %v739 = vld [vmem:[%s6] sm:$0x1]
  %747 = vrot.lane.b32.xlu0 %v224, 122
  %v748 = vpop.permute.xlu0 %747
  %749 = vrot.lane.b32.xlu0 %v225, 122
  %v750 = vpop.permute.xlu0 %749
  %751 = vrot.lane.b32.xlu0 %v226, 122
  %v752 = vpop.permute.xlu0 %751
  %753 = vrot.lane.b32.xlu0 %v227, 122
  %v754 = vpop.permute.xlu0 %753
  %755 = vrot.lane.b32.xlu0 %v228, 122
  %v756 = vpop.permute.xlu0 %755
  %757 = vrot.lane.b32.xlu0 %v229, 122
  %v758 = vpop.permute.xlu0 %757
  %759 = vrot.lane.b32.xlu0 %v230, 122
  %v760 = vpop.permute.xlu0 %759
  %v768 = vsel %vm233, %v748, 0.0
  %769 = vadd.xlane.f32.xlu0 %v768
  %v770 = vpop.xlane.xlu0 %769
  %v771 = vsel %vm233, %v750, 0.0
  %772 = vadd.xlane.f32.xlu0 %v771
  %v773 = vpop.xlane.xlu0 %772
  %v774 = vsel %vm233, %v752, 0.0
  %775 = vadd.xlane.f32.xlu0 %v774
  %v776 = vpop.xlane.xlu0 %775
  %v777 = vsel %vm233, %v754, 0.0
  %778 = vadd.xlane.f32.xlu0 %v777
  %v779 = vpop.xlane.xlu0 %778
  %v780 = vsel %vm233, %v756, 0.0
  %781 = vadd.xlane.f32.xlu0 %v780
  %v782 = vpop.xlane.xlu0 %781
  %v783 = vsel %vm233, %v758, 0.0
  %784 = vadd.xlane.f32.xlu0 %v783
  %v785 = vpop.xlane.xlu0 %784
  %v786 = vsel %vm252, %v760, 0.0
  %787 = vadd.xlane.f32.xlu0 %v786
  %v788 = vpop.xlane.xlu0 %787
  %v789 = vmul.f32 %v770, %v262
  %v790 = vmul.f32 %v773, %v262
  %v791 = vmul.f32 %v776, %v262
  %v792 = vmul.f32 %v779, %v262
  %v793 = vmul.f32 %v782, %v262
  %v794 = vmul.f32 %v785, %v262
  %v795 = vmul.f32 %v788, %v262
  %v796 = vsub.f32 %v224, %v789
  %v797 = vsub.f32 %v225, %v790
  %v798 = vsub.f32 %v226, %v791
  %v799 = vsub.f32 %v227, %v792
  %v800 = vsub.f32 %v228, %v793
  %v801 = vsub.f32 %v229, %v794
  %v802 = vsub.f32 %v230, %v795
  %v803 = vmul.f32 %v796, %v796
  %v804 = vmul.f32 %v797, %v797
  %v805 = vmul.f32 %v798, %v798
  %v806 = vmul.f32 %v799, %v799
  %v807 = vmul.f32 %v800, %v800
  %v808 = vmul.f32 %v801, %v801
  %v809 = vmul.f32 %v802, %v802
  %817 = vrot.lane.b32.xlu0 %v803, 122
  %v818 = vpop.permute.xlu0 %817
  %819 = vrot.lane.b32.xlu0 %v804, 122
  %v820 = vpop.permute.xlu0 %819
  %821 = vrot.lane.b32.xlu0 %v805, 122
  %v822 = vpop.permute.xlu0 %821
  %823 = vrot.lane.b32.xlu0 %v806, 122
  %v824 = vpop.permute.xlu0 %823
  %825 = vrot.lane.b32.xlu0 %v807, 122
  %v826 = vpop.permute.xlu0 %825
  %827 = vrot.lane.b32.xlu0 %v808, 122
  %v828 = vpop.permute.xlu0 %827
  %829 = vrot.lane.b32.xlu0 %v809, 122
  %v830 = vpop.permute.xlu0 %829
  %v838 = vsel %vm233, %v818, 0.0
  %839 = vadd.xlane.f32.xlu0 %v838
  %v840 = vpop.xlane.xlu0 %839
  %v841 = vsel %vm233, %v820, 0.0
  %842 = vadd.xlane.f32.xlu0 %v841
  %v843 = vpop.xlane.xlu0 %842
  %v844 = vsel %vm233, %v822, 0.0
  %845 = vadd.xlane.f32.xlu0 %v844
  %v846 = vpop.xlane.xlu0 %845
  %v847 = vsel %vm233, %v824, 0.0
  %848 = vadd.xlane.f32.xlu0 %v847
  %v849 = vpop.xlane.xlu0 %848
  %v850 = vsel %vm233, %v826, 0.0
  %851 = vadd.xlane.f32.xlu0 %v850
  %v852 = vpop.xlane.xlu0 %851
  %v853 = vsel %vm233, %v828, 0.0
  %854 = vadd.xlane.f32.xlu0 %v853
  %v855 = vpop.xlane.xlu0 %854
  %v856 = vsel %vm252, %v830, 0.0
  %857 = vadd.xlane.f32.xlu0 %v856
  %v858 = vpop.xlane.xlu0 %857
  %v859 = vmul.f32 %v840, %v262
  %v860 = vmul.f32 %v843, %v262
  %v861 = vmul.f32 %v846, %v262
  %v862 = vmul.f32 %v849, %v262
  %v863 = vmul.f32 %v852, %v262
  %v864 = vmul.f32 %v855, %v262
  %v865 = vmul.f32 %v858, %v262
  %v866 = vadd.f32 %v859, 1e-05
  %v867 = vadd.f32 %v860, 1e-05
  %v868 = vadd.f32 %v861, 1e-05
  %v869 = vadd.f32 %v862, 1e-05
  %v870 = vadd.f32 %v863, 1e-05
  %v871 = vadd.f32 %v864, 1e-05
  %v872 = vadd.f32 %v865, 1e-05
  %v873 = vrsqrt.pop %v866
  %v874 = vmul.f32 %v873, %v866
  %v875 = vmul.f32 %v874, %v873
  %v876 = vmul.f32 0.5, %v875
  %v877 = vsub.f32 1.5, %v876
  %v878 = vmul.f32 %v873, %v877
  %vm879 = vweird.f32 %v866
  %vm880 = vweird.f32 %v873
  %vm881 = vmor %vm879, %vm880
  %v882 = vsel %vm881, %v873, %v878
  %v883 = vrsqrt.pop %v867
  %v884 = vmul.f32 %v883, %v867
  %v885 = vmul.f32 %v884, %v883
  %v886 = vmul.f32 0.5, %v885
  %v887 = vsub.f32 1.5, %v886
  %v888 = vmul.f32 %v883, %v887
  %vm889 = vweird.f32 %v867
  %vm890 = vweird.f32 %v883
  %vm891 = vmor %vm889, %vm890
  %v892 = vsel %vm891, %v883, %v888
  %v893 = vrsqrt.pop %v868
  %v894 = vmul.f32 %v893, %v868
  %v895 = vmul.f32 %v894, %v893
  %v896 = vmul.f32 0.5, %v895
  %v897 = vsub.f32 1.5, %v896
  %v898 = vmul.f32 %v893, %v897
  %vm899 = vweird.f32 %v868
  %vm900 = vweird.f32 %v893
  %vm901 = vmor %vm899, %vm900
  %v902 = vsel %vm901, %v893, %v898
  %v903 = vrsqrt.pop %v869
  %v904 = vmul.f32 %v903, %v869
  %v905 = vmul.f32 %v904, %v903
  %v906 = vmul.f32 0.5, %v905
  %v907 = vsub.f32 1.5, %v906
  %v908 = vmul.f32 %v903, %v907
  %vm909 = vweird.f32 %v869
  %vm910 = vweird.f32 %v903
  %vm911 = vmor %vm909, %vm910
  %v912 = vsel %vm911, %v903, %v908
  %v913 = vrsqrt.pop %v870
  %v914 = vmul.f32 %v913, %v870
  %v915 = vmul.f32 %v914, %v913
  %v916 = vmul.f32 0.5, %v915
  %v917 = vsub.f32 1.5, %v916
  %v918 = vmul.f32 %v913, %v917
  %vm919 = vweird.f32 %v870
  %vm920 = vweird.f32 %v913
  %vm921 = vmor %vm919, %vm920
  %v922 = vsel %vm921, %v913, %v918
  %v923 = vrsqrt.pop %v871
  %v924 = vmul.f32 %v923, %v871
  %v925 = vmul.f32 %v924, %v923
  %v926 = vmul.f32 0.5, %v925
  %v927 = vsub.f32 1.5, %v926
  %v928 = vmul.f32 %v923, %v927
  %vm929 = vweird.f32 %v871
  %vm930 = vweird.f32 %v923
  %vm931 = vmor %vm929, %vm930
  %v932 = vsel %vm931, %v923, %v928
  %v933 = vrsqrt.pop %v872
  %v934 = vmul.f32 %v933, %v872
  %v935 = vmul.f32 %v934, %v933
  %v936 = vmul.f32 0.5, %v935
  %v937 = vsub.f32 1.5, %v936
  %v938 = vmul.f32 %v933, %v937
  %vm939 = vweird.f32 %v872
  %vm940 = vweird.f32 %v933
  %vm941 = vmor %vm939, %vm940
  %v942 = vsel %vm941, %v933, %v938
  %v943 = vmul.f32 %v796, %v882
  %v944 = vmul.f32 %v797, %v892
  %v945 = vmul.f32 %v798, %v902
  %v946 = vmul.f32 %v799, %v912
  %v947 = vmul.f32 %v800, %v922
  %v948 = vmul.f32 %v801, %v932
  %v949 = vmul.f32 %v802, %v942
  %v951 = vperm.slane %v738, 0
  %952 = vrot.lane.b32.xlu0 %v951, 6
  %v953 = vpop.permute.xlu0 %952
  %v955 = vmul.f32 %v943, %v953
  %v956 = vmul.f32 %v944, %v953
  %v957 = vmul.f32 %v945, %v953
  %v958 = vmul.f32 %v946, %v953
  %v959 = vmul.f32 %v947, %v953
  %v960 = vmul.f32 %v948, %v953
  %v961 = vmul.f32 %v949, %v953
  %v963 = vperm.slane %v739, 0
  %964 = vrot.lane.b32.xlu0 %v963, 6
  %v965 = vpop.permute.xlu0 %964
  %v967 = vadd.f32 %v955, %v965
  %v968 = vadd.f32 %v956, %v965
  %v969 = vadd.f32 %v957, %v965
  %v970 = vadd.f32 %v958, %v965
  %v971 = vadd.f32 %v959, %v965
  %v972 = vadd.f32 %v960, %v965
  %v973 = vadd.f32 %v961, %v965
  %v974 = vld [vmem:[%s7] sm:$0x3f]
  %v975 = vld [vmem:[%s8] sm:$0x1]
  %v977 = vperm.slane %v975, 0
  %986 = vrot.lane.b32.xlu0 %v967, 122
  %v987 = vpop.permute.xlu0 %986
  %988 = vrot.lane.b32.xlu0 %v968, 122
  %v989 = vpop.permute.xlu0 %988
  %990 = vrot.lane.b32.xlu0 %v969, 122
  %v991 = vpop.permute.xlu0 %990
  %992 = vrot.lane.b32.xlu0 %v970, 122
  %v993 = vpop.permute.xlu0 %992
  %994 = vrot.lane.b32.xlu0 %v971, 122
  %v995 = vpop.permute.xlu0 %994
  %996 = vrot.lane.b32.xlu0 %v972, 122
  %v997 = vpop.permute.xlu0 %996
  %998 = vrot.lane.b32.xlu0 %v973, 122
  %v999 = vpop.permute.xlu0 %998
  %v1000 = vsel %vm233, %v987, 0
  %v1002 = vsel %vm233, %v989, 0
  %v1004 = vsel %vm233, %v991, 0
  %v1006 = vsel %vm233, %v993, 0
  %v1008 = vsel %vm233, %v995, 0
  %v1010 = vsel %vm233, %v997, 0
  %v1012 = vsel %vm233, %v999, 0
  %v1015 = vsel %vm442, %v974, 0
  %1017 = vmatpush.msra.mxu0 0.0
  %1018 = vmatpush.msra.mxu0 0.0
  %1019 = vmatpush.msra.mxu0 0.0
  %1020 = vmatpush.msra.mxu0 0.0
  %1021 = vmatpush.msra.mxu0 0.0
  %1022 = vmatpush.msra.mxu0 0.0
  %1023 = vmatpush.msra.mxu0 0.0
  %1024 = vmatpush.msra.mxu0 0.0
  %1025 = vmatpush.msra.mxu0 0.0
  %1026 = vmatpush.msra.mxu0 0.0
  %1027 = vmatpush.msra.mxu0 0.0
  %1028 = vmatpush.msra.mxu0 0.0
  %1029 = vmatpush.msra.mxu0 0.0
  %1030 = vmatpush.msra.mxu0 0.0
  %1031 = vmatpush.msra.mxu0 0.0
  %1032 = vmatpush.msra.mxu0 %v1015
  %1033 = vmatmul.f32.gmra.mxu0 %v1000
  %v1034 = vpop.f32.mrf.mxu0
  %v1035 = vadd.f32 %v977, %v1034
  %1036 = vmatmul.f32.gmra.mxu0 %v1002
  %v1037 = vpop.f32.mrf.mxu0
  %v1038 = vadd.f32 %v977, %v1037
  %1039 = vmatmul.f32.gmra.mxu0 %v1004
  %v1040 = vpop.f32.mrf.mxu0
  %v1041 = vadd.f32 %v977, %v1040
  %1042 = vmatmul.f32.gmra.mxu0 %v1006
  %v1043 = vpop.f32.mrf.mxu0
  %v1044 = vadd.f32 %v977, %v1043
  %1045 = vmatmul.f32.gmra.mxu0 %v1008
  %v1046 = vpop.f32.mrf.mxu0
  %v1047 = vadd.f32 %v977, %v1046
  %1048 = vmatmul.f32.gmra.mxu0 %v1010
  %v1049 = vpop.f32.mrf.mxu0
  %v1050 = vadd.f32 %v977, %v1049
  %1051 = vmatmul.f32.gmra.mxu0 %v1012
  %v1052 = vpop.f32.mrf.mxu0
  %v1053 = vadd.f32 %v977, %v1052
  %1054 = vdwg.mxu0
  %1062 = vrot.lane.b32.xlu0 %v1035, 122
  %v1063 = vpop.permute.xlu0 %1062
  %1064 = vrot.lane.b32.xlu0 %v1038, 122
  %v1065 = vpop.permute.xlu0 %1064
  %1066 = vrot.lane.b32.xlu0 %v1041, 122
  %v1067 = vpop.permute.xlu0 %1066
  %1068 = vrot.lane.b32.xlu0 %v1044, 122
  %v1069 = vpop.permute.xlu0 %1068
  %1070 = vrot.lane.b32.xlu0 %v1047, 122
  %v1071 = vpop.permute.xlu0 %1070
  %1072 = vrot.lane.b32.xlu0 %v1050, 122
  %v1073 = vpop.permute.xlu0 %1072
  %1074 = vrot.lane.b32.xlu0 %v1053, 122
  %v1075 = vpop.permute.xlu0 %1074
  %v1076 = vsel %vm233, %v1035, 0
  %v1078 = vsel %vm233, %v1038, 0
  %v1080 = vsel %vm233, %v1041, 0
  %v1082 = vsel %vm233, %v1044, 0
  %v1084 = vsel %vm233, %v1047, 0
  %v1086 = vsel %vm233, %v1050, 0
  %v1088 = vsel %vm233, %v1053, 0
  %v1090 = vsel %vm233, %v1063, 0
  %v1092 = vsel %vm233, %v1065, 0
  %v1094 = vsel %vm233, %v1067, 0
  %v1096 = vsel %vm233, %v1069, 0
  %v1098 = vsel %vm233, %v1071, 0
  %v1100 = vsel %vm233, %v1073, 0
  %v1102 = vsel %vm233, %v1075, 0
  %1104 = vmatpush.xpose.msra.mxu0 0.0
  %1105 = vmatpush.xpose.msra.mxu0 0.0
  %1106 = vmatpush.xpose.msra.mxu0 0.0
  %1107 = vmatpush.xpose.msra.mxu0 0.0
  %1108 = vmatpush.xpose.msra.mxu0 0.0
  %1109 = vmatpush.xpose.msra.mxu0 0.0
  %1110 = vmatpush.xpose.msra.mxu0 0.0
  %1111 = vmatpush.xpose.msra.mxu0 0.0
  %1112 = vmatpush.xpose.msra.mxu0 0.0
  %1113 = vmatpush.xpose.msra.mxu0 %v1102
  %1114 = vmatpush.xpose.msra.mxu0 %v1100
  %1115 = vmatpush.xpose.msra.mxu0 %v1098
  %1116 = vmatpush.xpose.msra.mxu0 %v1096
  %1117 = vmatpush.xpose.msra.mxu0 %v1094
  %1118 = vmatpush.xpose.msra.mxu0 %v1092
  %1119 = vmatpush.xpose.msra.mxu0 %v1090
  %1120 = vmatmul.f32.gmra.mxu0 %v1076
  %v1121 = vpop.f32.mrf.mxu0
  %v1122 = vadd.f32 0.0, %v1121
  %1123 = vmatmul.f32.gmra.mxu0 %v1078
  %v1124 = vpop.f32.mrf.mxu0
  %v1125 = vadd.f32 0.0, %v1124
  %1126 = vmatmul.f32.gmra.mxu0 %v1080
  %v1127 = vpop.f32.mrf.mxu0
  %v1128 = vadd.f32 0.0, %v1127
  %1129 = vmatmul.f32.gmra.mxu0 %v1082
  %v1130 = vpop.f32.mrf.mxu0
  %v1131 = vadd.f32 0.0, %v1130
  %1132 = vmatmul.f32.gmra.mxu0 %v1084
  %v1133 = vpop.f32.mrf.mxu0
  %v1134 = vadd.f32 0.0, %v1133
  %1135 = vmatmul.f32.gmra.mxu0 %v1086
  %v1136 = vpop.f32.mrf.mxu0
  %v1137 = vadd.f32 0.0, %v1136
  %1138 = vmatmul.f32.gmra.mxu0 %v1088
  %v1139 = vpop.f32.mrf.mxu0
  %v1140 = vadd.f32 0.0, %v1139
  %1141 = vdwg.mxu0
  %v1142 = vsel %vm571, %v1122, -inf
  %1143 = vmax.xlane.f32.xlu0 %v1142
  %v1144 = vpop.xlane.xlu0 %1143
  %v1145 = vsel %vm571, %v1125, -inf
  %1146 = vmax.xlane.f32.xlu0 %v1145
  %v1147 = vpop.xlane.xlu0 %1146
  %v1148 = vsel %vm571, %v1128, -inf
  %1149 = vmax.xlane.f32.xlu0 %v1148
  %v1150 = vpop.xlane.xlu0 %1149
  %v1151 = vsel %vm571, %v1131, -inf
  %1152 = vmax.xlane.f32.xlu0 %v1151
  %v1153 = vpop.xlane.xlu0 %1152
  %v1154 = vsel %vm571, %v1134, -inf
  %1155 = vmax.xlane.f32.xlu0 %v1154
  %v1156 = vpop.xlane.xlu0 %1155
  %v1157 = vsel %vm571, %v1137, -inf
  %1158 = vmax.xlane.f32.xlu0 %v1157
  %v1159 = vpop.xlane.xlu0 %1158
  %v1160 = vsel %vm590, %v1140, -inf
  %1161 = vmax.xlane.f32.xlu0 %v1160
  %v1162 = vpop.xlane.xlu0 %1161
  %v1163 = vsub.f32 %v1122, %v1144
  %v1164 = vsub.f32 %v1125, %v1147
  %v1165 = vsub.f32 %v1128, %v1150
  %v1166 = vsub.f32 %v1131, %v1153
  %v1167 = vsub.f32 %v1134, %v1156
  %v1168 = vsub.f32 %v1137, %v1159
  %v1169 = vsub.f32 %v1140, %v1162
  %v1170 = vmul.f32 %v1163, 1.442695
  %v1171 = vpow.pop %v1170
  %v1172 = vmul.f32 %v1164, 1.442695
  %v1173 = vpow.pop %v1172
  %v1174 = vmul.f32 %v1165, 1.442695
  %v1175 = vpow.pop %v1174
  %v1176 = vmul.f32 %v1166, 1.442695
  %v1177 = vpow.pop %v1176
  %v1178 = vmul.f32 %v1167, 1.442695
  %v1179 = vpow.pop %v1178
  %v1180 = vmul.f32 %v1168, 1.442695
  %v1181 = vpow.pop %v1180
  %v1182 = vmul.f32 %v1169, 1.442695
  %v1183 = vpow.pop %v1182
  %v1184 = vsel %vm571, %v1171, 0.0
  %1185 = vadd.xlane.f32.xlu0 %v1184
  %v1186 = vpop.xlane.xlu0 %1185
  %v1187 = vsel %vm571, %v1173, 0.0
  %1188 = vadd.xlane.f32.xlu0 %v1187
  %v1189 = vpop.xlane.xlu0 %1188
  %v1190 = vsel %vm571, %v1175, 0.0
  %1191 = vadd.xlane.f32.xlu0 %v1190
  %v1192 = vpop.xlane.xlu0 %1191
  %v1193 = vsel %vm571, %v1177, 0.0
  %1194 = vadd.xlane.f32.xlu0 %v1193
  %v1195 = vpop.xlane.xlu0 %1194
  %v1196 = vsel %vm571, %v1179, 0.0
  %1197 = vadd.xlane.f32.xlu0 %v1196
  %v1198 = vpop.xlane.xlu0 %1197
  %v1199 = vsel %vm571, %v1181, 0.0
  %1200 = vadd.xlane.f32.xlu0 %v1199
  %v1201 = vpop.xlane.xlu0 %1200
  %v1202 = vsel %vm590, %v1183, 0.0
  %1203 = vadd.xlane.f32.xlu0 %v1202
  %v1204 = vpop.xlane.xlu0 %1203
  %v1205 = vrcp.pop %v1186
  %v1206 = vrcp.pop %v1189
  %v1207 = vrcp.pop %v1192
  %v1208 = vrcp.pop %v1195
  %v1209 = vrcp.pop %v1198
  %v1210 = vrcp.pop %v1201
  %v1211 = vrcp.pop %v1204
  %v1212 = vmul.f32 %v1171, %v1205
  %v1213 = vmul.f32 %v1173, %v1206
  %v1214 = vmul.f32 %v1175, %v1207
  %v1215 = vmul.f32 %v1177, %v1208
  %v1216 = vmul.f32 %v1179, %v1209
  %v1217 = vmul.f32 %v1181, %v1210
  %v1218 = vmul.f32 %v1183, %v1211
  %1219 = vrot.lane.b32.xlu0 %v1035, 116
  %v1220 = vpop.permute.xlu0 %1219
  %1221 = vrot.lane.b32.xlu0 %v1038, 116
  %v1222 = vpop.permute.xlu0 %1221
  %1223 = vrot.lane.b32.xlu0 %v1041, 116
  %v1224 = vpop.permute.xlu0 %1223
  %1225 = vrot.lane.b32.xlu0 %v1044, 116
  %v1226 = vpop.permute.xlu0 %1225
  %1227 = vrot.lane.b32.xlu0 %v1047, 116
  %v1228 = vpop.permute.xlu0 %1227
  %1229 = vrot.lane.b32.xlu0 %v1050, 116
  %v1230 = vpop.permute.xlu0 %1229
  %1231 = vrot.lane.b32.xlu0 %v1053, 116
  %v1232 = vpop.permute.xlu0 %1231
  %v1240 = vsel %vm571, %v1212, 0
  %v1243 = vsel %vm571, %v1213, 0
  %v1246 = vsel %vm571, %v1214, 0
  %v1249 = vsel %vm571, %v1215, 0
  %v1252 = vsel %vm571, %v1216, 0
  %v1255 = vsel %vm571, %v1217, 0
  %v1258 = vsel %vm571, %v1218, 0
  %v1260 = vsel %vm442, %v1232, 0
  %1262 = vmatpush.msra.mxu0 0.0
  %1263 = vmatpush.msra.mxu0 0.0
  %1264 = vmatpush.msra.mxu0 0.0
  %1265 = vmatpush.msra.mxu0 0.0
  %1266 = vmatpush.msra.mxu0 0.0
  %1267 = vmatpush.msra.mxu0 0.0
  %1268 = vmatpush.msra.mxu0 0.0
  %1269 = vmatpush.msra.mxu0 0.0
  %1270 = vmatpush.msra.mxu0 0.0
  %1271 = vmatpush.msra.mxu0 %v1260
  %1272 = vmatpush.msra.mxu0 %v1230
  %1273 = vmatpush.msra.mxu0 %v1228
  %1274 = vmatpush.msra.mxu0 %v1226
  %1275 = vmatpush.msra.mxu0 %v1224
  %1276 = vmatpush.msra.mxu0 %v1222
  %1277 = vmatpush.msra.mxu0 %v1220
  %1278 = vmatmul.f32.gmra.mxu0 %v1240
  %v1279 = vpop.f32.mrf.mxu0
  %v1280 = vadd.f32 0.0, %v1279
  %1281 = vmatmul.f32.gmra.mxu0 %v1243
  %v1282 = vpop.f32.mrf.mxu0
  %v1283 = vadd.f32 0.0, %v1282
  %1284 = vmatmul.f32.gmra.mxu0 %v1246
  %v1285 = vpop.f32.mrf.mxu0
  %v1286 = vadd.f32 0.0, %v1285
  %1287 = vmatmul.f32.gmra.mxu0 %v1249
  %v1288 = vpop.f32.mrf.mxu0
  %v1289 = vadd.f32 0.0, %v1288
  %1290 = vmatmul.f32.gmra.mxu0 %v1252
  %v1291 = vpop.f32.mrf.mxu0
  %v1292 = vadd.f32 0.0, %v1291
  %1293 = vmatmul.f32.gmra.mxu0 %v1255
  %v1294 = vpop.f32.mrf.mxu0
  %v1295 = vadd.f32 0.0, %v1294
  %1296 = vmatmul.f32.gmra.mxu0 %v1258
  %v1297 = vpop.f32.mrf.mxu0
  %v1298 = vadd.f32 0.0, %v1297
  %1299 = vdwg.mxu0
  %1307 = vrot.lane.b32.xlu0 %v1280, 6
  %v1308 = vpop.permute.xlu0 %1307
  %1309 = vrot.lane.b32.xlu0 %v1283, 6
  %v1310 = vpop.permute.xlu0 %1309
  %1311 = vrot.lane.b32.xlu0 %v1286, 6
  %v1312 = vpop.permute.xlu0 %1311
  %1313 = vrot.lane.b32.xlu0 %v1289, 6
  %v1314 = vpop.permute.xlu0 %1313
  %1315 = vrot.lane.b32.xlu0 %v1292, 6
  %v1316 = vpop.permute.xlu0 %1315
  %1317 = vrot.lane.b32.xlu0 %v1295, 6
  %v1318 = vpop.permute.xlu0 %1317
  %1319 = vrot.lane.b32.xlu0 %v1298, 6
  %v1320 = vpop.permute.xlu0 %1319
  %vm1328 = vcmask 97328
  %1329 = vst.msk [vmem:[#allocation2] sm:$0xff] %vm1328, %v1308
  %1330 = vst.msk [vmem:[#allocation2 + $0x8] sm:$0xff] %vm1328, %v1310
  %1331 = vst.msk [vmem:[#allocation2 + $0x10] sm:$0xff] %vm1328, %v1312
  %1332 = vst.msk [vmem:[#allocation2 + $0x18] sm:$0xff] %vm1328, %v1314
  %1333 = vst.msk [vmem:[#allocation2 + $0x20] sm:$0xff] %vm1328, %v1316
  %1334 = vst.msk [vmem:[#allocation2 + $0x28] sm:$0xff] %vm1328, %v1318
  %vm1335 = vcmask 95280
  %1336 = vst.msk [vmem:[#allocation2 + $0x30] sm:$0x3f] %vm1335, %v1320
  %v1337 = vld [vmem:[#allocation2] sm:$0xff]
  %v1338 = vld [vmem:[#allocation2 + $0x8] sm:$0xff]
  %v1339 = vld [vmem:[#allocation2 + $0x10] sm:$0xff]
  %v1340 = vld [vmem:[#allocation2 + $0x18] sm:$0xff]
  %v1341 = vld [vmem:[#allocation2 + $0x20] sm:$0xff]
  %v1342 = vld [vmem:[#allocation2 + $0x28] sm:$0xff]
  %v1343 = vld [vmem:[#allocation2 + $0x30] sm:$0x3f]
  %v1344 = vld [vmem:[%s9] sm:$0xff]
  %v1345 = vld [vmem:[%s9 + $0x8] sm:$0xf]
  %v1346 = vld [vmem:[%s10] sm:$0x1]
  %v1348 = vperm.slane %v1346, 0
  %v1351 = vsel %vm57, %v1337, 0
  %v1354 = vsel %vm57, %v1338, 0
  %v1357 = vsel %vm57, %v1339, 0
  %v1360 = vsel %vm57, %v1340, 0
  %v1363 = vsel %vm57, %v1341, 0
  %v1366 = vsel %vm57, %v1342, 0
  %v1369 = vsel %vm57, %v1343, 0
  %v1372 = vsel %vm79, %v1345, 0
  %1374 = vmatpush.msra.mxu0 0.0
  %1375 = vmatpush.msra.mxu0 0.0
  %1376 = vmatpush.msra.mxu0 0.0
  %1377 = vmatpush.msra.mxu0 0.0
  %1378 = vmatpush.msra.mxu0 0.0
  %1379 = vmatpush.msra.mxu0 0.0
  %1380 = vmatpush.msra.mxu0 0.0
  %1381 = vmatpush.msra.mxu0 0.0
  %1382 = vmatpush.msra.mxu0 0.0
  %1383 = vmatpush.msra.mxu0 0.0
  %1384 = vmatpush.msra.mxu0 0.0
  %1385 = vmatpush.msra.mxu0 0.0
  %1386 = vmatpush.msra.mxu0 0.0
  %1387 = vmatpush.msra.mxu0 0.0
  %1388 = vmatpush.msra.mxu0 %v1372
  %1389 = vmatpush.msra.mxu0 %v1344
  %1390 = vmatmul.f32.gmra.mxu0 %v1351
  %v1391 = vpop.f32.mrf.mxu0
  %v1392 = vadd.f32 %v1348, %v1391
  %1393 = vmatmul.f32.gmra.mxu0 %v1354
  %v1394 = vpop.f32.mrf.mxu0
  %v1395 = vadd.f32 %v1348, %v1394
  %1396 = vmatmul.f32.gmra.mxu0 %v1357
  %v1397 = vpop.f32.mrf.mxu0
  %v1398 = vadd.f32 %v1348, %v1397
  %1399 = vmatmul.f32.gmra.mxu0 %v1360
  %v1400 = vpop.f32.mrf.mxu0
  %v1401 = vadd.f32 %v1348, %v1400
  %1402 = vmatmul.f32.gmra.mxu0 %v1363
  %v1403 = vpop.f32.mrf.mxu0
  %v1404 = vadd.f32 %v1348, %v1403
  %1405 = vmatmul.f32.gmra.mxu0 %v1366
  %v1406 = vpop.f32.mrf.mxu0
  %v1407 = vadd.f32 %v1348, %v1406
  %1408 = vmatmul.f32.gmra.mxu0 %v1369
  %v1409 = vpop.f32.mrf.mxu0
  %v1410 = vadd.f32 %v1348, %v1409
  %1411 = vdwg.mxu0
  %vm1412 = vcmp.gt.f32.partialorder %v1392, 0.0
  %vm1413 = vcmp.gt.f32.partialorder %v1395, 0.0
  %vm1414 = vcmp.gt.f32.partialorder %v1398, 0.0
  %vm1415 = vcmp.gt.f32.partialorder %v1401, 0.0
  %vm1416 = vcmp.gt.f32.partialorder %v1404, 0.0
  %vm1417 = vcmp.gt.f32.partialorder %v1407, 0.0
  %vm1418 = vcmp.gt.f32.partialorder %v1410, 0.0
  %v1419 = vmin.f32 %v1392, 0.0
  %v1420 = vmin.f32 %v1395, 0.0
  %v1421 = vmin.f32 %v1398, 0.0
  %v1422 = vmin.f32 %v1401, 0.0
  %v1423 = vmin.f32 %v1404, 0.0
  %v1424 = vmin.f32 %v1407, 0.0
  %v1425 = vmin.f32 %v1410, 0.0
  %v1426 = vmul.f32 %v1419, 1.442695
  %v1427 = vpow.pop %v1426
  %v1428 = vmul.f32 %v1420, 1.442695
  %v1429 = vpow.pop %v1428
  %v1430 = vmul.f32 %v1421, 1.442695
  %v1431 = vpow.pop %v1430
  %v1432 = vmul.f32 %v1422, 1.442695
  %v1433 = vpow.pop %v1432
  %v1434 = vmul.f32 %v1423, 1.442695
  %v1435 = vpow.pop %v1434
  %v1436 = vmul.f32 %v1424, 1.442695
  %v1437 = vpow.pop %v1436
  %v1438 = vmul.f32 %v1425, 1.442695
  %v1439 = vpow.pop %v1438
  %v1440 = vsub.f32 %v1427, 1.0
  %v1441 = vsub.f32 %v1429, 1.0
  %v1442 = vsub.f32 %v1431, 1.0
  %v1443 = vsub.f32 %v1433, 1.0
  %v1444 = vsub.f32 %v1435, 1.0
  %v1445 = vsub.f32 %v1437, 1.0
  %v1446 = vsub.f32 %v1439, 1.0
  %v1447 = vsel %vm1412, %v1392, %v1440
  %v1448 = vsel %vm1413, %v1395, %v1441
  %v1449 = vsel %vm1414, %v1398, %v1442
  %v1450 = vsel %vm1415, %v1401, %v1443
  %v1451 = vsel %vm1416, %v1404, %v1444
  %v1452 = vsel %vm1417, %v1407, %v1445
  %v1453 = vsel %vm1418, %v1410, %v1446
  %v1454 = vadd.f32 %v1447, %v101
  %v1455 = vadd.f32 %v1448, %v104
  %v1456 = vadd.f32 %v1449, %v107
  %v1457 = vadd.f32 %v1450, %v110
  %v1458 = vadd.f32 %v1451, %v113
  %v1459 = vadd.f32 %v1452, %v116
  %v1460 = vadd.f32 %v1453, %v119
  %s1461 = scalar_lea.vmem %s3, 16
  %v1462 = vld [vmem:[%s1461] sm:$0xff]
  %v1463 = vld [vmem:[%s1461 + $0x8] sm:$0xf]
  %s1464 = scalar_lea.vmem %s4, 1
  %v1465 = vld [vmem:[%s1464] sm:$0x1]
  %v1467 = vperm.slane %v1465, 0
  %v1470 = vsel %vm57, %v1454, 0
  %v1473 = vsel %vm57, %v1455, 0
  %v1476 = vsel %vm57, %v1456, 0
  %v1479 = vsel %vm57, %v1457, 0
  %v1482 = vsel %vm57, %v1458, 0
  %v1485 = vsel %vm57, %v1459, 0
  %v1488 = vsel %vm57, %v1460, 0
  %v1491 = vsel %vm79, %v1463, 0
  %1493 = vmatpush.msra.mxu0 0.0
  %1494 = vmatpush.msra.mxu0 0.0
  %1495 = vmatpush.msra.mxu0 0.0
  %1496 = vmatpush.msra.mxu0 0.0
  %1497 = vmatpush.msra.mxu0 0.0
  %1498 = vmatpush.msra.mxu0 0.0
  %1499 = vmatpush.msra.mxu0 0.0
  %1500 = vmatpush.msra.mxu0 0.0
  %1501 = vmatpush.msra.mxu0 0.0
  %1502 = vmatpush.msra.mxu0 0.0
  %1503 = vmatpush.msra.mxu0 0.0
  %1504 = vmatpush.msra.mxu0 0.0
  %1505 = vmatpush.msra.mxu0 0.0
  %1506 = vmatpush.msra.mxu0 0.0
  %1507 = vmatpush.msra.mxu0 %v1491
  %1508 = vmatpush.msra.mxu0 %v1462
  %1509 = vmatmul.f32.gmra.mxu0 %v1470
  %v1510 = vpop.f32.mrf.mxu0
  %v1511 = vadd.f32 %v1467, %v1510
  %1512 = vmatmul.f32.gmra.mxu0 %v1473
  %v1513 = vpop.f32.mrf.mxu0
  %v1514 = vadd.f32 %v1467, %v1513
  %1515 = vmatmul.f32.gmra.mxu0 %v1476
  %v1516 = vpop.f32.mrf.mxu0
  %v1517 = vadd.f32 %v1467, %v1516
  %1518 = vmatmul.f32.gmra.mxu0 %v1479
  %v1519 = vpop.f32.mrf.mxu0
  %v1520 = vadd.f32 %v1467, %v1519
  %1521 = vmatmul.f32.gmra.mxu0 %v1482
  %v1522 = vpop.f32.mrf.mxu0
  %v1523 = vadd.f32 %v1467, %v1522
  %1524 = vmatmul.f32.gmra.mxu0 %v1485
  %v1525 = vpop.f32.mrf.mxu0
  %v1526 = vadd.f32 %v1467, %v1525
  %1527 = vmatmul.f32.gmra.mxu0 %v1488
  %v1528 = vpop.f32.mrf.mxu0
  %v1529 = vadd.f32 %v1467, %v1528
  %1530 = vdwg.mxu0
  %vm1531 = vcmp.gt.f32.partialorder %v1511, 0.0
  %vm1532 = vcmp.gt.f32.partialorder %v1514, 0.0
  %vm1533 = vcmp.gt.f32.partialorder %v1517, 0.0
  %vm1534 = vcmp.gt.f32.partialorder %v1520, 0.0
  %vm1535 = vcmp.gt.f32.partialorder %v1523, 0.0
  %vm1536 = vcmp.gt.f32.partialorder %v1526, 0.0
  %vm1537 = vcmp.gt.f32.partialorder %v1529, 0.0
  %v1538 = vmin.f32 %v1511, 0.0
  %v1539 = vmin.f32 %v1514, 0.0
  %v1540 = vmin.f32 %v1517, 0.0
  %v1541 = vmin.f32 %v1520, 0.0
  %v1542 = vmin.f32 %v1523, 0.0
  %v1543 = vmin.f32 %v1526, 0.0
  %v1544 = vmin.f32 %v1529, 0.0
  %v1545 = vmul.f32 %v1538, 1.442695
  %v1546 = vpow.pop %v1545
  %v1547 = vmul.f32 %v1539, 1.442695
  %v1548 = vpow.pop %v1547
  %v1549 = vmul.f32 %v1540, 1.442695
  %v1550 = vpow.pop %v1549
  %v1551 = vmul.f32 %v1541, 1.442695
  %v1552 = vpow.pop %v1551
  %v1553 = vmul.f32 %v1542, 1.442695
  %v1554 = vpow.pop %v1553
  %v1555 = vmul.f32 %v1543, 1.442695
  %v1556 = vpow.pop %v1555
  %v1557 = vmul.f32 %v1544, 1.442695
  %v1558 = vpow.pop %v1557
  %v1559 = vsub.f32 %v1546, 1.0
  %v1560 = vsub.f32 %v1548, 1.0
  %v1561 = vsub.f32 %v1550, 1.0
  %v1562 = vsub.f32 %v1552, 1.0
  %v1563 = vsub.f32 %v1554, 1.0
  %v1564 = vsub.f32 %v1556, 1.0
  %v1565 = vsub.f32 %v1558, 1.0
  %v1566 = vsel %vm1531, %v1511, %v1559
  %v1567 = vsel %vm1532, %v1514, %v1560
  %v1568 = vsel %vm1533, %v1517, %v1561
  %v1569 = vsel %vm1534, %v1520, %v1562
  %v1570 = vsel %vm1535, %v1523, %v1563
  %v1571 = vsel %vm1536, %v1526, %v1564
  %v1572 = vsel %vm1537, %v1529, %v1565
  %s1573 = scalar_lea.vmem %s5, 1
  %v1574 = vld [vmem:[%s1573] sm:$0x1]
  %s1575 = scalar_lea.vmem %s6, 1
  %v1576 = vld [vmem:[%s1575] sm:$0x1]
  %v1577 = vsel %vm233, %v1566, 0.0
  %1578 = vadd.xlane.f32.xlu0 %v1577
  %v1579 = vpop.xlane.xlu0 %1578
  %v1580 = vsel %vm233, %v1567, 0.0
  %1581 = vadd.xlane.f32.xlu0 %v1580
  %v1582 = vpop.xlane.xlu0 %1581
  %v1583 = vsel %vm233, %v1568, 0.0
  %1584 = vadd.xlane.f32.xlu0 %v1583
  %v1585 = vpop.xlane.xlu0 %1584
  %v1586 = vsel %vm233, %v1569, 0.0
  %1587 = vadd.xlane.f32.xlu0 %v1586
  %v1588 = vpop.xlane.xlu0 %1587
  %v1589 = vsel %vm233, %v1570, 0.0
  %1590 = vadd.xlane.f32.xlu0 %v1589
  %v1591 = vpop.xlane.xlu0 %1590
  %v1592 = vsel %vm233, %v1571, 0.0
  %1593 = vadd.xlane.f32.xlu0 %v1592
  %v1594 = vpop.xlane.xlu0 %1593
  %v1595 = vsel %vm252, %v1572, 0.0
  %1596 = vadd.xlane.f32.xlu0 %v1595
  %v1597 = vpop.xlane.xlu0 %1596
  %v1598 = vmul.f32 %v1579, %v262
  %v1599 = vmul.f32 %v1582, %v262
  %v1600 = vmul.f32 %v1585, %v262
  %v1601 = vmul.f32 %v1588, %v262
  %v1602 = vmul.f32 %v1591, %v262
  %v1603 = vmul.f32 %v1594, %v262
  %v1604 = vmul.f32 %v1597, %v262
  %v1605 = vsub.f32 %v1566, %v1598
  %v1606 = vsub.f32 %v1567, %v1599
  %v1607 = vsub.f32 %v1568, %v1600
  %v1608 = vsub.f32 %v1569, %v1601
  %v1609 = vsub.f32 %v1570, %v1602
  %v1610 = vsub.f32 %v1571, %v1603
  %v1611 = vsub.f32 %v1572, %v1604
  %v1612 = vmul.f32 %v1605, %v1605
  %v1613 = vmul.f32 %v1606, %v1606
  %v1614 = vmul.f32 %v1607, %v1607
  %v1615 = vmul.f32 %v1608, %v1608
  %v1616 = vmul.f32 %v1609, %v1609
  %v1617 = vmul.f32 %v1610, %v1610
  %v1618 = vmul.f32 %v1611, %v1611
  %v1619 = vsel %vm233, %v1612, 0.0
  %1620 = vadd.xlane.f32.xlu0 %v1619
  %v1621 = vpop.xlane.xlu0 %1620
  %v1622 = vsel %vm233, %v1613, 0.0
  %1623 = vadd.xlane.f32.xlu0 %v1622
  %v1624 = vpop.xlane.xlu0 %1623
  %v1625 = vsel %vm233, %v1614, 0.0
  %1626 = vadd.xlane.f32.xlu0 %v1625
  %v1627 = vpop.xlane.xlu0 %1626
  %v1628 = vsel %vm233, %v1615, 0.0
  %1629 = vadd.xlane.f32.xlu0 %v1628
  %v1630 = vpop.xlane.xlu0 %1629
  %v1631 = vsel %vm233, %v1616, 0.0
  %1632 = vadd.xlane.f32.xlu0 %v1631
  %v1633 = vpop.xlane.xlu0 %1632
  %v1634 = vsel %vm233, %v1617, 0.0
  %1635 = vadd.xlane.f32.xlu0 %v1634
  %v1636 = vpop.xlane.xlu0 %1635
  %v1637 = vsel %vm252, %v1618, 0.0
  %1638 = vadd.xlane.f32.xlu0 %v1637
  %v1639 = vpop.xlane.xlu0 %1638
  %v1640 = vmul.f32 %v1621, %v262
  %v1641 = vmul.f32 %v1624, %v262
  %v1642 = vmul.f32 %v1627, %v262
  %v1643 = vmul.f32 %v1630, %v262
  %v1644 = vmul.f32 %v1633, %v262
  %v1645 = vmul.f32 %v1636, %v262
  %v1646 = vmul.f32 %v1639, %v262
  %v1647 = vadd.f32 %v1640, 1e-05
  %v1648 = vadd.f32 %v1641, 1e-05
  %v1649 = vadd.f32 %v1642, 1e-05
  %v1650 = vadd.f32 %v1643, 1e-05
  %v1651 = vadd.f32 %v1644, 1e-05
  %v1652 = vadd.f32 %v1645, 1e-05
  %v1653 = vadd.f32 %v1646, 1e-05
  %v1654 = vrsqrt.pop %v1647
  %v1655 = vmul.f32 %v1654, %v1647
  %v1656 = vmul.f32 %v1655, %v1654
  %v1657 = vmul.f32 0.5, %v1656
  %v1658 = vsub.f32 1.5, %v1657
  %v1659 = vmul.f32 %v1654, %v1658
  %vm1660 = vweird.f32 %v1647
  %vm1661 = vweird.f32 %v1654
  %vm1662 = vmor %vm1660, %vm1661
  %v1663 = vsel %vm1662, %v1654, %v1659
  %v1664 = vrsqrt.pop %v1648
  %v1665 = vmul.f32 %v1664, %v1648
  %v1666 = vmul.f32 %v1665, %v1664
  %v1667 = vmul.f32 0.5, %v1666
  %v1668 = vsub.f32 1.5, %v1667
  %v1669 = vmul.f32 %v1664, %v1668
  %vm1670 = vweird.f32 %v1648
  %vm1671 = vweird.f32 %v1664
  %vm1672 = vmor %vm1670, %vm1671
  %v1673 = vsel %vm1672, %v1664, %v1669
  %v1674 = vrsqrt.pop %v1649
  %v1675 = vmul.f32 %v1674, %v1649
  %v1676 = vmul.f32 %v1675, %v1674
  %v1677 = vmul.f32 0.5, %v1676
  %v1678 = vsub.f32 1.5, %v1677
  %v1679 = vmul.f32 %v1674, %v1678
  %vm1680 = vweird.f32 %v1649
  %vm1681 = vweird.f32 %v1674
  %vm1682 = vmor %vm1680, %vm1681
  %v1683 = vsel %vm1682, %v1674, %v1679
  %v1684 = vrsqrt.pop %v1650
  %v1685 = vmul.f32 %v1684, %v1650
  %v1686 = vmul.f32 %v1685, %v1684
  %v1687 = vmul.f32 0.5, %v1686
  %v1688 = vsub.f32 1.5, %v1687
  %v1689 = vmul.f32 %v1684, %v1688
  %vm1690 = vweird.f32 %v1650
  %vm1691 = vweird.f32 %v1684
  %vm1692 = vmor %vm1690, %vm1691
  %v1693 = vsel %vm1692, %v1684, %v1689
  %v1694 = vrsqrt.pop %v1651
  %v1695 = vmul.f32 %v1694, %v1651
  %v1696 = vmul.f32 %v1695, %v1694
  %v1697 = vmul.f32 0.5, %v1696
  %v1698 = vsub.f32 1.5, %v1697
  %v1699 = vmul.f32 %v1694, %v1698
  %vm1700 = vweird.f32 %v1651
  %vm1701 = vweird.f32 %v1694
  %vm1702 = vmor %vm1700, %vm1701
  %v1703 = vsel %vm1702, %v1694, %v1699
  %v1704 = vrsqrt.pop %v1652
  %v1705 = vmul.f32 %v1704, %v1652
  %v1706 = vmul.f32 %v1705, %v1704
  %v1707 = vmul.f32 0.5, %v1706
  %v1708 = vsub.f32 1.5, %v1707
  %v1709 = vmul.f32 %v1704, %v1708
  %vm1710 = vweird.f32 %v1652
  %vm1711 = vweird.f32 %v1704
  %vm1712 = vmor %vm1710, %vm1711
  %v1713 = vsel %vm1712, %v1704, %v1709
  %v1714 = vrsqrt.pop %v1653
  %v1715 = vmul.f32 %v1714, %v1653
  %v1716 = vmul.f32 %v1715, %v1714
  %v1717 = vmul.f32 0.5, %v1716
  %v1718 = vsub.f32 1.5, %v1717
  %v1719 = vmul.f32 %v1714, %v1718
  %vm1720 = vweird.f32 %v1653
  %vm1721 = vweird.f32 %v1714
  %vm1722 = vmor %vm1720, %vm1721
  %v1723 = vsel %vm1722, %v1714, %v1719
  %v1724 = vmul.f32 %v1605, %v1663
  %v1725 = vmul.f32 %v1606, %v1673
  %v1726 = vmul.f32 %v1607, %v1683
  %v1727 = vmul.f32 %v1608, %v1693
  %v1728 = vmul.f32 %v1609, %v1703
  %v1729 = vmul.f32 %v1610, %v1713
  %v1730 = vmul.f32 %v1611, %v1723
  %v1732 = vperm.slane %v1574, 0
  %v1734 = vmul.f32 %v1724, %v1732
  %v1735 = vmul.f32 %v1725, %v1732
  %v1736 = vmul.f32 %v1726, %v1732
  %v1737 = vmul.f32 %v1727, %v1732
  %v1738 = vmul.f32 %v1728, %v1732
  %v1739 = vmul.f32 %v1729, %v1732
  %v1740 = vmul.f32 %v1730, %v1732
  %v1742 = vperm.slane %v1576, 0
  %v1744 = vadd.f32 %v1734, %v1742
  %v1745 = vadd.f32 %v1735, %v1742
  %v1746 = vadd.f32 %v1736, %v1742
  %v1747 = vadd.f32 %v1737, %v1742
  %v1748 = vadd.f32 %v1738, %v1742
  %v1749 = vadd.f32 %v1739, %v1742
  %v1750 = vadd.f32 %v1740, %v1742
  %s1751 = scalar_lea.vmem %s7, 8
  %v1752 = vld [vmem:[%s1751] sm:$0x3f]
  %s1753 = scalar_lea.vmem %s8, 1
  %v1754 = vld [vmem:[%s1753] sm:$0x1]
  %v1756 = vperm.slane %v1754, 0
  %v1759 = vsel %vm233, %v1744, 0
  %v1762 = vsel %vm233, %v1745, 0
  %v1765 = vsel %vm233, %v1746, 0
  %v1768 = vsel %vm233, %v1747, 0
  %v1771 = vsel %vm233, %v1748, 0
  %v1774 = vsel %vm233, %v1749, 0
  %v1777 = vsel %vm233, %v1750, 0
  %v1780 = vsel %vm442, %v1752, 0
  %1782 = vmatpush.msra.mxu0 0.0
  %1783 = vmatpush.msra.mxu0 0.0
  %1784 = vmatpush.msra.mxu0 0.0
  %1785 = vmatpush.msra.mxu0 0.0
  %1786 = vmatpush.msra.mxu0 0.0
  %1787 = vmatpush.msra.mxu0 0.0
  %1788 = vmatpush.msra.mxu0 0.0
  %1789 = vmatpush.msra.mxu0 0.0
  %1790 = vmatpush.msra.mxu0 0.0
  %1791 = vmatpush.msra.mxu0 0.0
  %1792 = vmatpush.msra.mxu0 0.0
  %1793 = vmatpush.msra.mxu0 0.0
  %1794 = vmatpush.msra.mxu0 0.0
  %1795 = vmatpush.msra.mxu0 0.0
  %1796 = vmatpush.msra.mxu0 0.0
  %1797 = vmatpush.msra.mxu0 %v1780
  %1798 = vmatmul.f32.gmra.mxu0 %v1759
  %v1799 = vpop.f32.mrf.mxu0
  %v1800 = vadd.f32 %v1756, %v1799
  %1801 = vmatmul.f32.gmra.mxu0 %v1762
  %v1802 = vpop.f32.mrf.mxu0
  %v1803 = vadd.f32 %v1756, %v1802
  %1804 = vmatmul.f32.gmra.mxu0 %v1765
  %v1805 = vpop.f32.mrf.mxu0
  %v1806 = vadd.f32 %v1756, %v1805
  %1807 = vmatmul.f32.gmra.mxu0 %v1768
  %v1808 = vpop.f32.mrf.mxu0
  %v1809 = vadd.f32 %v1756, %v1808
  %1810 = vmatmul.f32.gmra.mxu0 %v1771
  %v1811 = vpop.f32.mrf.mxu0
  %v1812 = vadd.f32 %v1756, %v1811
  %1813 = vmatmul.f32.gmra.mxu0 %v1774
  %v1814 = vpop.f32.mrf.mxu0
  %v1815 = vadd.f32 %v1756, %v1814
  %1816 = vmatmul.f32.gmra.mxu0 %v1777
  %v1817 = vpop.f32.mrf.mxu0
  %v1818 = vadd.f32 %v1756, %v1817
  %1819 = vdwg.mxu0
  %1827 = vrot.lane.b32.xlu0 %v1800, 122
  %v1828 = vpop.permute.xlu0 %1827
  %1829 = vrot.lane.b32.xlu0 %v1803, 122
  %v1830 = vpop.permute.xlu0 %1829
  %1831 = vrot.lane.b32.xlu0 %v1806, 122
  %v1832 = vpop.permute.xlu0 %1831
  %1833 = vrot.lane.b32.xlu0 %v1809, 122
  %v1834 = vpop.permute.xlu0 %1833
  %1835 = vrot.lane.b32.xlu0 %v1812, 122
  %v1836 = vpop.permute.xlu0 %1835
  %1837 = vrot.lane.b32.xlu0 %v1815, 122
  %v1838 = vpop.permute.xlu0 %1837
  %1839 = vrot.lane.b32.xlu0 %v1818, 122
  %v1840 = vpop.permute.xlu0 %1839
  %v1841 = vsel %vm233, %v1800, 0
  %v1843 = vsel %vm233, %v1803, 0
  %v1845 = vsel %vm233, %v1806, 0
  %v1847 = vsel %vm233, %v1809, 0
  %v1849 = vsel %vm233, %v1812, 0
  %v1851 = vsel %vm233, %v1815, 0
  %v1853 = vsel %vm233, %v1818, 0
  %v1855 = vsel %vm233, %v1828, 0
  %v1857 = vsel %vm233, %v1830, 0
  %v1859 = vsel %vm233, %v1832, 0
  %v1861 = vsel %vm233, %v1834, 0
  %v1863 = vsel %vm233, %v1836, 0
  %v1865 = vsel %vm233, %v1838, 0
  %v1867 = vsel %vm233, %v1840, 0
  %1869 = vmatpush.xpose.msra.mxu0 0.0
  %1870 = vmatpush.xpose.msra.mxu0 0.0
  %1871 = vmatpush.xpose.msra.mxu0 0.0
  %1872 = vmatpush.xpose.msra.mxu0 0.0
  %1873 = vmatpush.xpose.msra.mxu0 0.0
  %1874 = vmatpush.xpose.msra.mxu0 0.0
  %1875 = vmatpush.xpose.msra.mxu0 0.0
  %1876 = vmatpush.xpose.msra.mxu0 0.0
  %1877 = vmatpush.xpose.msra.mxu0 0.0
  %1878 = vmatpush.xpose.msra.mxu0 %v1867
  %1879 = vmatpush.xpose.msra.mxu0 %v1865
  %1880 = vmatpush.xpose.msra.mxu0 %v1863
  %1881 = vmatpush.xpose.msra.mxu0 %v1861
  %1882 = vmatpush.xpose.msra.mxu0 %v1859
  %1883 = vmatpush.xpose.msra.mxu0 %v1857
  %1884 = vmatpush.xpose.msra.mxu0 %v1855
  %1885 = vmatmul.f32.gmra.mxu0 %v1841
  %v1886 = vpop.f32.mrf.mxu0
  %v1887 = vadd.f32 0.0, %v1886
  %1888 = vmatmul.f32.gmra.mxu0 %v1843
  %v1889 = vpop.f32.mrf.mxu0
  %v1890 = vadd.f32 0.0, %v1889
  %1891 = vmatmul.f32.gmra.mxu0 %v1845
  %v1892 = vpop.f32.mrf.mxu0
  %v1893 = vadd.f32 0.0, %v1892
  %1894 = vmatmul.f32.gmra.mxu0 %v1847
  %v1895 = vpop.f32.mrf.mxu0
  %v1896 = vadd.f32 0.0, %v1895
  %1897 = vmatmul.f32.gmra.mxu0 %v1849
  %v1898 = vpop.f32.mrf.mxu0
  %v1899 = vadd.f32 0.0, %v1898
  %1900 = vmatmul.f32.gmra.mxu0 %v1851
  %v1901 = vpop.f32.mrf.mxu0
  %v1902 = vadd.f32 0.0, %v1901
  %1903 = vmatmul.f32.gmra.mxu0 %v1853
  %v1904 = vpop.f32.mrf.mxu0
  %v1905 = vadd.f32 0.0, %v1904
  %1906 = vdwg.mxu0
  %v1907 = vsel %vm571, %v1887, -inf
  %1908 = vmax.xlane.f32.xlu0 %v1907
  %v1909 = vpop.xlane.xlu0 %1908
  %v1910 = vsel %vm571, %v1890, -inf
  %1911 = vmax.xlane.f32.xlu0 %v1910
  %v1912 = vpop.xlane.xlu0 %1911
  %v1913 = vsel %vm571, %v1893, -inf
  %1914 = vmax.xlane.f32.xlu0 %v1913
  %v1915 = vpop.xlane.xlu0 %1914
  %v1916 = vsel %vm571, %v1896, -inf
  %1917 = vmax.xlane.f32.xlu0 %v1916
  %v1918 = vpop.xlane.xlu0 %1917
  %v1919 = vsel %vm571, %v1899, -inf
  %1920 = vmax.xlane.f32.xlu0 %v1919
  %v1921 = vpop.xlane.xlu0 %1920
  %v1922 = vsel %vm571, %v1902, -inf
  %1923 = vmax.xlane.f32.xlu0 %v1922
  %v1924 = vpop.xlane.xlu0 %1923
  %v1925 = vsel %vm590, %v1905, -inf
  %1926 = vmax.xlane.f32.xlu0 %v1925
  %v1927 = vpop.xlane.xlu0 %1926
  %v1928 = vsub.f32 %v1887, %v1909
  %v1929 = vsub.f32 %v1890, %v1912
  %v1930 = vsub.f32 %v1893, %v1915
  %v1931 = vsub.f32 %v1896, %v1918
  %v1932 = vsub.f32 %v1899, %v1921
  %v1933 = vsub.f32 %v1902, %v1924
  %v1934 = vsub.f32 %v1905, %v1927
  %v1935 = vmul.f32 %v1928, 1.442695
  %v1936 = vpow.pop %v1935
  %v1937 = vmul.f32 %v1929, 1.442695
  %v1938 = vpow.pop %v1937
  %v1939 = vmul.f32 %v1930, 1.442695
  %v1940 = vpow.pop %v1939
  %v1941 = vmul.f32 %v1931, 1.442695
  %v1942 = vpow.pop %v1941
  %v1943 = vmul.f32 %v1932, 1.442695
  %v1944 = vpow.pop %v1943
  %v1945 = vmul.f32 %v1933, 1.442695
  %v1946 = vpow.pop %v1945
  %v1947 = vmul.f32 %v1934, 1.442695
  %v1948 = vpow.pop %v1947
  %v1949 = vsel %vm571, %v1936, 0.0
  %1950 = vadd.xlane.f32.xlu0 %v1949
  %v1951 = vpop.xlane.xlu0 %1950
  %v1952 = vsel %vm571, %v1938, 0.0
  %1953 = vadd.xlane.f32.xlu0 %v1952
  %v1954 = vpop.xlane.xlu0 %1953
  %v1955 = vsel %vm571, %v1940, 0.0
  %1956 = vadd.xlane.f32.xlu0 %v1955
  %v1957 = vpop.xlane.xlu0 %1956
  %v1958 = vsel %vm571, %v1942, 0.0
  %1959 = vadd.xlane.f32.xlu0 %v1958
  %v1960 = vpop.xlane.xlu0 %1959
  %v1961 = vsel %vm571, %v1944, 0.0
  %1962 = vadd.xlane.f32.xlu0 %v1961
  %v1963 = vpop.xlane.xlu0 %1962
  %v1964 = vsel %vm571, %v1946, 0.0
  %1965 = vadd.xlane.f32.xlu0 %v1964
  %v1966 = vpop.xlane.xlu0 %1965
  %v1967 = vsel %vm590, %v1948, 0.0
  %1968 = vadd.xlane.f32.xlu0 %v1967
  %v1969 = vpop.xlane.xlu0 %1968
  %v1970 = vrcp.pop %v1951
  %v1971 = vrcp.pop %v1954
  %v1972 = vrcp.pop %v1957
  %v1973 = vrcp.pop %v1960
  %v1974 = vrcp.pop %v1963
  %v1975 = vrcp.pop %v1966
  %v1976 = vrcp.pop %v1969
  %v1977 = vmul.f32 %v1936, %v1970
  %v1978 = vmul.f32 %v1938, %v1971
  %v1979 = vmul.f32 %v1940, %v1972
  %v1980 = vmul.f32 %v1942, %v1973
  %v1981 = vmul.f32 %v1944, %v1974
  %v1982 = vmul.f32 %v1946, %v1975
  %v1983 = vmul.f32 %v1948, %v1976
  %1984 = vrot.lane.b32.xlu0 %v1800, 116
  %v1985 = vpop.permute.xlu0 %1984
  %1986 = vrot.lane.b32.xlu0 %v1803, 116
  %v1987 = vpop.permute.xlu0 %1986
  %1988 = vrot.lane.b32.xlu0 %v1806, 116
  %v1989 = vpop.permute.xlu0 %1988
  %1990 = vrot.lane.b32.xlu0 %v1809, 116
  %v1991 = vpop.permute.xlu0 %1990
  %1992 = vrot.lane.b32.xlu0 %v1812, 116
  %v1993 = vpop.permute.xlu0 %1992
  %1994 = vrot.lane.b32.xlu0 %v1815, 116
  %v1995 = vpop.permute.xlu0 %1994
  %1996 = vrot.lane.b32.xlu0 %v1818, 116
  %v1997 = vpop.permute.xlu0 %1996
  %v2005 = vsel %vm571, %v1977, 0
  %v2008 = vsel %vm571, %v1978, 0
  %v2011 = vsel %vm571, %v1979, 0
  %v2014 = vsel %vm571, %v1980, 0
  %v2017 = vsel %vm571, %v1981, 0
  %v2020 = vsel %vm571, %v1982, 0
  %v2023 = vsel %vm571, %v1983, 0
  %v2025 = vsel %vm442, %v1997, 0
  %2027 = vmatpush.msra.mxu0 0.0
  %2028 = vmatpush.msra.mxu0 0.0
  %2029 = vmatpush.msra.mxu0 0.0
  %2030 = vmatpush.msra.mxu0 0.0
  %2031 = vmatpush.msra.mxu0 0.0
  %2032 = vmatpush.msra.mxu0 0.0
  %2033 = vmatpush.msra.mxu0 0.0
  %2034 = vmatpush.msra.mxu0 0.0
  %2035 = vmatpush.msra.mxu0 0.0
  %2036 = vmatpush.msra.mxu0 %v2025
  %2037 = vmatpush.msra.mxu0 %v1995
  %2038 = vmatpush.msra.mxu0 %v1993
  %2039 = vmatpush.msra.mxu0 %v1991
  %2040 = vmatpush.msra.mxu0 %v1989
  %2041 = vmatpush.msra.mxu0 %v1987
  %2042 = vmatpush.msra.mxu0 %v1985
  %2043 = vmatmul.f32.gmra.mxu0 %v2005
  %v2044 = vpop.f32.mrf.mxu0
  %v2045 = vadd.f32 0.0, %v2044
  %2046 = vmatmul.f32.gmra.mxu0 %v2008
  %v2047 = vpop.f32.mrf.mxu0
  %v2048 = vadd.f32 0.0, %v2047
  %2049 = vmatmul.f32.gmra.mxu0 %v2011
  %v2050 = vpop.f32.mrf.mxu0
  %v2051 = vadd.f32 0.0, %v2050
  %2052 = vmatmul.f32.gmra.mxu0 %v2014
  %v2053 = vpop.f32.mrf.mxu0
  %v2054 = vadd.f32 0.0, %v2053
  %2055 = vmatmul.f32.gmra.mxu0 %v2017
  %v2056 = vpop.f32.mrf.mxu0
  %v2057 = vadd.f32 0.0, %v2056
  %2058 = vmatmul.f32.gmra.mxu0 %v2020
  %v2059 = vpop.f32.mrf.mxu0
  %v2060 = vadd.f32 0.0, %v2059
  %2061 = vmatmul.f32.gmra.mxu0 %v2023
  %v2062 = vpop.f32.mrf.mxu0
  %v2063 = vadd.f32 0.0, %v2062
  %2064 = vdwg.mxu0
  %2065 = vst.msk [vmem:[#allocation2] sm:$0xff] %vm233, %v2045
  %2066 = vst.msk [vmem:[#allocation2 + $0x8] sm:$0xff] %vm233, %v2048
  %2067 = vst.msk [vmem:[#allocation2 + $0x10] sm:$0xff] %vm233, %v2051
  %2068 = vst.msk [vmem:[#allocation2 + $0x18] sm:$0xff] %vm233, %v2054
  %2069 = vst.msk [vmem:[#allocation2 + $0x20] sm:$0xff] %vm233, %v2057
  %2070 = vst.msk [vmem:[#allocation2 + $0x28] sm:$0xff] %vm233, %v2060
  %2071 = vst.msk [vmem:[#allocation2 + $0x30] sm:$0x3f] %vm252, %v2063
  %v2072 = vld [vmem:[%s1573] sm:$0x1]
  %v2073 = vld [vmem:[%s1575] sm:$0x1]
  %2081 = vrot.lane.b32.xlu0 %v1566, 122
  %v2082 = vpop.permute.xlu0 %2081
  %2083 = vrot.lane.b32.xlu0 %v1567, 122
  %v2084 = vpop.permute.xlu0 %2083
  %2085 = vrot.lane.b32.xlu0 %v1568, 122
  %v2086 = vpop.permute.xlu0 %2085
  %2087 = vrot.lane.b32.xlu0 %v1569, 122
  %v2088 = vpop.permute.xlu0 %2087
  %2089 = vrot.lane.b32.xlu0 %v1570, 122
  %v2090 = vpop.permute.xlu0 %2089
  %2091 = vrot.lane.b32.xlu0 %v1571, 122
  %v2092 = vpop.permute.xlu0 %2091
  %2093 = vrot.lane.b32.xlu0 %v1572, 122
  %v2094 = vpop.permute.xlu0 %2093
  %v2102 = vsel %vm233, %v2082, 0.0
  %2103 = vadd.xlane.f32.xlu0 %v2102
  %v2104 = vpop.xlane.xlu0 %2103
  %v2105 = vsel %vm233, %v2084, 0.0
  %2106 = vadd.xlane.f32.xlu0 %v2105
  %v2107 = vpop.xlane.xlu0 %2106
  %v2108 = vsel %vm233, %v2086, 0.0
  %2109 = vadd.xlane.f32.xlu0 %v2108
  %v2110 = vpop.xlane.xlu0 %2109
  %v2111 = vsel %vm233, %v2088, 0.0
  %2112 = vadd.xlane.f32.xlu0 %v2111
  %v2113 = vpop.xlane.xlu0 %2112
  %v2114 = vsel %vm233, %v2090, 0.0
  %2115 = vadd.xlane.f32.xlu0 %v2114
  %v2116 = vpop.xlane.xlu0 %2115
  %v2117 = vsel %vm233, %v2092, 0.0
  %2118 = vadd.xlane.f32.xlu0 %v2117
  %v2119 = vpop.xlane.xlu0 %2118
  %v2120 = vsel %vm252, %v2094, 0.0
  %2121 = vadd.xlane.f32.xlu0 %v2120
  %v2122 = vpop.xlane.xlu0 %2121
  %v2123 = vmul.f32 %v2104, %v262
  %v2124 = vmul.f32 %v2107, %v262
  %v2125 = vmul.f32 %v2110, %v262
  %v2126 = vmul.f32 %v2113, %v262
  %v2127 = vmul.f32 %v2116, %v262
  %v2128 = vmul.f32 %v2119, %v262
  %v2129 = vmul.f32 %v2122, %v262
  %v2130 = vsub.f32 %v1566, %v2123
  %v2131 = vsub.f32 %v1567, %v2124
  %v2132 = vsub.f32 %v1568, %v2125
  %v2133 = vsub.f32 %v1569, %v2126
  %v2134 = vsub.f32 %v1570, %v2127
  %v2135 = vsub.f32 %v1571, %v2128
  %v2136 = vsub.f32 %v1572, %v2129
  %v2137 = vmul.f32 %v2130, %v2130
  %v2138 = vmul.f32 %v2131, %v2131
  %v2139 = vmul.f32 %v2132, %v2132
  %v2140 = vmul.f32 %v2133, %v2133
  %v2141 = vmul.f32 %v2134, %v2134
  %v2142 = vmul.f32 %v2135, %v2135
  %v2143 = vmul.f32 %v2136, %v2136
  %2151 = vrot.lane.b32.xlu0 %v2137, 122
  %v2152 = vpop.permute.xlu0 %2151
  %2153 = vrot.lane.b32.xlu0 %v2138, 122
  %v2154 = vpop.permute.xlu0 %2153
  %2155 = vrot.lane.b32.xlu0 %v2139, 122
  %v2156 = vpop.permute.xlu0 %2155
  %2157 = vrot.lane.b32.xlu0 %v2140, 122
  %v2158 = vpop.permute.xlu0 %2157
  %2159 = vrot.lane.b32.xlu0 %v2141, 122
  %v2160 = vpop.permute.xlu0 %2159
  %2161 = vrot.lane.b32.xlu0 %v2142, 122
  %v2162 = vpop.permute.xlu0 %2161
  %2163 = vrot.lane.b32.xlu0 %v2143, 122
  %v2164 = vpop.permute.xlu0 %2163
  %v2172 = vsel %vm233, %v2152, 0.0
  %2173 = vadd.xlane.f32.xlu0 %v2172
  %v2174 = vpop.xlane.xlu0 %2173
  %v2175 = vsel %vm233, %v2154, 0.0
  %2176 = vadd.xlane.f32.xlu0 %v2175
  %v2177 = vpop.xlane.xlu0 %2176
  %v2178 = vsel %vm233, %v2156, 0.0
  %2179 = vadd.xlane.f32.xlu0 %v2178
  %v2180 = vpop.xlane.xlu0 %2179
  %v2181 = vsel %vm233, %v2158, 0.0
  %2182 = vadd.xlane.f32.xlu0 %v2181
  %v2183 = vpop.xlane.xlu0 %2182
  %v2184 = vsel %vm233, %v2160, 0.0
  %2185 = vadd.xlane.f32.xlu0 %v2184
  %v2186 = vpop.xlane.xlu0 %2185
  %v2187 = vsel %vm233, %v2162, 0.0
  %2188 = vadd.xlane.f32.xlu0 %v2187
  %v2189 = vpop.xlane.xlu0 %2188
  %v2190 = vsel %vm252, %v2164, 0.0
  %2191 = vadd.xlane.f32.xlu0 %v2190
  %v2192 = vpop.xlane.xlu0 %2191
  %v2193 = vmul.f32 %v2174, %v262
  %v2194 = vmul.f32 %v2177, %v262
  %v2195 = vmul.f32 %v2180, %v262
  %v2196 = vmul.f32 %v2183, %v262
  %v2197 = vmul.f32 %v2186, %v262
  %v2198 = vmul.f32 %v2189, %v262
  %v2199 = vmul.f32 %v2192, %v262
  %v2200 = vadd.f32 %v2193, 1e-05
  %v2201 = vadd.f32 %v2194, 1e-05
  %v2202 = vadd.f32 %v2195, 1e-05
  %v2203 = vadd.f32 %v2196, 1e-05
  %v2204 = vadd.f32 %v2197, 1e-05
  %v2205 = vadd.f32 %v2198, 1e-05
  %v2206 = vadd.f32 %v2199, 1e-05
  %v2207 = vrsqrt.pop %v2200
  %v2208 = vmul.f32 %v2207, %v2200
  %v2209 = vmul.f32 %v2208, %v2207
  %v2210 = vmul.f32 0.5, %v2209
  %v2211 = vsub.f32 1.5, %v2210
  %v2212 = vmul.f32 %v2207, %v2211
  %vm2213 = vweird.f32 %v2200
  %vm2214 = vweird.f32 %v2207
  %vm2215 = vmor %vm2213, %vm2214
  %v2216 = vsel %vm2215, %v2207, %v2212
  %v2217 = vrsqrt.pop %v2201
  %v2218 = vmul.f32 %v2217, %v2201
  %v2219 = vmul.f32 %v2218, %v2217
  %v2220 = vmul.f32 0.5, %v2219
  %v2221 = vsub.f32 1.5, %v2220
  %v2222 = vmul.f32 %v2217, %v2221
  %vm2223 = vweird.f32 %v2201
  %vm2224 = vweird.f32 %v2217
  %vm2225 = vmor %vm2223, %vm2224
  %v2226 = vsel %vm2225, %v2217, %v2222
  %v2227 = vrsqrt.pop %v2202
  %v2228 = vmul.f32 %v2227, %v2202
  %v2229 = vmul.f32 %v2228, %v2227
  %v2230 = vmul.f32 0.5, %v2229
  %v2231 = vsub.f32 1.5, %v2230
  %v2232 = vmul.f32 %v2227, %v2231
  %vm2233 = vweird.f32 %v2202
  %vm2234 = vweird.f32 %v2227
  %vm2235 = vmor %vm2233, %vm2234
  %v2236 = vsel %vm2235, %v2227, %v2232
  %v2237 = vrsqrt.pop %v2203
  %v2238 = vmul.f32 %v2237, %v2203
  %v2239 = vmul.f32 %v2238, %v2237
  %v2240 = vmul.f32 0.5, %v2239
  %v2241 = vsub.f32 1.5, %v2240
  %v2242 = vmul.f32 %v2237, %v2241
  %vm2243 = vweird.f32 %v2203
  %vm2244 = vweird.f32 %v2237
  %vm2245 = vmor %vm2243, %vm2244
  %v2246 = vsel %vm2245, %v2237, %v2242
  %v2247 = vrsqrt.pop %v2204
  %v2248 = vmul.f32 %v2247, %v2204
  %v2249 = vmul.f32 %v2248, %v2247
  %v2250 = vmul.f32 0.5, %v2249
  %v2251 = vsub.f32 1.5, %v2250
  %v2252 = vmul.f32 %v2247, %v2251
  %vm2253 = vweird.f32 %v2204
  %vm2254 = vweird.f32 %v2247
  %vm2255 = vmor %vm2253, %vm2254
  %v2256 = vsel %vm2255, %v2247, %v2252
  %v2257 = vrsqrt.pop %v2205
  %v2258 = vmul.f32 %v2257, %v2205
  %v2259 = vmul.f32 %v2258, %v2257
  %v2260 = vmul.f32 0.5, %v2259
  %v2261 = vsub.f32 1.5, %v2260
  %v2262 = vmul.f32 %v2257, %v2261
  %vm2263 = vweird.f32 %v2205
  %vm2264 = vweird.f32 %v2257
  %vm2265 = vmor %vm2263, %vm2264
  %v2266 = vsel %vm2265, %v2257, %v2262
  %v2267 = vrsqrt.pop %v2206
  %v2268 = vmul.f32 %v2267, %v2206
  %v2269 = vmul.f32 %v2268, %v2267
  %v2270 = vmul.f32 0.5, %v2269
  %v2271 = vsub.f32 1.5, %v2270
  %v2272 = vmul.f32 %v2267, %v2271
  %vm2273 = vweird.f32 %v2206
  %vm2274 = vweird.f32 %v2267
  %vm2275 = vmor %vm2273, %vm2274
  %v2276 = vsel %vm2275, %v2267, %v2272
  %v2277 = vmul.f32 %v2130, %v2216
  %v2278 = vmul.f32 %v2131, %v2226
  %v2279 = vmul.f32 %v2132, %v2236
  %v2280 = vmul.f32 %v2133, %v2246
  %v2281 = vmul.f32 %v2134, %v2256
  %v2282 = vmul.f32 %v2135, %v2266
  %v2283 = vmul.f32 %v2136, %v2276
  %v2285 = vperm.slane %v2072, 0
  %2286 = vrot.lane.b32.xlu0 %v2285, 6
  %v2287 = vpop.permute.xlu0 %2286
  %v2289 = vmul.f32 %v2277, %v2287
  %v2290 = vmul.f32 %v2278, %v2287
  %v2291 = vmul.f32 %v2279, %v2287
  %v2292 = vmul.f32 %v2280, %v2287
  %v2293 = vmul.f32 %v2281, %v2287
  %v2294 = vmul.f32 %v2282, %v2287
  %v2295 = vmul.f32 %v2283, %v2287
  %v2297 = vperm.slane %v2073, 0
  %2298 = vrot.lane.b32.xlu0 %v2297, 6
  %v2299 = vpop.permute.xlu0 %2298
  %v2301 = vadd.f32 %v2289, %v2299
  %v2302 = vadd.f32 %v2290, %v2299
  %v2303 = vadd.f32 %v2291, %v2299
  %v2304 = vadd.f32 %v2292, %v2299
  %v2305 = vadd.f32 %v2293, %v2299
  %v2306 = vadd.f32 %v2294, %v2299
  %v2307 = vadd.f32 %v2295, %v2299
  %v2308 = vld [vmem:[%s1751] sm:$0x3f]
  %v2309 = vld [vmem:[%s1753] sm:$0x1]
  %v2311 = vperm.slane %v2309, 0
  %2320 = vrot.lane.b32.xlu0 %v2301, 122
  %v2321 = vpop.permute.xlu0 %2320
  %2322 = vrot.lane.b32.xlu0 %v2302, 122
  %v2323 = vpop.permute.xlu0 %2322
  %2324 = vrot.lane.b32.xlu0 %v2303, 122
  %v2325 = vpop.permute.xlu0 %2324
  %2326 = vrot.lane.b32.xlu0 %v2304, 122
  %v2327 = vpop.permute.xlu0 %2326
  %2328 = vrot.lane.b32.xlu0 %v2305, 122
  %v2329 = vpop.permute.xlu0 %2328
  %2330 = vrot.lane.b32.xlu0 %v2306, 122
  %v2331 = vpop.permute.xlu0 %2330
  %2332 = vrot.lane.b32.xlu0 %v2307, 122
  %v2333 = vpop.permute.xlu0 %2332
  %v2334 = vsel %vm233, %v2321, 0
  %v2336 = vsel %vm233, %v2323, 0
  %v2338 = vsel %vm233, %v2325, 0
  %v2340 = vsel %vm233, %v2327, 0
  %v2342 = vsel %vm233, %v2329, 0
  %v2344 = vsel %vm233, %v2331, 0
  %v2346 = vsel %vm233, %v2333, 0
  %v2349 = vsel %vm442, %v2308, 0
  %2351 = vmatpush.msra.mxu0 0.0
  %2352 = vmatpush.msra.mxu0 0.0
  %2353 = vmatpush.msra.mxu0 0.0
  %2354 = vmatpush.msra.mxu0 0.0
  %2355 = vmatpush.msra.mxu0 0.0
  %2356 = vmatpush.msra.mxu0 0.0
  %2357 = vmatpush.msra.mxu0 0.0
  %2358 = vmatpush.msra.mxu0 0.0
  %2359 = vmatpush.msra.mxu0 0.0
  %2360 = vmatpush.msra.mxu0 0.0
  %2361 = vmatpush.msra.mxu0 0.0
  %2362 = vmatpush.msra.mxu0 0.0
  %2363 = vmatpush.msra.mxu0 0.0
  %2364 = vmatpush.msra.mxu0 0.0
  %2365 = vmatpush.msra.mxu0 0.0
  %2366 = vmatpush.msra.mxu0 %v2349
  %2367 = vmatmul.f32.gmra.mxu0 %v2334
  %v2368 = vpop.f32.mrf.mxu0
  %v2369 = vadd.f32 %v2311, %v2368
  %2370 = vmatmul.f32.gmra.mxu0 %v2336
  %v2371 = vpop.f32.mrf.mxu0
  %v2372 = vadd.f32 %v2311, %v2371
  %2373 = vmatmul.f32.gmra.mxu0 %v2338
  %v2374 = vpop.f32.mrf.mxu0
  %v2375 = vadd.f32 %v2311, %v2374
  %2376 = vmatmul.f32.gmra.mxu0 %v2340
  %v2377 = vpop.f32.mrf.mxu0
  %v2378 = vadd.f32 %v2311, %v2377
  %2379 = vmatmul.f32.gmra.mxu0 %v2342
  %v2380 = vpop.f32.mrf.mxu0
  %v2381 = vadd.f32 %v2311, %v2380
  %2382 = vmatmul.f32.gmra.mxu0 %v2344
  %v2383 = vpop.f32.mrf.mxu0
  %v2384 = vadd.f32 %v2311, %v2383
  %2385 = vmatmul.f32.gmra.mxu0 %v2346
  %v2386 = vpop.f32.mrf.mxu0
  %v2387 = vadd.f32 %v2311, %v2386
  %2388 = vdwg.mxu0
  %2396 = vrot.lane.b32.xlu0 %v2369, 122
  %v2397 = vpop.permute.xlu0 %2396
  %2398 = vrot.lane.b32.xlu0 %v2372, 122
  %v2399 = vpop.permute.xlu0 %2398
  %2400 = vrot.lane.b32.xlu0 %v2375, 122
  %v2401 = vpop.permute.xlu0 %2400
  %2402 = vrot.lane.b32.xlu0 %v2378, 122
  %v2403 = vpop.permute.xlu0 %2402
  %2404 = vrot.lane.b32.xlu0 %v2381, 122
  %v2405 = vpop.permute.xlu0 %2404
  %2406 = vrot.lane.b32.xlu0 %v2384, 122
  %v2407 = vpop.permute.xlu0 %2406
  %2408 = vrot.lane.b32.xlu0 %v2387, 122
  %v2409 = vpop.permute.xlu0 %2408
  %v2410 = vsel %vm233, %v2369, 0
  %v2412 = vsel %vm233, %v2372, 0
  %v2414 = vsel %vm233, %v2375, 0
  %v2416 = vsel %vm233, %v2378, 0
  %v2418 = vsel %vm233, %v2381, 0
  %v2420 = vsel %vm233, %v2384, 0
  %v2422 = vsel %vm233, %v2387, 0
  %v2424 = vsel %vm233, %v2397, 0
  %v2426 = vsel %vm233, %v2399, 0
  %v2428 = vsel %vm233, %v2401, 0
  %v2430 = vsel %vm233, %v2403, 0
  %v2432 = vsel %vm233, %v2405, 0
  %v2434 = vsel %vm233, %v2407, 0
  %v2436 = vsel %vm233, %v2409, 0
  %2438 = vmatpush.xpose.msra.mxu0 0.0
  %2439 = vmatpush.xpose.msra.mxu0 0.0
  %2440 = vmatpush.xpose.msra.mxu0 0.0
  %2441 = vmatpush.xpose.msra.mxu0 0.0
  %2442 = vmatpush.xpose.msra.mxu0 0.0
  %2443 = vmatpush.xpose.msra.mxu0 0.0
  %2444 = vmatpush.xpose.msra.mxu0 0.0
  %2445 = vmatpush.xpose.msra.mxu0 0.0
  %2446 = vmatpush.xpose.msra.mxu0 0.0
  %2447 = vmatpush.xpose.msra.mxu0 %v2436
  %2448 = vmatpush.xpose.msra.mxu0 %v2434
  %2449 = vmatpush.xpose.msra.mxu0 %v2432
  %2450 = vmatpush.xpose.msra.mxu0 %v2430
  %2451 = vmatpush.xpose.msra.mxu0 %v2428
  %2452 = vmatpush.xpose.msra.mxu0 %v2426
  %2453 = vmatpush.xpose.msra.mxu0 %v2424
  %2454 = vmatmul.f32.gmra.mxu0 %v2410
  %v2455 = vpop.f32.mrf.mxu0
  %v2456 = vadd.f32 0.0, %v2455
  %2457 = vmatmul.f32.gmra.mxu0 %v2412
  %v2458 = vpop.f32.mrf.mxu0
  %v2459 = vadd.f32 0.0, %v2458
  %2460 = vmatmul.f32.gmra.mxu0 %v2414
  %v2461 = vpop.f32.mrf.mxu0
  %v2462 = vadd.f32 0.0, %v2461
  %2463 = vmatmul.f32.gmra.mxu0 %v2416
  %v2464 = vpop.f32.mrf.mxu0
  %v2465 = vadd.f32 0.0, %v2464
  %2466 = vmatmul.f32.gmra.mxu0 %v2418
  %v2467 = vpop.f32.mrf.mxu0
  %v2468 = vadd.f32 0.0, %v2467
  %2469 = vmatmul.f32.gmra.mxu0 %v2420
  %v2470 = vpop.f32.mrf.mxu0
  %v2471 = vadd.f32 0.0, %v2470
  %2472 = vmatmul.f32.gmra.mxu0 %v2422
  %v2473 = vpop.f32.mrf.mxu0
  %v2474 = vadd.f32 0.0, %v2473
  %2475 = vdwg.mxu0
  %v2476 = vsel %vm571, %v2456, -inf
  %2477 = vmax.xlane.f32.xlu0 %v2476
  %v2478 = vpop.xlane.xlu0 %2477
  %v2479 = vsel %vm571, %v2459, -inf
  %2480 = vmax.xlane.f32.xlu0 %v2479
  %v2481 = vpop.xlane.xlu0 %2480
  %v2482 = vsel %vm571, %v2462, -inf
  %2483 = vmax.xlane.f32.xlu0 %v2482
  %v2484 = vpop.xlane.xlu0 %2483
  %v2485 = vsel %vm571, %v2465, -inf
  %2486 = vmax.xlane.f32.xlu0 %v2485
  %v2487 = vpop.xlane.xlu0 %2486
  %v2488 = vsel %vm571, %v2468, -inf
  %2489 = vmax.xlane.f32.xlu0 %v2488
  %v2490 = vpop.xlane.xlu0 %2489
  %v2491 = vsel %vm571, %v2471, -inf
  %2492 = vmax.xlane.f32.xlu0 %v2491
  %v2493 = vpop.xlane.xlu0 %2492
  %v2494 = vsel %vm590, %v2474, -inf
  %2495 = vmax.xlane.f32.xlu0 %v2494
  %v2496 = vpop.xlane.xlu0 %2495
  %v2497 = vsub.f32 %v2456, %v2478
  %v2498 = vsub.f32 %v2459, %v2481
  %v2499 = vsub.f32 %v2462, %v2484
  %v2500 = vsub.f32 %v2465, %v2487
  %v2501 = vsub.f32 %v2468, %v2490
  %v2502 = vsub.f32 %v2471, %v2493
  %v2503 = vsub.f32 %v2474, %v2496
  %v2504 = vmul.f32 %v2497, 1.442695
  %v2505 = vpow.pop %v2504
  %v2506 = vmul.f32 %v2498, 1.442695
  %v2507 = vpow.pop %v2506
  %v2508 = vmul.f32 %v2499, 1.442695
  %v2509 = vpow.pop %v2508
  %v2510 = vmul.f32 %v2500, 1.442695
  %v2511 = vpow.pop %v2510
  %v2512 = vmul.f32 %v2501, 1.442695
  %v2513 = vpow.pop %v2512
  %v2514 = vmul.f32 %v2502, 1.442695
  %v2515 = vpow.pop %v2514
  %v2516 = vmul.f32 %v2503, 1.442695
  %v2517 = vpow.pop %v2516
  %v2518 = vsel %vm571, %v2505, 0.0
  %2519 = vadd.xlane.f32.xlu0 %v2518
  %v2520 = vpop.xlane.xlu0 %2519
  %v2521 = vsel %vm571, %v2507, 0.0
  %2522 = vadd.xlane.f32.xlu0 %v2521
  %v2523 = vpop.xlane.xlu0 %2522
  %v2524 = vsel %vm571, %v2509, 0.0
  %2525 = vadd.xlane.f32.xlu0 %v2524
  %v2526 = vpop.xlane.xlu0 %2525
  %v2527 = vsel %vm571, %v2511, 0.0
  %2528 = vadd.xlane.f32.xlu0 %v2527
  %v2529 = vpop.xlane.xlu0 %2528
  %v2530 = vsel %vm571, %v2513, 0.0
  %2531 = vadd.xlane.f32.xlu0 %v2530
  %v2532 = vpop.xlane.xlu0 %2531
  %v2533 = vsel %vm571, %v2515, 0.0
  %2534 = vadd.xlane.f32.xlu0 %v2533
  %v2535 = vpop.xlane.xlu0 %2534
  %v2536 = vsel %vm590, %v2517, 0.0
  %2537 = vadd.xlane.f32.xlu0 %v2536
  %v2538 = vpop.xlane.xlu0 %2537
  %v2539 = vrcp.pop %v2520
  %v2540 = vrcp.pop %v2523
  %v2541 = vrcp.pop %v2526
  %v2542 = vrcp.pop %v2529
  %v2543 = vrcp.pop %v2532
  %v2544 = vrcp.pop %v2535
  %v2545 = vrcp.pop %v2538
  %v2546 = vmul.f32 %v2505, %v2539
  %v2547 = vmul.f32 %v2507, %v2540
  %v2548 = vmul.f32 %v2509, %v2541
  %v2549 = vmul.f32 %v2511, %v2542
  %v2550 = vmul.f32 %v2513, %v2543
  %v2551 = vmul.f32 %v2515, %v2544
  %v2552 = vmul.f32 %v2517, %v2545
  %2553 = vrot.lane.b32.xlu0 %v2369, 116
  %v2554 = vpop.permute.xlu0 %2553
  %2555 = vrot.lane.b32.xlu0 %v2372, 116
  %v2556 = vpop.permute.xlu0 %2555
  %2557 = vrot.lane.b32.xlu0 %v2375, 116
  %v2558 = vpop.permute.xlu0 %2557
  %2559 = vrot.lane.b32.xlu0 %v2378, 116
  %v2560 = vpop.permute.xlu0 %2559
  %2561 = vrot.lane.b32.xlu0 %v2381, 116
  %v2562 = vpop.permute.xlu0 %2561
  %2563 = vrot.lane.b32.xlu0 %v2384, 116
  %v2564 = vpop.permute.xlu0 %2563
  %2565 = vrot.lane.b32.xlu0 %v2387, 116
  %v2566 = vpop.permute.xlu0 %2565
  %v2574 = vsel %vm571, %v2546, 0
  %v2577 = vsel %vm571, %v2547, 0
  %v2580 = vsel %vm571, %v2548, 0
  %v2583 = vsel %vm571, %v2549, 0
  %v2586 = vsel %vm571, %v2550, 0
  %v2589 = vsel %vm571, %v2551, 0
  %v2592 = vsel %vm571, %v2552, 0
  %v2594 = vsel %vm442, %v2566, 0
  %2596 = vmatpush.msra.mxu0 0.0
  %2597 = vmatpush.msra.mxu0 0.0
  %2598 = vmatpush.msra.mxu0 0.0
  %2599 = vmatpush.msra.mxu0 0.0
  %2600 = vmatpush.msra.mxu0 0.0
  %2601 = vmatpush.msra.mxu0 0.0
  %2602 = vmatpush.msra.mxu0 0.0
  %2603 = vmatpush.msra.mxu0 0.0
  %2604 = vmatpush.msra.mxu0 0.0
  %2605 = vmatpush.msra.mxu0 %v2594
  %2606 = vmatpush.msra.mxu0 %v2564
  %2607 = vmatpush.msra.mxu0 %v2562
  %2608 = vmatpush.msra.mxu0 %v2560
  %2609 = vmatpush.msra.mxu0 %v2558
  %2610 = vmatpush.msra.mxu0 %v2556
  %2611 = vmatpush.msra.mxu0 %v2554
  %2612 = vmatmul.f32.gmra.mxu0 %v2574
  %v2613 = vpop.f32.mrf.mxu0
  %v2614 = vadd.f32 0.0, %v2613
  %2615 = vmatmul.f32.gmra.mxu0 %v2577
  %v2616 = vpop.f32.mrf.mxu0
  %v2617 = vadd.f32 0.0, %v2616
  %2618 = vmatmul.f32.gmra.mxu0 %v2580
  %v2619 = vpop.f32.mrf.mxu0
  %v2620 = vadd.f32 0.0, %v2619
  %2621 = vmatmul.f32.gmra.mxu0 %v2583
  %v2622 = vpop.f32.mrf.mxu0
  %v2623 = vadd.f32 0.0, %v2622
  %2624 = vmatmul.f32.gmra.mxu0 %v2586
  %v2625 = vpop.f32.mrf.mxu0
  %v2626 = vadd.f32 0.0, %v2625
  %2627 = vmatmul.f32.gmra.mxu0 %v2589
  %v2628 = vpop.f32.mrf.mxu0
  %v2629 = vadd.f32 0.0, %v2628
  %2630 = vmatmul.f32.gmra.mxu0 %v2592
  %v2631 = vpop.f32.mrf.mxu0
  %v2632 = vadd.f32 0.0, %v2631
  %2633 = vdwg.mxu0
  %2641 = vrot.lane.b32.xlu0 %v2614, 6
  %v2642 = vpop.permute.xlu0 %2641
  %2643 = vrot.lane.b32.xlu0 %v2617, 6
  %v2644 = vpop.permute.xlu0 %2643
  %2645 = vrot.lane.b32.xlu0 %v2620, 6
  %v2646 = vpop.permute.xlu0 %2645
  %2647 = vrot.lane.b32.xlu0 %v2623, 6
  %v2648 = vpop.permute.xlu0 %2647
  %2649 = vrot.lane.b32.xlu0 %v2626, 6
  %v2650 = vpop.permute.xlu0 %2649
  %2651 = vrot.lane.b32.xlu0 %v2629, 6
  %v2652 = vpop.permute.xlu0 %2651
  %2653 = vrot.lane.b32.xlu0 %v2632, 6
  %v2654 = vpop.permute.xlu0 %2653
  %2662 = vst.msk [vmem:[#allocation2] sm:$0xff] %vm1328, %v2642
  %2663 = vst.msk [vmem:[#allocation2 + $0x8] sm:$0xff] %vm1328, %v2644
  %2664 = vst.msk [vmem:[#allocation2 + $0x10] sm:$0xff] %vm1328, %v2646
  %2665 = vst.msk [vmem:[#allocation2 + $0x18] sm:$0xff] %vm1328, %v2648
  %2666 = vst.msk [vmem:[#allocation2 + $0x20] sm:$0xff] %vm1328, %v2650
  %2667 = vst.msk [vmem:[#allocation2 + $0x28] sm:$0xff] %vm1328, %v2652
  %2668 = vst.msk [vmem:[#allocation2 + $0x30] sm:$0x3f] %vm1335, %v2654
  %v2669 = vld [vmem:[#allocation2] sm:$0xff]
  %v2670 = vld [vmem:[#allocation2 + $0x8] sm:$0xff]
  %v2671 = vld [vmem:[#allocation2 + $0x10] sm:$0xff]
  %v2672 = vld [vmem:[#allocation2 + $0x18] sm:$0xff]
  %v2673 = vld [vmem:[#allocation2 + $0x20] sm:$0xff]
  %v2674 = vld [vmem:[#allocation2 + $0x28] sm:$0xff]
  %v2675 = vld [vmem:[#allocation2 + $0x30] sm:$0x3f]
  %s2676 = scalar_lea.vmem %s9, 16
  %v2677 = vld [vmem:[%s2676] sm:$0xff]
  %v2678 = vld [vmem:[%s2676 + $0x8] sm:$0xf]
  %s2679 = scalar_lea.vmem %s10, 1
  %v2680 = vld [vmem:[%s2679] sm:$0x1]
  %v2682 = vperm.slane %v2680, 0
  %v2685 = vsel %vm57, %v2669, 0
  %v2688 = vsel %vm57, %v2670, 0
  %v2691 = vsel %vm57, %v2671, 0
  %v2694 = vsel %vm57, %v2672, 0
  %v2697 = vsel %vm57, %v2673, 0
  %v2700 = vsel %vm57, %v2674, 0
  %v2703 = vsel %vm57, %v2675, 0
  %v2706 = vsel %vm79, %v2678, 0
  %2708 = vmatpush.msra.mxu0 0.0
  %2709 = vmatpush.msra.mxu0 0.0
  %2710 = vmatpush.msra.mxu0 0.0
  %2711 = vmatpush.msra.mxu0 0.0
  %2712 = vmatpush.msra.mxu0 0.0
  %2713 = vmatpush.msra.mxu0 0.0
  %2714 = vmatpush.msra.mxu0 0.0
  %2715 = vmatpush.msra.mxu0 0.0
  %2716 = vmatpush.msra.mxu0 0.0
  %2717 = vmatpush.msra.mxu0 0.0
  %2718 = vmatpush.msra.mxu0 0.0
  %2719 = vmatpush.msra.mxu0 0.0
  %2720 = vmatpush.msra.mxu0 0.0
  %2721 = vmatpush.msra.mxu0 0.0
  %2722 = vmatpush.msra.mxu0 %v2706
  %2723 = vmatpush.msra.mxu0 %v2677
  %2724 = vmatmul.f32.gmra.mxu0 %v2685
  %v2725 = vpop.f32.mrf.mxu0
  %v2726 = vadd.f32 %v2682, %v2725
  %2727 = vmatmul.f32.gmra.mxu0 %v2688
  %v2728 = vpop.f32.mrf.mxu0
  %v2729 = vadd.f32 %v2682, %v2728
  %2730 = vmatmul.f32.gmra.mxu0 %v2691
  %v2731 = vpop.f32.mrf.mxu0
  %v2732 = vadd.f32 %v2682, %v2731
  %2733 = vmatmul.f32.gmra.mxu0 %v2694
  %v2734 = vpop.f32.mrf.mxu0
  %v2735 = vadd.f32 %v2682, %v2734
  %2736 = vmatmul.f32.gmra.mxu0 %v2697
  %v2737 = vpop.f32.mrf.mxu0
  %v2738 = vadd.f32 %v2682, %v2737
  %2739 = vmatmul.f32.gmra.mxu0 %v2700
  %v2740 = vpop.f32.mrf.mxu0
  %v2741 = vadd.f32 %v2682, %v2740
  %2742 = vmatmul.f32.gmra.mxu0 %v2703
  %v2743 = vpop.f32.mrf.mxu0
  %v2744 = vadd.f32 %v2682, %v2743
  %2745 = vdwg.mxu0
  %vm2746 = vcmp.gt.f32.partialorder %v2726, 0.0
  %vm2747 = vcmp.gt.f32.partialorder %v2729, 0.0
  %vm2748 = vcmp.gt.f32.partialorder %v2732, 0.0
  %vm2749 = vcmp.gt.f32.partialorder %v2735, 0.0
  %vm2750 = vcmp.gt.f32.partialorder %v2738, 0.0
  %vm2751 = vcmp.gt.f32.partialorder %v2741, 0.0
  %vm2752 = vcmp.gt.f32.partialorder %v2744, 0.0
  %v2753 = vmin.f32 %v2726, 0.0
  %v2754 = vmin.f32 %v2729, 0.0
  %v2755 = vmin.f32 %v2732, 0.0
  %v2756 = vmin.f32 %v2735, 0.0
  %v2757 = vmin.f32 %v2738, 0.0
  %v2758 = vmin.f32 %v2741, 0.0
  %v2759 = vmin.f32 %v2744, 0.0
  %v2760 = vmul.f32 %v2753, 1.442695
  %v2761 = vpow.pop %v2760
  %v2762 = vmul.f32 %v2754, 1.442695
  %v2763 = vpow.pop %v2762
  %v2764 = vmul.f32 %v2755, 1.442695
  %v2765 = vpow.pop %v2764
  %v2766 = vmul.f32 %v2756, 1.442695
  %v2767 = vpow.pop %v2766
  %v2768 = vmul.f32 %v2757, 1.442695
  %v2769 = vpow.pop %v2768
  %v2770 = vmul.f32 %v2758, 1.442695
  %v2771 = vpow.pop %v2770
  %v2772 = vmul.f32 %v2759, 1.442695
  %v2773 = vpow.pop %v2772
  %v2774 = vsub.f32 %v2761, 1.0
  %v2775 = vsub.f32 %v2763, 1.0
  %v2776 = vsub.f32 %v2765, 1.0
  %v2777 = vsub.f32 %v2767, 1.0
  %v2778 = vsub.f32 %v2769, 1.0
  %v2779 = vsub.f32 %v2771, 1.0
  %v2780 = vsub.f32 %v2773, 1.0
  %v2781 = vsel %vm2746, %v2726, %v2774
  %v2782 = vsel %vm2747, %v2729, %v2775
  %v2783 = vsel %vm2748, %v2732, %v2776
  %v2784 = vsel %vm2749, %v2735, %v2777
  %v2785 = vsel %vm2750, %v2738, %v2778
  %v2786 = vsel %vm2751, %v2741, %v2779
  %v2787 = vsel %vm2752, %v2744, %v2780
  %v2788 = vadd.f32 %v2781, %v1454
  %v2789 = vadd.f32 %v2782, %v1455
  %v2790 = vadd.f32 %v2783, %v1456
  %v2791 = vadd.f32 %v2784, %v1457
  %v2792 = vadd.f32 %v2785, %v1458
  %v2793 = vadd.f32 %v2786, %v1459
  %v2794 = vadd.f32 %v2787, %v1460
  %v2795 = vld [vmem:[%s12] sm:$0xff]
  %v2796 = vld [vmem:[%s12 + $0x8] sm:$0x1f]
  %v2797 = vld [vmem:[%s11] sm:$0xff]
  %v2798 = vld [vmem:[%s11 + $0x8] sm:$0x1f]
  %v2800 = vsel %vm571, %v2797, 0
  %v2803 = vsel %vm571, %v2798, 0
  %v2806 = vsel %vm442, %v2794, 0
  %2808 = vmatpush.msra.mxu0 0.0
  %2809 = vmatpush.msra.mxu0 0.0
  %2810 = vmatpush.msra.mxu0 0.0
  %2811 = vmatpush.msra.mxu0 0.0
  %2812 = vmatpush.msra.mxu0 0.0
  %2813 = vmatpush.msra.mxu0 0.0
  %2814 = vmatpush.msra.mxu0 0.0
  %2815 = vmatpush.msra.mxu0 0.0
  %2816 = vmatpush.msra.mxu0 0.0
  %2817 = vmatpush.msra.mxu0 %v2806
  %2818 = vmatpush.msra.mxu0 %v2793
  %2819 = vmatpush.msra.mxu0 %v2792
  %2820 = vmatpush.msra.mxu0 %v2791
  %2821 = vmatpush.msra.mxu0 %v2790
  %2822 = vmatpush.msra.mxu0 %v2789
  %2823 = vmatpush.msra.mxu0 %v2788
  %2824 = vmatmul.f32.gmra.mxu0 %v2800
  %v2825 = vpop.f32.mrf.mxu0
  %v2826 = vadd.f32 0.0, %v2825
  %2827 = vmatmul.f32.gmra.mxu0 %v2803
  %v2828 = vpop.f32.mrf.mxu0
  %v2829 = vadd.f32 0.0, %v2828
  %2830 = vdwg.mxu0
  %v2831 = vadd.f32 %v2795, %v2826
  %v2832 = vadd.f32 %v2796, %v2829
  %s2833 = scalar_lea.vmem %s11, 16
  %v2834 = vld [vmem:[%s2833] sm:$0xff]
  %v2835 = vld [vmem:[%s2833 + $0x8] sm:$0x1f]
  %2842 = vrot.lane.b32.xlu0 %v2788, 127
  %v2843 = vpop.permute.xlu0 %2842
  %2844 = vrot.lane.b32.xlu0 %v2789, 127
  %v2845 = vpop.permute.xlu0 %2844
  %2846 = vrot.lane.b32.xlu0 %v2790, 127
  %v2847 = vpop.permute.xlu0 %2846
  %2848 = vrot.lane.b32.xlu0 %v2791, 127
  %v2849 = vpop.permute.xlu0 %2848
  %2850 = vrot.lane.b32.xlu0 %v2792, 127
  %v2851 = vpop.permute.xlu0 %2850
  %2852 = vrot.lane.b32.xlu0 %v2793, 127
  %v2853 = vpop.permute.xlu0 %2852
  %2854 = vrot.lane.b32.xlu0 %v2794, 127
  %v2855 = vpop.permute.xlu0 %2854
  %v2863 = vsel %vm571, %v2834, 0
  %v2866 = vsel %vm571, %v2835, 0
  %v2868 = vsel %vm442, %v2855, 0
  %2870 = vmatpush.msra.mxu0 0.0
  %2871 = vmatpush.msra.mxu0 0.0
  %2872 = vmatpush.msra.mxu0 0.0
  %2873 = vmatpush.msra.mxu0 0.0
  %2874 = vmatpush.msra.mxu0 0.0
  %2875 = vmatpush.msra.mxu0 0.0
  %2876 = vmatpush.msra.mxu0 0.0
  %2877 = vmatpush.msra.mxu0 0.0
  %2878 = vmatpush.msra.mxu0 0.0
  %2879 = vmatpush.msra.mxu0 %v2868
  %2880 = vmatpush.msra.mxu0 %v2853
  %2881 = vmatpush.msra.mxu0 %v2851
  %2882 = vmatpush.msra.mxu0 %v2849
  %2883 = vmatpush.msra.mxu0 %v2847
  %2884 = vmatpush.msra.mxu0 %v2845
  %2885 = vmatpush.msra.mxu0 %v2843
  %2886 = vmatmul.f32.gmra.mxu0 %v2863
  %v2887 = vpop.f32.mrf.mxu0
  %v2888 = vadd.f32 0.0, %v2887
  %2889 = vmatmul.f32.gmra.mxu0 %v2866
  %v2890 = vpop.f32.mrf.mxu0
  %v2891 = vadd.f32 0.0, %v2890
  %2892 = vdwg.mxu0
  %v2893 = vadd.f32 %v2831, %v2888
  %v2894 = vadd.f32 %v2832, %v2891
  %s2895 = scalar_lea.vmem %s11, 32
  %v2896 = vld [vmem:[%s2895] sm:$0xff]
  %v2897 = vld [vmem:[%s2895 + $0x8] sm:$0x1f]
  %2898 = vrot.lane.b32.xlu0 %v2788, 126
  %v2899 = vpop.permute.xlu0 %2898
  %2900 = vrot.lane.b32.xlu0 %v2789, 126
  %v2901 = vpop.permute.xlu0 %2900
  %2902 = vrot.lane.b32.xlu0 %v2790, 126
  %v2903 = vpop.permute.xlu0 %2902
  %2904 = vrot.lane.b32.xlu0 %v2791, 126
  %v2905 = vpop.permute.xlu0 %2904
  %2906 = vrot.lane.b32.xlu0 %v2792, 126
  %v2907 = vpop.permute.xlu0 %2906
  %2908 = vrot.lane.b32.xlu0 %v2793, 126
  %v2909 = vpop.permute.xlu0 %2908
  %2910 = vrot.lane.b32.xlu0 %v2794, 126
  %v2911 = vpop.permute.xlu0 %2910
  %v2919 = vsel %vm571, %v2896, 0
  %v2922 = vsel %vm571, %v2897, 0
  %v2924 = vsel %vm442, %v2911, 0
  %2926 = vmatpush.msra.mxu0 0.0
  %2927 = vmatpush.msra.mxu0 0.0
  %2928 = vmatpush.msra.mxu0 0.0
  %2929 = vmatpush.msra.mxu0 0.0
  %2930 = vmatpush.msra.mxu0 0.0
  %2931 = vmatpush.msra.mxu0 0.0
  %2932 = vmatpush.msra.mxu0 0.0
  %2933 = vmatpush.msra.mxu0 0.0
  %2934 = vmatpush.msra.mxu0 0.0
  %2935 = vmatpush.msra.mxu0 %v2924
  %2936 = vmatpush.msra.mxu0 %v2909
  %2937 = vmatpush.msra.mxu0 %v2907
  %2938 = vmatpush.msra.mxu0 %v2905
  %2939 = vmatpush.msra.mxu0 %v2903
  %2940 = vmatpush.msra.mxu0 %v2901
  %2941 = vmatpush.msra.mxu0 %v2899
  %2942 = vmatmul.f32.gmra.mxu0 %v2919
  %v2943 = vpop.f32.mrf.mxu0
  %v2944 = vadd.f32 0.0, %v2943
  %2945 = vmatmul.f32.gmra.mxu0 %v2922
  %v2946 = vpop.f32.mrf.mxu0
  %v2947 = vadd.f32 0.0, %v2946
  %2948 = vdwg.mxu0
  %v2949 = vadd.f32 %v2893, %v2944
  %v2950 = vadd.f32 %v2894, %v2947
  %s2951 = scalar_lea.vmem %s11, 48
  %v2952 = vld [vmem:[%s2951] sm:$0xff]
  %v2953 = vld [vmem:[%s2951 + $0x8] sm:$0x1f]
  %2954 = vrot.lane.b32.xlu0 %v2788, 125
  %v2955 = vpop.permute.xlu0 %2954
  %2956 = vrot.lane.b32.xlu0 %v2789, 125
  %v2957 = vpop.permute.xlu0 %2956
  %2958 = vrot.lane.b32.xlu0 %v2790, 125
  %v2959 = vpop.permute.xlu0 %2958
  %2960 = vrot.lane.b32.xlu0 %v2791, 125
  %v2961 = vpop.permute.xlu0 %2960
  %2962 = vrot.lane.b32.xlu0 %v2792, 125
  %v2963 = vpop.permute.xlu0 %2962
  %2964 = vrot.lane.b32.xlu0 %v2793, 125
  %v2965 = vpop.permute.xlu0 %2964
  %2966 = vrot.lane.b32.xlu0 %v2794, 125
  %v2967 = vpop.permute.xlu0 %2966
  %v2975 = vsel %vm571, %v2952, 0
  %v2978 = vsel %vm571, %v2953, 0
  %v2980 = vsel %vm442, %v2967, 0
  %2982 = vmatpush.msra.mxu0 0.0
  %2983 = vmatpush.msra.mxu0 0.0
  %2984 = vmatpush.msra.mxu0 0.0
  %2985 = vmatpush.msra.mxu0 0.0
  %2986 = vmatpush.msra.mxu0 0.0
  %2987 = vmatpush.msra.mxu0 0.0
  %2988 = vmatpush.msra.mxu0 0.0
  %2989 = vmatpush.msra.mxu0 0.0
  %2990 = vmatpush.msra.mxu0 0.0
  %2991 = vmatpush.msra.mxu0 %v2980
  %2992 = vmatpush.msra.mxu0 %v2965
  %2993 = vmatpush.msra.mxu0 %v2963
  %2994 = vmatpush.msra.mxu0 %v2961
  %2995 = vmatpush.msra.mxu0 %v2959
  %2996 = vmatpush.msra.mxu0 %v2957
  %2997 = vmatpush.msra.mxu0 %v2955
  %2998 = vmatmul.f32.gmra.mxu0 %v2975
  %v2999 = vpop.f32.mrf.mxu0
  %v3000 = vadd.f32 0.0, %v2999
  %3001 = vmatmul.f32.gmra.mxu0 %v2978
  %v3002 = vpop.f32.mrf.mxu0
  %v3003 = vadd.f32 0.0, %v3002
  %3004 = vdwg.mxu0
  %v3005 = vadd.f32 %v2949, %v3000
  %v3006 = vadd.f32 %v2950, %v3003
  %s3007 = scalar_lea.vmem %s11, 64
  %v3008 = vld [vmem:[%s3007] sm:$0xff]
  %v3009 = vld [vmem:[%s3007 + $0x8] sm:$0x1f]
  %3010 = vrot.lane.b32.xlu0 %v2788, 124
  %v3011 = vpop.permute.xlu0 %3010
  %3012 = vrot.lane.b32.xlu0 %v2789, 124
  %v3013 = vpop.permute.xlu0 %3012
  %3014 = vrot.lane.b32.xlu0 %v2790, 124
  %v3015 = vpop.permute.xlu0 %3014
  %3016 = vrot.lane.b32.xlu0 %v2791, 124
  %v3017 = vpop.permute.xlu0 %3016
  %3018 = vrot.lane.b32.xlu0 %v2792, 124
  %v3019 = vpop.permute.xlu0 %3018
  %3020 = vrot.lane.b32.xlu0 %v2793, 124
  %v3021 = vpop.permute.xlu0 %3020
  %3022 = vrot.lane.b32.xlu0 %v2794, 124
  %v3023 = vpop.permute.xlu0 %3022
  %v3031 = vsel %vm571, %v3008, 0
  %v3034 = vsel %vm571, %v3009, 0
  %v3036 = vsel %vm442, %v3023, 0
  %3038 = vmatpush.msra.mxu0 0.0
  %3039 = vmatpush.msra.mxu0 0.0
  %3040 = vmatpush.msra.mxu0 0.0
  %3041 = vmatpush.msra.mxu0 0.0
  %3042 = vmatpush.msra.mxu0 0.0
  %3043 = vmatpush.msra.mxu0 0.0
  %3044 = vmatpush.msra.mxu0 0.0
  %3045 = vmatpush.msra.mxu0 0.0
  %3046 = vmatpush.msra.mxu0 0.0
  %3047 = vmatpush.msra.mxu0 %v3036
  %3048 = vmatpush.msra.mxu0 %v3021
  %3049 = vmatpush.msra.mxu0 %v3019
  %3050 = vmatpush.msra.mxu0 %v3017
  %3051 = vmatpush.msra.mxu0 %v3015
  %3052 = vmatpush.msra.mxu0 %v3013
  %3053 = vmatpush.msra.mxu0 %v3011
  %3054 = vmatmul.f32.gmra.mxu0 %v3031
  %v3055 = vpop.f32.mrf.mxu0
  %v3056 = vadd.f32 0.0, %v3055
  %3057 = vmatmul.f32.gmra.mxu0 %v3034
  %v3058 = vpop.f32.mrf.mxu0
  %v3059 = vadd.f32 0.0, %v3058
  %3060 = vdwg.mxu0
  %v3061 = vadd.f32 %v3005, %v3056
  %v3062 = vadd.f32 %v3006, %v3059
  %s3063 = scalar_lea.vmem %s11, 80
  %v3064 = vld [vmem:[%s3063] sm:$0xff]
  %v3065 = vld [vmem:[%s3063 + $0x8] sm:$0x1f]
  %3066 = vrot.lane.b32.xlu0 %v2788, 123
  %v3067 = vpop.permute.xlu0 %3066
  %3068 = vrot.lane.b32.xlu0 %v2789, 123
  %v3069 = vpop.permute.xlu0 %3068
  %3070 = vrot.lane.b32.xlu0 %v2790, 123
  %v3071 = vpop.permute.xlu0 %3070
  %3072 = vrot.lane.b32.xlu0 %v2791, 123
  %v3073 = vpop.permute.xlu0 %3072
  %3074 = vrot.lane.b32.xlu0 %v2792, 123
  %v3075 = vpop.permute.xlu0 %3074
  %3076 = vrot.lane.b32.xlu0 %v2793, 123
  %v3077 = vpop.permute.xlu0 %3076
  %3078 = vrot.lane.b32.xlu0 %v2794, 123
  %v3079 = vpop.permute.xlu0 %3078
  %v3087 = vsel %vm571, %v3064, 0
  %v3090 = vsel %vm571, %v3065, 0
  %v3092 = vsel %vm442, %v3079, 0
  %3094 = vmatpush.msra.mxu0 0.0
  %3095 = vmatpush.msra.mxu0 0.0
  %3096 = vmatpush.msra.mxu0 0.0
  %3097 = vmatpush.msra.mxu0 0.0
  %3098 = vmatpush.msra.mxu0 0.0
  %3099 = vmatpush.msra.mxu0 0.0
  %3100 = vmatpush.msra.mxu0 0.0
  %3101 = vmatpush.msra.mxu0 0.0
  %3102 = vmatpush.msra.mxu0 0.0
  %3103 = vmatpush.msra.mxu0 %v3092
  %3104 = vmatpush.msra.mxu0 %v3077
  %3105 = vmatpush.msra.mxu0 %v3075
  %3106 = vmatpush.msra.mxu0 %v3073
  %3107 = vmatpush.msra.mxu0 %v3071
  %3108 = vmatpush.msra.mxu0 %v3069
  %3109 = vmatpush.msra.mxu0 %v3067
  %3110 = vmatmul.f32.gmra.mxu0 %v3087
  %v3111 = vpop.f32.mrf.mxu0
  %v3112 = vadd.f32 0.0, %v3111
  %3113 = vmatmul.f32.gmra.mxu0 %v3090
  %v3114 = vpop.f32.mrf.mxu0
  %v3115 = vadd.f32 0.0, %v3114
  %3116 = vdwg.mxu0
  %v3117 = vadd.f32 %v3061, %v3112
  %v3118 = vadd.f32 %v3062, %v3115
  %vm3119 = vcmask 0
  %3120 = vst.msk [vmem:[%s13] sm:$0x1] %vm3119, %v3117
  %vm3121 = vcmask 7169
  %v3122 = vsel %vm3121, %v3117, -inf
  %vm3123 = vcmask 4096
  %v3124 = vsel %vm3123, %v3118, -inf
  %v3125 = vmax.f32 %v3122, %v3124
  %3126 = vmax.xlane.f32.xlu0 %v3125
  %v3127 = vpop.xlane.xlu0 %3126
  %v3128 = vrot.slane %v3127, 4
  %v3129 = vmax.f32 %v3127, %v3128
  %v3130 = vrot.slane %v3129, 2
  %v3131 = vmax.f32 %v3129, %v3130
  %v3132 = vrot.slane %v3131, 1
  %v3133 = vmax.f32 %v3131, %v3132
  %s3134 = vtos %v3133
  %v3135 = vstv %s3134
  %v3136 = vsub.f32 %v3117, %v3135
  %v3137 = vsub.f32 %v3118, %v3135
  %v3138 = vmul.f32 %v3136, 1.442695
  %v3139 = vpow.pop %v3138
  %v3140 = vmul.f32 %v3137, 1.442695
  %v3141 = vpow.pop %v3140
  %vm3144 = vcmask 1046528
  %v3145 = vrot.slane %v3139, 1
  %v3146 = vrot.slane %v3141, 1
  %v3147 = vsel %vm3144, %v3145, %v3146
  %vm3150 = vcmask 7168
  %v3151 = vsel %vm3150, %v3147, 0.0
  %vm3152 = vcmask 3072
  %v3153 = vsel %vm3152, %v3146, 0.0
  %v3154 = vadd.f32 %v3151, %v3153
  %3155 = vadd.xlane.f32.xlu0 %v3154
  %v3156 = vpop.xlane.xlu0 %3155
  %v3157 = vrot.slane %v3156, 4
  %v3158 = vadd.f32 %v3156, %v3157
  %v3159 = vrot.slane %v3158, 2
  %v3160 = vadd.f32 %v3158, %v3159
  %v3161 = vrot.slane %v3160, 1
  %v3162 = vadd.f32 %v3160, %v3161
  %s3163 = vtos %v3162
  %v3164 = vstv %s3163
  %v3165 = vrcp.pop %v3164
  %v3166 = vmul.f32 %v3164, %v3165
  %v3167 = vsub.f32 1.0, %v3166
  %v3168 = vmul.f32 %v3165, %v3167
  %v3169 = vadd.f32 %v3165, %v3168
  %vm3170 = vweird.f32 %v3164
  %vm3171 = vweird.f32 %v3165
  %vm3172 = vmor %vm3170, %vm3171
  %v3173 = vsel %vm3172, %v3165, %v3169
  %v3174 = vand.u32 2147483647, %v3164
  %vm3175 = vcmp.eq.f32.partialorder %v3174, 8.507059e+37
  %v3176 = vand.u32 %v3164, 2147483648
  %v3177 = vor.u32 1.1754944e-38, %v3176
  %v3178 = vsel %vm3175, %v3177, %v3173
  %v3179 = vmul.f32 %v3139, %v3178
  %v3180 = vmul.f32 %v3141, %v3178
  %3181 = vst.msk [vmem:[%s13] sm:$0xfe] %vm3121, %v3179
  %3182 = vst.msk [vmem:[%s13 + $0x8] sm:$0x1f] %vm3123, %v3180
  %v3183 = vld [vmem:[%s11] sm:$0xff]
  %v3184 = vld [vmem:[%s11 + $0x8] sm:$0x1f]
  %3185 = vrot.lane.b32.xlu0 %v2788, 122
  %v3186 = vpop.permute.xlu0 %3185
  %3187 = vrot.lane.b32.xlu0 %v2789, 122
  %v3188 = vpop.permute.xlu0 %3187
  %3189 = vrot.lane.b32.xlu0 %v2790, 122
  %v3190 = vpop.permute.xlu0 %3189
  %3191 = vrot.lane.b32.xlu0 %v2791, 122
  %v3192 = vpop.permute.xlu0 %3191
  %3193 = vrot.lane.b32.xlu0 %v2792, 122
  %v3194 = vpop.permute.xlu0 %3193
  %3195 = vrot.lane.b32.xlu0 %v2793, 122
  %v3196 = vpop.permute.xlu0 %3195
  %3197 = vrot.lane.b32.xlu0 %v2794, 122
  %v3198 = vpop.permute.xlu0 %3197
  %v3206 = vsel %vm571, %v3183, 0
  %v3209 = vsel %vm571, %v3184, 0
  %v3211 = vsel %vm442, %v3198, 0
  %3213 = vmatpush.msra.mxu0 0.0
  %3214 = vmatpush.msra.mxu0 0.0
  %3215 = vmatpush.msra.mxu0 0.0
  %3216 = vmatpush.msra.mxu0 0.0
  %3217 = vmatpush.msra.mxu0 0.0
  %3218 = vmatpush.msra.mxu0 0.0
  %3219 = vmatpush.msra.mxu0 0.0
  %3220 = vmatpush.msra.mxu0 0.0
  %3221 = vmatpush.msra.mxu0 0.0
  %3222 = vmatpush.msra.mxu0 %v3211
  %3223 = vmatpush.msra.mxu0 %v3196
  %3224 = vmatpush.msra.mxu0 %v3194
  %3225 = vmatpush.msra.mxu0 %v3192
  %3226 = vmatpush.msra.mxu0 %v3190
  %3227 = vmatpush.msra.mxu0 %v3188
  %3228 = vmatpush.msra.mxu0 %v3186
  %3229 = vmatmul.f32.gmra.mxu0 %v3206
  %v3230 = vpop.f32.mrf.mxu0
  %v3231 = vadd.f32 0.0, %v3230
  %3232 = vmatmul.f32.gmra.mxu0 %v3209
  %v3233 = vpop.f32.mrf.mxu0
  %v3234 = vadd.f32 0.0, %v3233
  %3235 = vdwg.mxu0
  %v3236 = vadd.f32 %v2795, %v3231
  %v3237 = vadd.f32 %v2796, %v3234
  %v3238 = vld [vmem:[%s2833] sm:$0xff]
  %v3239 = vld [vmem:[%s2833 + $0x8] sm:$0x1f]
  %3240 = vrot.lane.b32.xlu0 %v2788, 121
  %v3241 = vpop.permute.xlu0 %3240
  %3242 = vrot.lane.b32.xlu0 %v2789, 121
  %v3243 = vpop.permute.xlu0 %3242
  %3244 = vrot.lane.b32.xlu0 %v2790, 121
  %v3245 = vpop.permute.xlu0 %3244
  %3246 = vrot.lane.b32.xlu0 %v2791, 121
  %v3247 = vpop.permute.xlu0 %3246
  %3248 = vrot.lane.b32.xlu0 %v2792, 121
  %v3249 = vpop.permute.xlu0 %3248
  %3250 = vrot.lane.b32.xlu0 %v2793, 121
  %v3251 = vpop.permute.xlu0 %3250
  %3252 = vrot.lane.b32.xlu0 %v2794, 121
  %v3253 = vpop.permute.xlu0 %3252
  %v3261 = vsel %vm571, %v3238, 0
  %v3264 = vsel %vm571, %v3239, 0
  %v3266 = vsel %vm442, %v3253, 0
  %3268 = vmatpush.msra.mxu0 0.0
  %3269 = vmatpush.msra.mxu0 0.0
  %3270 = vmatpush.msra.mxu0 0.0
  %3271 = vmatpush.msra.mxu0 0.0
  %3272 = vmatpush.msra.mxu0 0.0
  %3273 = vmatpush.msra.mxu0 0.0
  %3274 = vmatpush.msra.mxu0 0.0
  %3275 = vmatpush.msra.mxu0 0.0
  %3276 = vmatpush.msra.mxu0 0.0
  %3277 = vmatpush.msra.mxu0 %v3266
  %3278 = vmatpush.msra.mxu0 %v3251
  %3279 = vmatpush.msra.mxu0 %v3249
  %3280 = vmatpush.msra.mxu0 %v3247
  %3281 = vmatpush.msra.mxu0 %v3245
  %3282 = vmatpush.msra.mxu0 %v3243
  %3283 = vmatpush.msra.mxu0 %v3241
  %3284 = vmatmul.f32.gmra.mxu0 %v3261
  %v3285 = vpop.f32.mrf.mxu0
  %v3286 = vadd.f32 0.0, %v3285
  %3287 = vmatmul.f32.gmra.mxu0 %v3264
  %v3288 = vpop.f32.mrf.mxu0
  %v3289 = vadd.f32 0.0, %v3288
  %3290 = vdwg.mxu0
  %v3291 = vadd.f32 %v3236, %v3286
  %v3292 = vadd.f32 %v3237, %v3289
  %v3293 = vld [vmem:[%s2895] sm:$0xff]
  %v3294 = vld [vmem:[%s2895 + $0x8] sm:$0x1f]
  %3295 = vrot.lane.b32.xlu0 %v2788, 120
  %v3296 = vpop.permute.xlu0 %3295
  %3297 = vrot.lane.b32.xlu0 %v2789, 120
  %v3298 = vpop.permute.xlu0 %3297
  %3299 = vrot.lane.b32.xlu0 %v2790, 120
  %v3300 = vpop.permute.xlu0 %3299
  %3301 = vrot.lane.b32.xlu0 %v2791, 120
  %v3302 = vpop.permute.xlu0 %3301
  %3303 = vrot.lane.b32.xlu0 %v2792, 120
  %v3304 = vpop.permute.xlu0 %3303
  %3305 = vrot.lane.b32.xlu0 %v2793, 120
  %v3306 = vpop.permute.xlu0 %3305
  %3307 = vrot.lane.b32.xlu0 %v2794, 120
  %v3308 = vpop.permute.xlu0 %3307
  %v3316 = vsel %vm571, %v3293, 0
  %v3319 = vsel %vm571, %v3294, 0
  %v3321 = vsel %vm442, %v3308, 0
  %3323 = vmatpush.msra.mxu0 0.0
  %3324 = vmatpush.msra.mxu0 0.0
  %3325 = vmatpush.msra.mxu0 0.0
  %3326 = vmatpush.msra.mxu0 0.0
  %3327 = vmatpush.msra.mxu0 0.0
  %3328 = vmatpush.msra.mxu0 0.0
  %3329 = vmatpush.msra.mxu0 0.0
  %3330 = vmatpush.msra.mxu0 0.0
  %3331 = vmatpush.msra.mxu0 0.0
  %3332 = vmatpush.msra.mxu0 %v3321
  %3333 = vmatpush.msra.mxu0 %v3306
  %3334 = vmatpush.msra.mxu0 %v3304
  %3335 = vmatpush.msra.mxu0 %v3302
  %3336 = vmatpush.msra.mxu0 %v3300
  %3337 = vmatpush.msra.mxu0 %v3298
  %3338 = vmatpush.msra.mxu0 %v3296
  %3339 = vmatmul.f32.gmra.mxu0 %v3316
  %v3340 = vpop.f32.mrf.mxu0
  %v3341 = vadd.f32 0.0, %v3340
  %3342 = vmatmul.f32.gmra.mxu0 %v3319
  %v3343 = vpop.f32.mrf.mxu0
  %v3344 = vadd.f32 0.0, %v3343
  %3345 = vdwg.mxu0
  %v3346 = vadd.f32 %v3291, %v3341
  %v3347 = vadd.f32 %v3292, %v3344
  %v3348 = vld [vmem:[%s2951] sm:$0xff]
  %v3349 = vld [vmem:[%s2951 + $0x8] sm:$0x1f]
  %3350 = vrot.lane.b32.xlu0 %v2788, 119
  %v3351 = vpop.permute.xlu0 %3350
  %3352 = vrot.lane.b32.xlu0 %v2789, 119
  %v3353 = vpop.permute.xlu0 %3352
  %3354 = vrot.lane.b32.xlu0 %v2790, 119
  %v3355 = vpop.permute.xlu0 %3354
  %3356 = vrot.lane.b32.xlu0 %v2791, 119
  %v3357 = vpop.permute.xlu0 %3356
  %3358 = vrot.lane.b32.xlu0 %v2792, 119
  %v3359 = vpop.permute.xlu0 %3358
  %3360 = vrot.lane.b32.xlu0 %v2793, 119
  %v3361 = vpop.permute.xlu0 %3360
  %3362 = vrot.lane.b32.xlu0 %v2794, 119
  %v3363 = vpop.permute.xlu0 %3362
  %v3371 = vsel %vm571, %v3348, 0
  %v3374 = vsel %vm571, %v3349, 0
  %v3376 = vsel %vm442, %v3363, 0
  %3378 = vmatpush.msra.mxu0 0.0
  %3379 = vmatpush.msra.mxu0 0.0
  %3380 = vmatpush.msra.mxu0 0.0
  %3381 = vmatpush.msra.mxu0 0.0
  %3382 = vmatpush.msra.mxu0 0.0
  %3383 = vmatpush.msra.mxu0 0.0
  %3384 = vmatpush.msra.mxu0 0.0
  %3385 = vmatpush.msra.mxu0 0.0
  %3386 = vmatpush.msra.mxu0 0.0
  %3387 = vmatpush.msra.mxu0 %v3376
  %3388 = vmatpush.msra.mxu0 %v3361
  %3389 = vmatpush.msra.mxu0 %v3359
  %3390 = vmatpush.msra.mxu0 %v3357
  %3391 = vmatpush.msra.mxu0 %v3355
  %3392 = vmatpush.msra.mxu0 %v3353
  %3393 = vmatpush.msra.mxu0 %v3351
  %3394 = vmatmul.f32.gmra.mxu0 %v3371
  %v3395 = vpop.f32.mrf.mxu0
  %v3396 = vadd.f32 0.0, %v3395
  %3397 = vmatmul.f32.gmra.mxu0 %v3374
  %v3398 = vpop.f32.mrf.mxu0
  %v3399 = vadd.f32 0.0, %v3398
  %3400 = vdwg.mxu0
  %v3401 = vadd.f32 %v3346, %v3396
  %v3402 = vadd.f32 %v3347, %v3399
  %v3403 = vld [vmem:[%s3007] sm:$0xff]
  %v3404 = vld [vmem:[%s3007 + $0x8] sm:$0x1f]
  %3405 = vrot.lane.b32.xlu0 %v2788, 118
  %v3406 = vpop.permute.xlu0 %3405
  %3407 = vrot.lane.b32.xlu0 %v2789, 118
  %v3408 = vpop.permute.xlu0 %3407
  %3409 = vrot.lane.b32.xlu0 %v2790, 118
  %v3410 = vpop.permute.xlu0 %3409
  %3411 = vrot.lane.b32.xlu0 %v2791, 118
  %v3412 = vpop.permute.xlu0 %3411
  %3413 = vrot.lane.b32.xlu0 %v2792, 118
  %v3414 = vpop.permute.xlu0 %3413
  %3415 = vrot.lane.b32.xlu0 %v2793, 118
  %v3416 = vpop.permute.xlu0 %3415
  %3417 = vrot.lane.b32.xlu0 %v2794, 118
  %v3418 = vpop.permute.xlu0 %3417
  %v3426 = vsel %vm571, %v3403, 0
  %v3429 = vsel %vm571, %v3404, 0
  %v3431 = vsel %vm442, %v3418, 0
  %3433 = vmatpush.msra.mxu0 0.0
  %3434 = vmatpush.msra.mxu0 0.0
  %3435 = vmatpush.msra.mxu0 0.0
  %3436 = vmatpush.msra.mxu0 0.0
  %3437 = vmatpush.msra.mxu0 0.0
  %3438 = vmatpush.msra.mxu0 0.0
  %3439 = vmatpush.msra.mxu0 0.0
  %3440 = vmatpush.msra.mxu0 0.0
  %3441 = vmatpush.msra.mxu0 0.0
  %3442 = vmatpush.msra.mxu0 %v3431
  %3443 = vmatpush.msra.mxu0 %v3416
  %3444 = vmatpush.msra.mxu0 %v3414
  %3445 = vmatpush.msra.mxu0 %v3412
  %3446 = vmatpush.msra.mxu0 %v3410
  %3447 = vmatpush.msra.mxu0 %v3408
  %3448 = vmatpush.msra.mxu0 %v3406
  %3449 = vmatmul.f32.gmra.mxu0 %v3426
  %v3450 = vpop.f32.mrf.mxu0
  %v3451 = vadd.f32 0.0, %v3450
  %3452 = vmatmul.f32.gmra.mxu0 %v3429
  %v3453 = vpop.f32.mrf.mxu0
  %v3454 = vadd.f32 0.0, %v3453
  %3455 = vdwg.mxu0
  %v3456 = vadd.f32 %v3401, %v3451
  %v3457 = vadd.f32 %v3402, %v3454
  %v3458 = vld [vmem:[%s3063] sm:$0xff]
  %v3459 = vld [vmem:[%s3063 + $0x8] sm:$0x1f]
  %3460 = vrot.lane.b32.xlu0 %v2788, 117
  %v3461 = vpop.permute.xlu0 %3460
  %3462 = vrot.lane.b32.xlu0 %v2789, 117
  %v3463 = vpop.permute.xlu0 %3462
  %3464 = vrot.lane.b32.xlu0 %v2790, 117
  %v3465 = vpop.permute.xlu0 %3464
  %3466 = vrot.lane.b32.xlu0 %v2791, 117
  %v3467 = vpop.permute.xlu0 %3466
  %3468 = vrot.lane.b32.xlu0 %v2792, 117
  %v3469 = vpop.permute.xlu0 %3468
  %3470 = vrot.lane.b32.xlu0 %v2793, 117
  %v3471 = vpop.permute.xlu0 %3470
  %3472 = vrot.lane.b32.xlu0 %v2794, 117
  %v3473 = vpop.permute.xlu0 %3472
  %v3481 = vsel %vm571, %v3458, 0
  %v3484 = vsel %vm571, %v3459, 0
  %v3486 = vsel %vm442, %v3473, 0
  %3488 = vmatpush.msra.mxu0 0.0
  %3489 = vmatpush.msra.mxu0 0.0
  %3490 = vmatpush.msra.mxu0 0.0
  %3491 = vmatpush.msra.mxu0 0.0
  %3492 = vmatpush.msra.mxu0 0.0
  %3493 = vmatpush.msra.mxu0 0.0
  %3494 = vmatpush.msra.mxu0 0.0
  %3495 = vmatpush.msra.mxu0 0.0
  %3496 = vmatpush.msra.mxu0 0.0
  %3497 = vmatpush.msra.mxu0 %v3486
  %3498 = vmatpush.msra.mxu0 %v3471
  %3499 = vmatpush.msra.mxu0 %v3469
  %3500 = vmatpush.msra.mxu0 %v3467
  %3501 = vmatpush.msra.mxu0 %v3465
  %3502 = vmatpush.msra.mxu0 %v3463
  %3503 = vmatpush.msra.mxu0 %v3461
  %3504 = vmatmul.f32.gmra.mxu0 %v3481
  %v3505 = vpop.f32.mrf.mxu0
  %v3506 = vadd.f32 0.0, %v3505
  %3507 = vmatmul.f32.gmra.mxu0 %v3484
  %v3508 = vpop.f32.mrf.mxu0
  %v3509 = vadd.f32 0.0, %v3508
  %3510 = vdwg.mxu0
  %v3511 = vadd.f32 %v3456, %v3506
  %v3512 = vadd.f32 %v3457, %v3509
  %3514 = vrot.lane.b32.xlu0 %v3511, 1
  %v3515 = vpop.permute.xlu0 %3514
  %vm3517 = vcmask 8200
  %3518 = vst.msk [vmem:[%s13] sm:$0x1] %vm3517, %v3515
  %v3519 = vsel %vm3121, %v3511, -inf
  %v3520 = vsel %vm3123, %v3512, -inf
  %v3521 = vmax.f32 %v3519, %v3520
  %3522 = vmax.xlane.f32.xlu0 %v3521
  %v3523 = vpop.xlane.xlu0 %3522
  %v3524 = vrot.slane %v3523, 4
  %v3525 = vmax.f32 %v3523, %v3524
  %v3526 = vrot.slane %v3525, 2
  %v3527 = vmax.f32 %v3525, %v3526
  %v3528 = vrot.slane %v3527, 1
  %v3529 = vmax.f32 %v3527, %v3528
  %s3530 = vtos %v3529
  %v3531 = vstv %s3530
  %v3532 = vsub.f32 %v3511, %v3531
  %v3533 = vsub.f32 %v3512, %v3531
  %v3534 = vmul.f32 %v3532, 1.442695
  %v3535 = vpow.pop %v3534
  %v3536 = vmul.f32 %v3533, 1.442695
  %v3537 = vpow.pop %v3536
  %v3540 = vrot.slane %v3535, 1
  %v3541 = vrot.slane %v3537, 1
  %v3542 = vsel %vm3144, %v3540, %v3541
  %v3545 = vsel %vm3150, %v3542, 0.0
  %v3546 = vsel %vm3152, %v3541, 0.0
  %v3547 = vadd.f32 %v3545, %v3546
  %3548 = vadd.xlane.f32.xlu0 %v3547
  %v3549 = vpop.xlane.xlu0 %3548
  %v3550 = vrot.slane %v3549, 4
  %v3551 = vadd.f32 %v3549, %v3550
  %v3552 = vrot.slane %v3551, 2
  %v3553 = vadd.f32 %v3551, %v3552
  %v3554 = vrot.slane %v3553, 1
  %v3555 = vadd.f32 %v3553, %v3554
  %s3556 = vtos %v3555
  %v3557 = vstv %s3556
  %v3558 = vrcp.pop %v3557
  %v3559 = vmul.f32 %v3557, %v3558
  %v3560 = vsub.f32 1.0, %v3559
  %v3561 = vmul.f32 %v3558, %v3560
  %v3562 = vadd.f32 %v3558, %v3561
  %vm3563 = vweird.f32 %v3557
  %vm3564 = vweird.f32 %v3558
  %vm3565 = vmor %vm3563, %vm3564
  %v3566 = vsel %vm3565, %v3558, %v3562
  %v3567 = vand.u32 2147483647, %v3557
  %vm3568 = vcmp.eq.f32.partialorder %v3567, 8.507059e+37
  %v3569 = vand.u32 %v3557, 2147483648
  %v3570 = vor.u32 1.1754944e-38, %v3569
  %v3571 = vsel %vm3568, %v3570, %v3566
  %v3572 = vmul.f32 %v3535, %v3571
  %v3573 = vmul.f32 %v3537, %v3571
  %3576 = vrot.lane.b32.xlu0 %v3572, 1
  %v3577 = vpop.permute.xlu0 %3576
  %3578 = vrot.lane.b32.xlu0 %v3573, 1
  %v3579 = vpop.permute.xlu0 %3578
  %vm3582 = vcmask 15369
  %3583 = vst.msk [vmem:[%s13] sm:$0xfe] %vm3582, %v3577
  %vm3584 = vcmask 12296
  %3585 = vst.msk [vmem:[%s13 + $0x8] sm:$0x1f] %vm3584, %v3579
  // Predicated region
  $region54: #{_lambda_.1} parent=0 // pred_check
    _
  $region55: #{_lambda_.1} parent=0 // pred_check_branch
    %3587 = sbr.rel (0) target = $region57
  $region56: #{_lambda_.1} parent=0 // pred_region
    _
  $region57: #{_lambda_.1} parent=0 // pred_fallthru
    _
  // Predicated region
  $region58: #{_lambda_.1} parent=0 // pred_check
    _
  $region59: #{_lambda_.1} parent=0 // pred_check_branch
    %3589 = sbr.rel (0) target = $region61
  $region60: #{_lambda_.1} parent=0 // pred_region
    _
  $region61: #{_lambda_.1} parent=0 // pred_fallthru
    _

</llo_original>
